<compile_context>
chip_gen: v7x
topology: tpu7x:2x2x1
jax: 0.10.0
libtpu: 0.0.40
codegen_flags: <defaults>
</compile_context>

<pallas_src>
import functools
import jax
import jax.numpy as jnp
from jax.experimental import pallas as pl
from jax.experimental.pallas import tpu as pltpu


# --------------------------------- kernel -----------------------------------

def _attn_kernel(x_ref, a_ref, bm_ref, cvec_ref, bias_ref, bout_ref, o_ref, *,
                 num_heads):
    # x_ref:    (TB, N, C)   one window index, TB batch elements
    # a_ref:    (H, C, C)    scale * Wq_h @ Wk_h^T
    # bm_ref:   (H, C, C)    Wv_h @ Wproj_h
    # cvec_ref: (H, 1, C)    scale * Wk_h @ bq_h
    # bias_ref: (H, N, N)    rel-pos bias (gated) + additive mask, this window
    # bout_ref: (1, C)       bproj + sum_h bv_h @ Wproj_h
    # o_ref:    (TB, N, C)
    TB, N, C = x_ref.shape

    x3 = x_ref[...]                         # (TB, N, C) f32
    x2 = x3.reshape(TB * N, C)              # collapse leading dims (no relayout)

    acc = None
    for h in range(num_heads):              # static unroll; H is small
        # t_h = x A_h + c_h  -> scores s = t_h @ x^T per window element
        t = jnp.dot(x2, a_ref[h], preferred_element_type=jnp.float32) + cvec_ref[h]
        u = jnp.dot(x2, bm_ref[h], preferred_element_type=jnp.float32)

        s = jnp.einsum('bnc,bmc->bnm', t.reshape(TB, N, C), x3,
                       preferred_element_type=jnp.float32)          # (TB, N, N)
        s = s + bias_ref[h][None]            # broadcast over TB

        # softmax over keys (f32, max-subtracted; reciprocal on the EUP)
        m = jnp.max(s, axis=-1, keepdims=True)
        e = jnp.exp(s - m)
        p = e * pl.reciprocal(jnp.sum(e, axis=-1, keepdims=True), approx=True)

        pv = jnp.einsum('bnm,bmc->bnc', p, u.reshape(TB, N, C),
                        preferred_element_type=jnp.float32)          # (TB, N, C)
        acc = pv if acc is None else acc + pv

    y = acc + bout_ref[...]                  # (1, C) broadcast
    o_ref[...] = y.astype(o_ref.dtype)


# ------------------------------ host wrapper ---------------------------------

def _fold_params(wqkv, bqkv, wproj, bproj, num_heads, scale):
    """Fold scale, per-head Q/K/V slices and the output projection into
    full-C-width per-head matrices (plain JAX, runs once)."""
    C = wproj.shape[0]
    H = num_heads
    hd = C // H

    wq = wqkv[:, 0 * C:1 * C].reshape(C, H, hd)
    wk = wqkv[:, 1 * C:2 * C].reshape(C, H, hd)
    wv = wqkv[:, 2 * C:3 * C].reshape(C, H, hd)
    bq = bqkv[0 * C:1 * C].reshape(H, hd)
    # bk's contribution to the scores is constant along the key axis and is
    # therefore softmax-invariant -> dropped.
    bv = bqkv[2 * C:3 * C].reshape(H, hd)
    wp = wproj.reshape(H, hd, C)

    a = scale * jnp.einsum('chd,ehd->hce', wq, wk)                    # (H, C, C)
    cvec = (scale * jnp.einsum('chd,hd->hc', wk, bq)).reshape(H, 1, C)
    bm = jnp.einsum('chd,hde->hce', wv, wp)                           # (H, C, C)
    bout = (bproj + jnp.einsum('hd,hde->e', bv, wp)).reshape(1, C)
    return a, bm, cvec, bout


def window_attention3d_pallas(x, wqkv, bqkv, wproj, bproj, bias_comb,
                              num_heads, scale, block_b=8):
    """x: (B_, N, C) with B_ = B*nW; bias_comb: (nW, H, N, N). Returns (B_, N, C)."""
    B_, N, C = x.shape
    nW = bias_comb.shape[0]
    H = num_heads
    assert B_ % nW == 0
    B = B_ // nW

    tb = min(block_b, B)
    while B % tb:                       # pick a block that divides B
        tb -= 1

    a, bm, cvec, bout = _fold_params(wqkv, bqkv, wproj, bproj, num_heads, scale)
    x4 = x.reshape(B, nW, N, C)

    kernel = functools.partial(_attn_kernel, num_heads=num_heads)
    out = pl.pallas_call(
        kernel,
        out_shape=jax.ShapeDtypeStruct((B, nW, N, C), x.dtype),
        grid_spec=pltpu.PrefetchScalarGridSpec(
            num_scalar_prefetch=0,
            # window axis outermost -> bias block changes only nW times
            grid=(nW, B // tb),
            in_specs=[
                pl.BlockSpec((tb, None, N, C), lambda w, i: (i, w, 0, 0)),   # x
                pl.BlockSpec((H, C, C), lambda w, i: (0, 0, 0)),             # A   (resident)
                pl.BlockSpec((H, C, C), lambda w, i: (0, 0, 0)),             # Bm  (resident)
                pl.BlockSpec((H, 1, C), lambda w, i: (0, 0, 0)),             # c   (resident)
                pl.BlockSpec((None, H, N, N), lambda w, i: (w, 0, 0, 0)),    # bias
                pl.BlockSpec((1, C), lambda w, i: (0, 0)),                   # bout
            ],
            out_specs=pl.BlockSpec((tb, None, N, C), lambda w, i: (i, w, 0, 0)),
        ),
        compiler_params=pltpu.CompilerParams(
            dimension_semantics=("parallel", "parallel")),
    )(x4, a, bm, cvec, bias_comb, bout)
    return out.reshape(B_, N, C)


# ---------------- plain-JAX glue (rel-pos index, bias gather) ----------------

def get_relative_position_index3d(window_size):
    d, h, w = window_size
    coords = jnp.stack(jnp.meshgrid(jnp.arange(d), jnp.arange(h), jnp.arange(w),
                                    indexing="ij"))                    # (3,d,h,w)
    coords_flat = coords.reshape(3, -1)                                # (3, N)
    rel = coords_flat[:, :, None] - coords_flat[:, None, :]            # (3, N, N)
    rel = jnp.transpose(rel, (1, 2, 0))                                # (N, N, 3)
    rel = rel + jnp.array([d - 1, h - 1, w - 1])
    rel = rel * jnp.array([(2 * h - 1) * (2 * w - 1), (2 * w - 1), 1])
    return jnp.sum(rel, axis=-1).astype(jnp.int32)                     # (N, N)


def build_bias_combined(table, pos_idx, mask):
    """Mirrors the torch module's gather + gating + mask add.

    table:   (table_size, H)
    pos_idx: (nW, N, N) int32
    mask:    (nW, N, N) float32 (0 / -100-style additive mask)
    returns: (nW, H, N, N) = table[pos_idx_masked] * gate + mask
    """
    mask_bool = mask != 0.0
    rel_pos_gate = jnp.where(mask_bool, 0.0, 1.0)                      # (nW, N, N)
    pos_idx_m = jnp.where(mask_bool, 0, pos_idx)                       # (nW, N, N)
    rpb = table[pos_idx_m]                                             # (nW, N, N, H)
    rpb = rpb * rel_pos_gate[..., None]
    rpb = jnp.transpose(rpb, (0, 3, 1, 2))                             # (nW, H, N, N)
    return rpb + mask[:, None, :, :]


def reference_forward(x, wqkv, bqkv, wproj, bproj, table, pos_idx, mask,
                      num_heads, scale):
    """Pure-JAX mirror of the PyTorch forward for validation."""
    B_, N, C = x.shape
    nW = mask.shape[0]
    hd = C // num_heads
    qkv = (x @ wqkv + bqkv).reshape(B_, N, 3, num_heads, hd)
    qkv = jnp.transpose(qkv, (2, 0, 3, 1, 4))                          # (3,B_,H,N,hd)
    q, k, v = qkv[0], qkv[1], qkv[2]
    q = q * scale
    attn = jnp.einsum("bhnd,bhmd->bhnm", q, k)                         # (B_,H,N,N)

    rel_gate = jnp.where(mask != 0.0, 0.0, 1.0)
    pos_idx_m = jnp.where(mask != 0.0, 0, pos_idx).reshape(-1)
    rpb = table[pos_idx_m].reshape(-1, N, N, num_heads)
    rpb = rpb * rel_gate.reshape(-1, N, N, 1)
    rpb = jnp.transpose(rpb, (0, 3, 1, 2))                             # (nW,H,N,N)

    attn = attn.reshape(B_ // nW, nW, num_heads, N, N) + rpb[None]
    attn = attn + mask.reshape(1, nW, 1, N, N)
    attn = attn.reshape(B_, num_heads, N, N)
    attn = jax.nn.softmax(attn, axis=-1)
    out = jnp.einsum("bhnm,bhmd->bhnd", attn, v)
    out = jnp.transpose(out, (0, 2, 1, 3)).reshape(B_, N, C)
    return out @ wproj + bproj


if __name__ == "__main__":
    # Small, module-consistent shapes.
    dim = 32
    num_heads = 4
    window_size = (2, 4, 4)          # N = 32
    N = window_size[0] * window_size[1] * window_size[2]
    head_dim = dim // num_heads
    scale = head_dim ** (-0.5)
    B = 8
    nW = 2
    B_ = B * nW
    table_size = ((2 * window_size[0] - 1) * (2 * window_size[1] - 1)
                  * (2 * window_size[2] - 1))

    key = jax.random.PRNGKey(0)
    k_x, k_t, k_wq, k_bq, k_wp, k_bp = jax.random.split(key, 6)

    x = jax.random.normal(k_x, (B_, N, dim), dtype=jnp.float32)

    # Deterministic synthetic parameters (trunc_normal(std=0.02) ~ normal*0.02).
    table = jax.random.normal(k_t, (table_size, num_heads), jnp.float32) * 0.02
    wqkv = jax.random.normal(k_wq, (dim, 3 * dim), jnp.float32) * 0.05
    bqkv = jax.random.normal(k_bq, (3 * dim,), jnp.float32) * 0.02
    wproj = jax.random.normal(k_wp, (dim, dim), jnp.float32) * 0.05
    bproj = jax.random.normal(k_bp, (dim,), jnp.float32) * 0.02

    # Shifted-window style additive mask per window: 0 where attendable,
    # -100.0 where masked (same (0/-inf) semantics as Swin).
    group_id = (jnp.arange(N) // (N // 4))                             # 4 groups
    same_group = (group_id[:, None] == group_id[None, :]).astype(jnp.float32)
    mask_w1 = (1.0 - same_group) * (-100.0)                            # (N, N)
    mask = jnp.stack([jnp.zeros((N, N), jnp.float32), mask_w1])        # (nW, N, N)

    # pos_idx = relative position index broadcast per window.
    rel_idx = get_relative_position_index3d(window_size)               # (N, N)
    pos_idx = jnp.broadcast_to(rel_idx, (nW, N, N)).astype(jnp.int32)

    # Precompute combined additive bias (gather glue, outside the kernel).
    bias_comb = build_bias_combined(table, pos_idx, mask)              # (nW,H,N,N)

    out = window_attention3d_pallas(x, wqkv, bqkv, wproj, bproj, bias_comb,
                                    num_heads, scale, block_b=4)
    out = jax.block_until_ready(out)

    ref = reference_forward(x, wqkv, bqkv, wproj, bproj, table, pos_idx, mask,
                            num_heads, scale)
    assert out.shape == (B_, N, dim)
    max_err = float(jnp.max(jnp.abs(out - ref)))
    # Tolerance covers the approx-reciprocal softmax and weight pre-folding
    # (pure fp reassociation; the math is identical to the torch forward).
    assert jnp.allclose(out, ref, atol=1e-3, rtol=1e-3), max_err
    print("KERNEL_OK")
</pallas_src>

<mosaic_0001>
module attributes {stable_mosaic.version = 11 : i64} {
  func.func @_attn_kernel(%arg0: i32, %arg1: i32, %arg2: memref<4x1x32x32xf32, #tpu.memory_space<vmem>>, %arg3: memref<4x32x32xf32, #tpu.memory_space<vmem>>, %arg4: memref<4x32x32xf32, #tpu.memory_space<vmem>>, %arg5: memref<4x1x32xf32, #tpu.memory_space<vmem>>, %arg6: memref<1x4x32x32xf32, #tpu.memory_space<vmem>>, %arg7: memref<1x32xf32, #tpu.memory_space<vmem>>, %arg8: memref<4x1x32x32xf32, #tpu.memory_space<vmem>>) attributes {dimension_semantics = [#tpu.dimension_semantics<parallel>, #tpu.dimension_semantics<parallel>], iteration_bounds = array<i64: 2, 2>, scalar_prefetch = 0 : i64, scratch_operands = 0 : i64, tpu.core_type = #tpu.core_type<tc>, window_params = [{transform_indices = @transform_0, window_bounds = array<i64: 4, 1, 32, 32>}, {pipeline_mode = #tpu.pipeline_mode<synchronous>, transform_indices = @transform_1, window_bounds = array<i64: 4, 32, 32>}, {pipeline_mode = #tpu.pipeline_mode<synchronous>, transform_indices = @transform_2, window_bounds = array<i64: 4, 32, 32>}, {pipeline_mode = #tpu.pipeline_mode<synchronous>, transform_indices = @transform_3, window_bounds = array<i64: 4, 1, 32>}, {transform_indices = @transform_4, window_bounds = array<i64: 1, 4, 32, 32>}, {pipeline_mode = #tpu.pipeline_mode<synchronous>, transform_indices = @transform_5, window_bounds = array<i64: 1, 32>}, {transform_indices = @transform_6, window_bounds = array<i64: 4, 1, 32, 32>}]} {
    %c0 = arith.constant 0 : index
    %c0_0 = arith.constant 0 : index
    %c0_1 = arith.constant 0 : index
    %c0_2 = arith.constant 0 : index
    %0 = vector.load %arg2[%c0, %c0_0, %c0_1, %c0_2] : memref<4x1x32x32xf32, #tpu.memory_space<vmem>>, vector<4x1x32x32xf32>
    %1 = vector.shape_cast %0 : vector<4x1x32x32xf32> to vector<4x32x32xf32>
    %2 = vector.shape_cast %1 : vector<4x32x32xf32> to vector<128x32xf32>
    %c0_3 = arith.constant 0 : index
    %c0_4 = arith.constant 0 : index
    %c0_5 = arith.constant 0 : index
    %3 = vector.load %arg3[%c0_3, %c0_4, %c0_5] : memref<4x32x32xf32, #tpu.memory_space<vmem>>, vector<1x32x32xf32>
    %4 = vector.shape_cast %3 : vector<1x32x32xf32> to vector<32x32xf32>
    %cst = arith.constant dense<0.000000e+00> : vector<128x32xf32>
    %5 = tpu.matmul %2, %4, %cst {dimension_numbers = #tpu.dot_dimension_numbers<[1], [0], [0], [1], [0, 0, 1, 1], [], []>} : vector<128x32xf32>, vector<32x32xf32>, vector<128x32xf32> -> vector<128x32xf32>
    %c0_6 = arith.constant 0 : index
    %c0_7 = arith.constant 0 : index
    %c0_8 = arith.constant 0 : index
    %6 = vector.load %arg5[%c0_6, %c0_7, %c0_8] : memref<4x1x32xf32, #tpu.memory_space<vmem>>, vector<1x1x32xf32>
    %7 = vector.shape_cast %6 : vector<1x1x32xf32> to vector<1x32xf32>
    %8 = vector.broadcast %7 : vector<1x32xf32> to vector<128x32xf32>
    %9 = arith.addf %5, %8 : vector<128x32xf32>
    %c0_9 = arith.constant 0 : index
    %c0_10 = arith.constant 0 : index
    %c0_11 = arith.constant 0 : index
    %10 = vector.load %arg4[%c0_9, %c0_10, %c0_11] : memref<4x32x32xf32, #tpu.memory_space<vmem>>, vector<1x32x32xf32>
    %11 = vector.shape_cast %10 : vector<1x32x32xf32> to vector<32x32xf32>
    %cst_12 = arith.constant dense<0.000000e+00> : vector<128x32xf32>
    %12 = tpu.matmul %2, %11, %cst_12 {dimension_numbers = #tpu.dot_dimension_numbers<[1], [0], [0], [1], [0, 0, 1, 1], [], []>} : vector<128x32xf32>, vector<32x32xf32>, vector<128x32xf32> -> vector<128x32xf32>
    %13 = vector.shape_cast %9 : vector<128x32xf32> to vector<4x32x32xf32>
    "tpu.trace_start"() <{level = 10 : i32, message = "bnc,bmc->bnm"}> : () -> ()
    %cst_13 = arith.constant dense<0.000000e+00> : vector<4x32x32xf32>
    %14 = tpu.matmul %13, %1, %cst_13 {dimension_numbers = #tpu.dot_dimension_numbers<[2], [2], [1], [1], [0, 0, 0, 1, 1, 1], [0], [0]>} : vector<4x32x32xf32>, vector<4x32x32xf32>, vector<4x32x32xf32> -> vector<4x32x32xf32>
    "tpu.trace_stop"() : () -> ()
    %c0_14 = arith.constant 0 : index
    %c0_15 = arith.constant 0 : index
    %c0_16 = arith.constant 0 : index
    %c0_17 = arith.constant 0 : index
    %15 = vector.load %arg6[%c0_14, %c0_15, %c0_16, %c0_17] : memref<1x4x32x32xf32, #tpu.memory_space<vmem>>, vector<1x1x32x32xf32>
    %16 = vector.shape_cast %15 : vector<1x1x32x32xf32> to vector<32x32xf32>
    %17 = vector.shape_cast %16 : vector<32x32xf32> to vector<1x32x32xf32>
    %18 = vector.broadcast %17 : vector<1x32x32xf32> to vector<4x32x32xf32>
    %19 = arith.addf %14, %18 : vector<4x32x32xf32>
    %cst_18 = arith.constant dense<0xFF800000> : vector<4x32xf32>
    %20 = vector.multi_reduction <maximumf>, %19, %cst_18 [2] : vector<4x32x32xf32> to vector<4x32xf32>
    %21 = vector.shape_cast %20 : vector<4x32xf32> to vector<4x32x1xf32>
    %22 = vector.broadcast %21 : vector<4x32x1xf32> to vector<4x32x32xf32>
    %23 = arith.subf %19, %22 : vector<4x32x32xf32>
    %24 = math.exp %23 : vector<4x32x32xf32>
    %cst_19 = arith.constant dense<0.000000e+00> : vector<4x32xf32>
    %25 = vector.multi_reduction <add>, %24, %cst_19 [2] : vector<4x32x32xf32> to vector<4x32xf32>
    %26 = vector.shape_cast %25 : vector<4x32xf32> to vector<4x32x1xf32>
    %27 = tpu.reciprocal %26 {approx = true} : vector<4x32x1xf32> -> vector<4x32x1xf32>
    %28 = vector.broadcast %27 : vector<4x32x1xf32> to vector<4x32x32xf32>
    %29 = arith.mulf %24, %28 : vector<4x32x32xf32>
    %30 = vector.shape_cast %12 : vector<128x32xf32> to vector<4x32x32xf32>
    "tpu.trace_start"() <{level = 10 : i32, message = "bnm,bmc->bnc"}> : () -> ()
    %cst_20 = arith.constant dense<0.000000e+00> : vector<4x32x32xf32>
    %31 = tpu.matmul %29, %30, %cst_20 {dimension_numbers = #tpu.dot_dimension_numbers<[2], [1], [1], [2], [0, 0, 0, 1, 1, 2], [0], [0]>} : vector<4x32x32xf32>, vector<4x32x32xf32>, vector<4x32x32xf32> -> vector<4x32x32xf32>
    "tpu.trace_stop"() : () -> ()
    %c1 = arith.constant 1 : index
    %c0_21 = arith.constant 0 : index
    %c0_22 = arith.constant 0 : index
    %32 = vector.load %arg3[%c1, %c0_21, %c0_22] : memref<4x32x32xf32, #tpu.memory_space<vmem>>, vector<1x32x32xf32>
    %33 = vector.shape_cast %32 : vector<1x32x32xf32> to vector<32x32xf32>
    %cst_23 = arith.constant dense<0.000000e+00> : vector<128x32xf32>
    %34 = tpu.matmul %2, %33, %cst_23 {dimension_numbers = #tpu.dot_dimension_numbers<[1], [0], [0], [1], [0, 0, 1, 1], [], []>} : vector<128x32xf32>, vector<32x32xf32>, vector<128x32xf32> -> vector<128x32xf32>
    %c1_24 = arith.constant 1 : index
    %c0_25 = arith.constant 0 : index
    %c0_26 = arith.constant 0 : index
    %35 = vector.load %arg5[%c1_24, %c0_25, %c0_26] : memref<4x1x32xf32, #tpu.memory_space<vmem>>, vector<1x1x32xf32>
    %36 = vector.shape_cast %35 : vector<1x1x32xf32> to vector<1x32xf32>
    %37 = vector.broadcast %36 : vector<1x32xf32> to vector<128x32xf32>
    %38 = arith.addf %34, %37 : vector<128x32xf32>
    %c1_27 = arith.constant 1 : index
    %c0_28 = arith.constant 0 : index
    %c0_29 = arith.constant 0 : index
    %39 = vector.load %arg4[%c1_27, %c0_28, %c0_29] : memref<4x32x32xf32, #tpu.memory_space<vmem>>, vector<1x32x32xf32>
    %40 = vector.shape_cast %39 : vector<1x32x32xf32> to vector<32x32xf32>
    %cst_30 = arith.constant dense<0.000000e+00> : vector<128x32xf32>
    %41 = tpu.matmul %2, %40, %cst_30 {dimension_numbers = #tpu.dot_dimension_numbers<[1], [0], [0], [1], [0, 0, 1, 1], [], []>} : vector<128x32xf32>, vector<32x32xf32>, vector<128x32xf32> -> vector<128x32xf32>
    %42 = vector.shape_cast %38 : vector<128x32xf32> to vector<4x32x32xf32>
    "tpu.trace_start"() <{level = 10 : i32, message = "bnc,bmc->bnm"}> : () -> ()
    %cst_31 = arith.constant dense<0.000000e+00> : vector<4x32x32xf32>
    %43 = tpu.matmul %42, %1, %cst_31 {dimension_numbers = #tpu.dot_dimension_numbers<[2], [2], [1], [1], [0, 0, 0, 1, 1, 1], [0], [0]>} : vector<4x32x32xf32>, vector<4x32x32xf32>, vector<4x32x32xf32> -> vector<4x32x32xf32>
    "tpu.trace_stop"() : () -> ()
    %c0_32 = arith.constant 0 : index
    %c1_33 = arith.constant 1 : index
    %c0_34 = arith.constant 0 : index
    %c0_35 = arith.constant 0 : index
    %44 = vector.load %arg6[%c0_32, %c1_33, %c0_34, %c0_35] : memref<1x4x32x32xf32, #tpu.memory_space<vmem>>, vector<1x1x32x32xf32>
    %45 = vector.shape_cast %44 : vector<1x1x32x32xf32> to vector<32x32xf32>
    %46 = vector.shape_cast %45 : vector<32x32xf32> to vector<1x32x32xf32>
    %47 = vector.broadcast %46 : vector<1x32x32xf32> to vector<4x32x32xf32>
    %48 = arith.addf %43, %47 : vector<4x32x32xf32>
    %cst_36 = arith.constant dense<0xFF800000> : vector<4x32xf32>
    %49 = vector.multi_reduction <maximumf>, %48, %cst_36 [2] : vector<4x32x32xf32> to vector<4x32xf32>
    %50 = vector.shape_cast %49 : vector<4x32xf32> to vector<4x32x1xf32>
    %51 = vector.broadcast %50 : vector<4x32x1xf32> to vector<4x32x32xf32>
    %52 = arith.subf %48, %51 : vector<4x32x32xf32>
    %53 = math.exp %52 : vector<4x32x32xf32>
    %cst_37 = arith.constant dense<0.000000e+00> : vector<4x32xf32>
    %54 = vector.multi_reduction <add>, %53, %cst_37 [2] : vector<4x32x32xf32> to vector<4x32xf32>
    %55 = vector.shape_cast %54 : vector<4x32xf32> to vector<4x32x1xf32>
    %56 = tpu.reciprocal %55 {approx = true} : vector<4x32x1xf32> -> vector<4x32x1xf32>
    %57 = vector.broadcast %56 : vector<4x32x1xf32> to vector<4x32x32xf32>
    %58 = arith.mulf %53, %57 : vector<4x32x32xf32>
    %59 = vector.shape_cast %41 : vector<128x32xf32> to vector<4x32x32xf32>
    "tpu.trace_start"() <{level = 10 : i32, message = "bnm,bmc->bnc"}> : () -> ()
    %cst_38 = arith.constant dense<0.000000e+00> : vector<4x32x32xf32>
    %60 = tpu.matmul %58, %59, %cst_38 {dimension_numbers = #tpu.dot_dimension_numbers<[2], [1], [1], [2], [0, 0, 0, 1, 1, 2], [0], [0]>} : vector<4x32x32xf32>, vector<4x32x32xf32>, vector<4x32x32xf32> -> vector<4x32x32xf32>
    "tpu.trace_stop"() : () -> ()
    %61 = arith.addf %31, %60 : vector<4x32x32xf32>
    %c2 = arith.constant 2 : index
    %c0_39 = arith.constant 0 : index
    %c0_40 = arith.constant 0 : index
    %62 = vector.load %arg3[%c2, %c0_39, %c0_40] : memref<4x32x32xf32, #tpu.memory_space<vmem>>, vector<1x32x32xf32>
    %63 = vector.shape_cast %62 : vector<1x32x32xf32> to vector<32x32xf32>
    %cst_41 = arith.constant dense<0.000000e+00> : vector<128x32xf32>
    %64 = tpu.matmul %2, %63, %cst_41 {dimension_numbers = #tpu.dot_dimension_numbers<[1], [0], [0], [1], [0, 0, 1, 1], [], []>} : vector<128x32xf32>, vector<32x32xf32>, vector<128x32xf32> -> vector<128x32xf32>
    %c2_42 = arith.constant 2 : index
    %c0_43 = arith.constant 0 : index
    %c0_44 = arith.constant 0 : index
    %65 = vector.load %arg5[%c2_42, %c0_43, %c0_44] : memref<4x1x32xf32, #tpu.memory_space<vmem>>, vector<1x1x32xf32>
    %66 = vector.shape_cast %65 : vector<1x1x32xf32> to vector<1x32xf32>
    %67 = vector.broadcast %66 : vector<1x32xf32> to vector<128x32xf32>
    %68 = arith.addf %64, %67 : vector<128x32xf32>
    %c2_45 = arith.constant 2 : index
    %c0_46 = arith.constant 0 : index
    %c0_47 = arith.constant 0 : index
    %69 = vector.load %arg4[%c2_45, %c0_46, %c0_47] : memref<4x32x32xf32, #tpu.memory_space<vmem>>, vector<1x32x32xf32>
    %70 = vector.shape_cast %69 : vector<1x32x32xf32> to vector<32x32xf32>
    %cst_48 = arith.constant dense<0.000000e+00> : vector<128x32xf32>
    %71 = tpu.matmul %2, %70, %cst_48 {dimension_numbers = #tpu.dot_dimension_numbers<[1], [0], [0], [1], [0, 0, 1, 1], [], []>} : vector<128x32xf32>, vector<32x32xf32>, vector<128x32xf32> -> vector<128x32xf32>
    %72 = vector.shape_cast %68 : vector<128x32xf32> to vector<4x32x32xf32>
    "tpu.trace_start"() <{level = 10 : i32, message = "bnc,bmc->bnm"}> : () -> ()
    %cst_49 = arith.constant dense<0.000000e+00> : vector<4x32x32xf32>
    %73 = tpu.matmul %72, %1, %cst_49 {dimension_numbers = #tpu.dot_dimension_numbers<[2], [2], [1], [1], [0, 0, 0, 1, 1, 1], [0], [0]>} : vector<4x32x32xf32>, vector<4x32x32xf32>, vector<4x32x32xf32> -> vector<4x32x32xf32>
    "tpu.trace_stop"() : () -> ()
    %c0_50 = arith.constant 0 : index
    %c2_51 = arith.constant 2 : index
    %c0_52 = arith.constant 0 : index
    %c0_53 = arith.constant 0 : index
    %74 = vector.load %arg6[%c0_50, %c2_51, %c0_52, %c0_53] : memref<1x4x32x32xf32, #tpu.memory_space<vmem>>, vector<1x1x32x32xf32>
    %75 = vector.shape_cast %74 : vector<1x1x32x32xf32> to vector<32x32xf32>
    %76 = vector.shape_cast %75 : vector<32x32xf32> to vector<1x32x32xf32>
    %77 = vector.broadcast %76 : vector<1x32x32xf32> to vector<4x32x32xf32>
    %78 = arith.addf %73, %77 : vector<4x32x32xf32>
    %cst_54 = arith.constant dense<0xFF800000> : vector<4x32xf32>
    %79 = vector.multi_reduction <maximumf>, %78, %cst_54 [2] : vector<4x32x32xf32> to vector<4x32xf32>
    %80 = vector.shape_cast %79 : vector<4x32xf32> to vector<4x32x1xf32>
    %81 = vector.broadcast %80 : vector<4x32x1xf32> to vector<4x32x32xf32>
    %82 = arith.subf %78, %81 : vector<4x32x32xf32>
    %83 = math.exp %82 : vector<4x32x32xf32>
    %cst_55 = arith.constant dense<0.000000e+00> : vector<4x32xf32>
    %84 = vector.multi_reduction <add>, %83, %cst_55 [2] : vector<4x32x32xf32> to vector<4x32xf32>
    %85 = vector.shape_cast %84 : vector<4x32xf32> to vector<4x32x1xf32>
    %86 = tpu.reciprocal %85 {approx = true} : vector<4x32x1xf32> -> vector<4x32x1xf32>
    %87 = vector.broadcast %86 : vector<4x32x1xf32> to vector<4x32x32xf32>
    %88 = arith.mulf %83, %87 : vector<4x32x32xf32>
    %89 = vector.shape_cast %71 : vector<128x32xf32> to vector<4x32x32xf32>
    "tpu.trace_start"() <{level = 10 : i32, message = "bnm,bmc->bnc"}> : () -> ()
    %cst_56 = arith.constant dense<0.000000e+00> : vector<4x32x32xf32>
    %90 = tpu.matmul %88, %89, %cst_56 {dimension_numbers = #tpu.dot_dimension_numbers<[2], [1], [1], [2], [0, 0, 0, 1, 1, 2], [0], [0]>} : vector<4x32x32xf32>, vector<4x32x32xf32>, vector<4x32x32xf32> -> vector<4x32x32xf32>
    "tpu.trace_stop"() : () -> ()
    %91 = arith.addf %61, %90 : vector<4x32x32xf32>
    %c3 = arith.constant 3 : index
    %c0_57 = arith.constant 0 : index
    %c0_58 = arith.constant 0 : index
    %92 = vector.load %arg3[%c3, %c0_57, %c0_58] : memref<4x32x32xf32, #tpu.memory_space<vmem>>, vector<1x32x32xf32>
    %93 = vector.shape_cast %92 : vector<1x32x32xf32> to vector<32x32xf32>
    %cst_59 = arith.constant dense<0.000000e+00> : vector<128x32xf32>
    %94 = tpu.matmul %2, %93, %cst_59 {dimension_numbers = #tpu.dot_dimension_numbers<[1], [0], [0], [1], [0, 0, 1, 1], [], []>} : vector<128x32xf32>, vector<32x32xf32>, vector<128x32xf32> -> vector<128x32xf32>
    %c3_60 = arith.constant 3 : index
    %c0_61 = arith.constant 0 : index
    %c0_62 = arith.constant 0 : index
    %95 = vector.load %arg5[%c3_60, %c0_61, %c0_62] : memref<4x1x32xf32, #tpu.memory_space<vmem>>, vector<1x1x32xf32>
    %96 = vector.shape_cast %95 : vector<1x1x32xf32> to vector<1x32xf32>
    %97 = vector.broadcast %96 : vector<1x32xf32> to vector<128x32xf32>
    %98 = arith.addf %94, %97 : vector<128x32xf32>
    %c3_63 = arith.constant 3 : index
    %c0_64 = arith.constant 0 : index
    %c0_65 = arith.constant 0 : index
    %99 = vector.load %arg4[%c3_63, %c0_64, %c0_65] : memref<4x32x32xf32, #tpu.memory_space<vmem>>, vector<1x32x32xf32>
    %100 = vector.shape_cast %99 : vector<1x32x32xf32> to vector<32x32xf32>
    %cst_66 = arith.constant dense<0.000000e+00> : vector<128x32xf32>
    %101 = tpu.matmul %2, %100, %cst_66 {dimension_numbers = #tpu.dot_dimension_numbers<[1], [0], [0], [1], [0, 0, 1, 1], [], []>} : vector<128x32xf32>, vector<32x32xf32>, vector<128x32xf32> -> vector<128x32xf32>
    %102 = vector.shape_cast %98 : vector<128x32xf32> to vector<4x32x32xf32>
    "tpu.trace_start"() <{level = 10 : i32, message = "bnc,bmc->bnm"}> : () -> ()
    %cst_67 = arith.constant dense<0.000000e+00> : vector<4x32x32xf32>
    %103 = tpu.matmul %102, %1, %cst_67 {dimension_numbers = #tpu.dot_dimension_numbers<[2], [2], [1], [1], [0, 0, 0, 1, 1, 1], [0], [0]>} : vector<4x32x32xf32>, vector<4x32x32xf32>, vector<4x32x32xf32> -> vector<4x32x32xf32>
    "tpu.trace_stop"() : () -> ()
    %c0_68 = arith.constant 0 : index
    %c3_69 = arith.constant 3 : index
    %c0_70 = arith.constant 0 : index
    %c0_71 = arith.constant 0 : index
    %104 = vector.load %arg6[%c0_68, %c3_69, %c0_70, %c0_71] : memref<1x4x32x32xf32, #tpu.memory_space<vmem>>, vector<1x1x32x32xf32>
    %105 = vector.shape_cast %104 : vector<1x1x32x32xf32> to vector<32x32xf32>
    %106 = vector.shape_cast %105 : vector<32x32xf32> to vector<1x32x32xf32>
    %107 = vector.broadcast %106 : vector<1x32x32xf32> to vector<4x32x32xf32>
    %108 = arith.addf %103, %107 : vector<4x32x32xf32>
    %cst_72 = arith.constant dense<0xFF800000> : vector<4x32xf32>
    %109 = vector.multi_reduction <maximumf>, %108, %cst_72 [2] : vector<4x32x32xf32> to vector<4x32xf32>
    %110 = vector.shape_cast %109 : vector<4x32xf32> to vector<4x32x1xf32>
    %111 = vector.broadcast %110 : vector<4x32x1xf32> to vector<4x32x32xf32>
    %112 = arith.subf %108, %111 : vector<4x32x32xf32>
    %113 = math.exp %112 : vector<4x32x32xf32>
    %cst_73 = arith.constant dense<0.000000e+00> : vector<4x32xf32>
    %114 = vector.multi_reduction <add>, %113, %cst_73 [2] : vector<4x32x32xf32> to vector<4x32xf32>
    %115 = vector.shape_cast %114 : vector<4x32xf32> to vector<4x32x1xf32>
    %116 = tpu.reciprocal %115 {approx = true} : vector<4x32x1xf32> -> vector<4x32x1xf32>
    %117 = vector.broadcast %116 : vector<4x32x1xf32> to vector<4x32x32xf32>
    %118 = arith.mulf %113, %117 : vector<4x32x32xf32>
    %119 = vector.shape_cast %101 : vector<128x32xf32> to vector<4x32x32xf32>
    "tpu.trace_start"() <{level = 10 : i32, message = "bnm,bmc->bnc"}> : () -> ()
    %cst_74 = arith.constant dense<0.000000e+00> : vector<4x32x32xf32>
    %120 = tpu.matmul %118, %119, %cst_74 {dimension_numbers = #tpu.dot_dimension_numbers<[2], [1], [1], [2], [0, 0, 0, 1, 1, 2], [0], [0]>} : vector<4x32x32xf32>, vector<4x32x32xf32>, vector<4x32x32xf32> -> vector<4x32x32xf32>
    "tpu.trace_stop"() : () -> ()
    %121 = arith.addf %91, %120 : vector<4x32x32xf32>
    %c0_75 = arith.constant 0 : index
    %c0_76 = arith.constant 0 : index
    %122 = vector.load %arg7[%c0_75, %c0_76] : memref<1x32xf32, #tpu.memory_space<vmem>>, vector<1x32xf32>
    %123 = vector.shape_cast %122 : vector<1x32xf32> to vector<1x1x32xf32>
    %124 = vector.broadcast %123 : vector<1x1x32xf32> to vector<4x32x32xf32>
    %125 = arith.addf %121, %124 : vector<4x32x32xf32>
    %c0_77 = arith.constant 0 : index
    %c0_78 = arith.constant 0 : index
    %c0_79 = arith.constant 0 : index
    %c0_80 = arith.constant 0 : index
    %126 = vector.load %arg8[%c0_77, %c0_78, %c0_79, %c0_80] : memref<4x1x32x32xf32, #tpu.memory_space<vmem>>, vector<4x1x32x32xf32>
    %127 = vector.shape_cast %126 : vector<4x1x32x32xf32> to vector<4x32x32xf32>
    %128 = vector.shape_cast %125 : vector<4x32x32xf32> to vector<4x1x32x32xf32>
    tpu.vector_store %arg8[%c0_77, %c0_78, %c0_79, %c0_80], %128 {strides = array<i32>} : memref<4x1x32x32xf32, #tpu.memory_space<vmem>>, vector<4x1x32x32xf32>,
    return
  }
  func.func @transform_0(%arg0: i32, %arg1: i32) -> (i32, i32, i32, i32) {
    %c0_i32 = arith.constant 0 : i32
    %c0_i32_0 = arith.constant 0 : i32
    %c0_i32_1 = arith.constant 0 : i32
    return %arg1, %arg0, %c0_i32, %c0_i32_0 : i32, i32, i32, i32
  }
  func.func @transform_1(%arg0: i32, %arg1: i32) -> (i32, i32, i32) {
    %c0_i32 = arith.constant 0 : i32
    %c0_i32_0 = arith.constant 0 : i32
    %c0_i32_1 = arith.constant 0 : i32
    %c0_i32_2 = arith.constant 0 : i32
    return %c0_i32, %c0_i32_0, %c0_i32_1 : i32, i32, i32
  }
  func.func @transform_2(%arg0: i32, %arg1: i32) -> (i32, i32, i32) {
    %c0_i32 = arith.constant 0 : i32
    %c0_i32_0 = arith.constant 0 : i32
    %c0_i32_1 = arith.constant 0 : i32
    %c0_i32_2 = arith.constant 0 : i32
    return %c0_i32, %c0_i32_0, %c0_i32_1 : i32, i32, i32
  }
  func.func @transform_3(%arg0: i32, %arg1: i32) -> (i32, i32, i32) {
    %c0_i32 = arith.constant 0 : i32
    %c0_i32_0 = arith.constant 0 : i32
    %c0_i32_1 = arith.constant 0 : i32
    %c0_i32_2 = arith.constant 0 : i32
    return %c0_i32, %c0_i32_0, %c0_i32_1 : i32, i32, i32
  }
  func.func @transform_4(%arg0: i32, %arg1: i32) -> (i32, i32, i32, i32) {
    %c0_i32 = arith.constant 0 : i32
    %c0_i32_0 = arith.constant 0 : i32
    %c0_i32_1 = arith.constant 0 : i32
    %c0_i32_2 = arith.constant 0 : i32
    return %arg0, %c0_i32, %c0_i32_0, %c0_i32_1 : i32, i32, i32, i32
  }
  func.func @transform_5(%arg0: i32, %arg1: i32) -> (i32, i32) {
    %c0_i32 = arith.constant 0 : i32
    %c0_i32_0 = arith.constant 0 : i32
    %c0_i32_1 = arith.constant 0 : i32
    return %c0_i32, %c0_i32_0 : i32, i32
  }
  func.func @transform_6(%arg0: i32, %arg1: i32) -> (i32, i32, i32, i32) {
    %c0_i32 = arith.constant 0 : i32
    %c0_i32_0 = arith.constant 0 : i32
    %c0_i32_1 = arith.constant 0 : i32
    return %arg1, %arg0, %c0_i32, %c0_i32_0 : i32, i32, i32, i32
  }
}

</mosaic_0001>

<llo_original>
// kernel: tpu_custom_call.1
$region0: #{tpu_custom_call.1}
  #allocation0 [shape = 'u32[]', space=smem, size = 0x4, offset = 0x4, fixed_abs, tag = 'smem constant byte address 0x4 - core index']
  #allocation1 [shape = 'u32[144,128]{1,0:T(1,128)}', space=vmem, size = 0x12000, scoped, tag = 'internal scratch']
  #allocation11 [shape = 's32[]', space=sflag, size = 0x4, offset = 0, fixed_abs, tag = 'sflag constant byte address 0x0 - dummy sync flag']
  #allocation13 [shape = 's32[]', space=sflag, size = 0x4, offset = 0, fixed_abs, tag = 'sflag constant byte address 0x0 - dummy sync flag']
  %s0 = inlined_call_operand.hbm [shape: f32[8,2,32,32], index: 0, kind: input, shape index: {}]
  %s1 = inlined_call_operand.hbm [shape: f32[4,32,32], index: 1, kind: input, shape index: {}]
  %s2 = inlined_call_operand.hbm [shape: f32[4,32,32], index: 2, kind: input, shape index: {}]
  %s3 = inlined_call_operand.vmem [shape: f32[4,1,32], index: 3, kind: input, shape index: {}]
  %s4 = inlined_call_operand.hbm [shape: f32[2,4,32,32], index: 4, kind: input, shape index: {}]
  %s5 = inlined_call_operand.vmem [shape: f32[1,32], index: 5, kind: input, shape index: {}]
  %s6 = inlined_call_operand.hbm [shape: f32[8,2,32,32], index: 6, kind: output, shape index: {}]
  %s7 = sld [smem:[#allocation0]]
  $region73: #{tpu_custom_call.1} parent=0
    _
  %s9 = ssub.s32 1, %s7
  %s10 = scalar_select 0, %s9, %s7
  $region1: #{tpu_custom_call.1} parent=0
    #allocation2 [shape = 'u8[131072]{0}', space=vmem, size = 0x20000, scoped, tag = 'input window, operand 0']
    #allocation3 [shape = 's32[2]{0}', space=sflag, size = 0x8, scoped, tag = 'scoped memory for tpu_custom_call.1']
    #allocation4 [shape = 's32[2]{0}', space=sflag, size = 0x8, scoped, tag = 'scoped memory for tpu_custom_call.1']
    #allocation5 [shape = 'u8[65536]{0}', space=vmem, size = 0x10000, scoped, tag = 'input window, operand 1, single buffered']
    #allocation6 [shape = 's32[1]{0}', space=sflag, size = 0x4, scoped, tag = 'scoped memory for tpu_custom_call.1']
    #allocation7 [shape = 'u8[65536]{0}', space=vmem, size = 0x10000, scoped, tag = 'input window, operand 2, single buffered']
    #allocation8 [shape = 'u8[131072]{0}', space=vmem, size = 0x20000, scoped, tag = 'input window, operand 4']
    #allocation9 [shape = 's32[2]{0}', space=sflag, size = 0x8, scoped, tag = 'scoped memory for tpu_custom_call.1']
    #allocation10 [shape = 'u8[131072]{0}', space=vmem, size = 0x20000, scoped, tag = 'output window, operand 0']
    %11 = vsyncpa [#allocation3], 0
    %s12 = scalar_lea.sflag [#allocation3], 1
    %13 = vsyncpa %s12, 0
    %14 = vsyncpa [#allocation6], 0
    %15 = vsyncpa [#allocation9], 0
    %s16 = scalar_lea.sflag [#allocation9], 1
    %17 = vsyncpa %s16, 0
    %18 = vsyncpa [#allocation4], 0
    %s19 = scalar_lea.sflag [#allocation4], 1
    %20 = vsyncpa %s19, 0
    loop: start=0, step=1, limit=6
    $region2: #{tpu_custom_call.1} parent=1 // loop_pre_header
      _
    $region3: #{tpu_custom_call.1} parent=1 // loop_header
      %s22 = sphi 0, %s26
      %p23 = scmp.ge.s32.totalorder %s22, 6
      %s29 = sphi 0, %s41
      %s30 = sphi 0, %s37
      %s31 = sphi 0, %s29
      %s32 = sphi 0, %s30
      %s33 = sphi 0, %s31
      %s34 = sphi 0, %s32
      %s46 = sphi 0, %s48
      %s49 = sphi 0, %s46
      %s50 = sphi 0, %s49
      %s66 = sphi 0, %s50
      %s70 = sphi 0, %s70
      %s72 = sphi 0, %s70
      %s73 = sphi 0, %s72
      %s87 = sphi 0, %s73
      %s91 = sphi 0, %s91
      %s93 = sphi 0, %s91
      %s94 = sphi 0, %s93
      %s108 = sphi 0, %s94
      %s112 = sphi 0, %s112
      %s114 = sphi 0, %s112
      %s115 = sphi 0, %s114
      %s129 = sphi 0, %s115
      %s135 = sphi 0, %s137
      %s138 = sphi 0, %s135
      %s139 = sphi 0, %s138
      %s155 = sphi 0, %s139
      %s159 = sphi 0, %s159
      %s161 = sphi 0, %s159
      %s162 = sphi 0, %s161
      %s176 = sphi 0, %s162
      %s184 = sphi 0, %s186
      %s187 = sphi 0, %s184
      %s188 = sphi 0, %s187
      %s204 = sphi 0, %s188
    $region4: #{tpu_custom_call.1} parent=1 // loop_header_branch
      %25 = sbr.rel (%p23) target = $region8
    $region5: #{tpu_custom_call.1} parent=1 // loop_body
      %s27 = ssub.s32 %s22, 1
      %s28 = ssub.s32 %s22, 2
      %s35 = sadd.s32 1, %s30
      %p36 = scmp.ge.s32.totalorder %s35, 2
      %s37 = scalar_select %p36, 0, %s35
      %s38 = sadd.s32 1, %s29
      %s39 = scalar_select %p36, %s38, %s29
      %p40 = scmp.ge.s32.totalorder %s39, 2
      %s41 = scalar_select %p40, 0, %s39
      %s42 = ssub.s32 %s30, %s37
      %s43 = ssub.s32 %s29, %s41
      %s44 = sor.u32 %s42, %s43
      %p45 = scmp.eq.s32.totalorder %s44, 0
      %s47 = sadd.s32 %s46, 1
      %s48 = scalar_select %p45, %s46, %s47
      %p51 = pneg %p45
      %p52 = scmp.eq.s32.totalorder %s22, 3
      %p53 = por %p51, %p52
      %p54 = scmp.ne.s32.totalorder %s46, %s49
      %p55 = scmp.eq.s32.totalorder %s22, 0
      %p56 = por %p54, %p55
      %p57 = scmp.ne.s32.totalorder %s46, %s49
      %p58 = scmp.eq.s32.totalorder %s27, 3
      %p59 = por %p57, %p58
      %p60 = scmp.ne.s32.totalorder %s49, %s50
      %p61 = scmp.eq.s32.totalorder %s27, 0
      %p62 = por %p60, %p61
      %p63 = scmp.ne.s32.totalorder %s49, %s50
      %p64 = scmp.eq.s32.totalorder %s28, 3
      %p65 = por %p63, %p64
      %p67 = scmp.ne.s32.totalorder %s50, %s66
      %p68 = scmp.eq.s32.totalorder %s28, 0
      %p69 = por %p67, %p68
      %s71 = sadd.s32 %s70, 1
      %p74 = scmp.eq.s32.totalorder %s22, 3
      %p75 = scmp.ne.s32.totalorder %s70, %s72
      %p76 = scmp.eq.s32.totalorder %s22, 0
      %p77 = por %p75, %p76
      %p78 = scmp.ne.s32.totalorder %s70, %s72
      %p79 = scmp.eq.s32.totalorder %s27, 3
      %p80 = por %p78, %p79
      %p81 = scmp.ne.s32.totalorder %s72, %s73
      %p82 = scmp.eq.s32.totalorder %s27, 0
      %p83 = por %p81, %p82
      %p84 = scmp.ne.s32.totalorder %s72, %s73
      %p85 = scmp.eq.s32.totalorder %s28, 3
      %p86 = por %p84, %p85
      %p88 = scmp.ne.s32.totalorder %s73, %s87
      %p89 = scmp.eq.s32.totalorder %s28, 0
      %p90 = por %p88, %p89
      %s92 = sadd.s32 %s91, 1
      %p95 = scmp.eq.s32.totalorder %s22, 3
      %p96 = scmp.ne.s32.totalorder %s91, %s93
      %p97 = scmp.eq.s32.totalorder %s22, 0
      %p98 = por %p96, %p97
      %p99 = scmp.ne.s32.totalorder %s91, %s93
      %p100 = scmp.eq.s32.totalorder %s27, 3
      %p101 = por %p99, %p100
      %p102 = scmp.ne.s32.totalorder %s93, %s94
      %p103 = scmp.eq.s32.totalorder %s27, 0
      %p104 = por %p102, %p103
      %p105 = scmp.ne.s32.totalorder %s93, %s94
      %p106 = scmp.eq.s32.totalorder %s28, 3
      %p107 = por %p105, %p106
      %p109 = scmp.ne.s32.totalorder %s94, %s108
      %p110 = scmp.eq.s32.totalorder %s28, 0
      %p111 = por %p109, %p110
      %s113 = sadd.s32 %s112, 1
      %p116 = scmp.eq.s32.totalorder %s22, 3
      %p117 = scmp.ne.s32.totalorder %s112, %s114
      %p118 = scmp.eq.s32.totalorder %s22, 0
      %p119 = por %p117, %p118
      %p120 = scmp.ne.s32.totalorder %s112, %s114
      %p121 = scmp.eq.s32.totalorder %s27, 3
      %p122 = por %p120, %p121
      %p123 = scmp.ne.s32.totalorder %s114, %s115
      %p124 = scmp.eq.s32.totalorder %s27, 0
      %p125 = por %p123, %p124
      %p126 = scmp.ne.s32.totalorder %s114, %s115
      %p127 = scmp.eq.s32.totalorder %s28, 3
      %p128 = por %p126, %p127
      %p130 = scmp.ne.s32.totalorder %s115, %s129
      %p131 = scmp.eq.s32.totalorder %s28, 0
      %p132 = por %p130, %p131
      %s133 = ssub.s32 %s29, %s41
      %p134 = scmp.eq.s32.totalorder %s133, 0
      %s136 = sadd.s32 %s135, 1
      %s137 = scalar_select %p134, %s135, %s136
      %p140 = pneg %p134
      %p141 = scmp.eq.s32.totalorder %s22, 3
      %p142 = por %p140, %p141
      %p143 = scmp.ne.s32.totalorder %s135, %s138
      %p144 = scmp.eq.s32.totalorder %s22, 0
      %p145 = por %p143, %p144
      %p146 = scmp.ne.s32.totalorder %s135, %s138
      %p147 = scmp.eq.s32.totalorder %s27, 3
      %p148 = por %p146, %p147
      %p149 = scmp.ne.s32.totalorder %s138, %s139
      %p150 = scmp.eq.s32.totalorder %s27, 0
      %p151 = por %p149, %p150
      %p152 = scmp.ne.s32.totalorder %s138, %s139
      %p153 = scmp.eq.s32.totalorder %s28, 3
      %p154 = por %p152, %p153
      %p156 = scmp.ne.s32.totalorder %s139, %s155
      %p157 = scmp.eq.s32.totalorder %s28, 0
      %p158 = por %p156, %p157
      %s160 = sadd.s32 %s159, 1
      %p163 = scmp.eq.s32.totalorder %s22, 3
      %p164 = scmp.ne.s32.totalorder %s159, %s161
      %p165 = scmp.eq.s32.totalorder %s22, 0
      %p166 = por %p164, %p165
      %p167 = scmp.ne.s32.totalorder %s159, %s161
      %p168 = scmp.eq.s32.totalorder %s27, 3
      %p169 = por %p167, %p168
      %p170 = scmp.ne.s32.totalorder %s161, %s162
      %p171 = scmp.eq.s32.totalorder %s27, 0
      %p172 = por %p170, %p171
      %p173 = scmp.ne.s32.totalorder %s161, %s162
      %p174 = scmp.eq.s32.totalorder %s28, 3
      %p175 = por %p173, %p174
      %p177 = scmp.ne.s32.totalorder %s162, %s176
      %p178 = scmp.eq.s32.totalorder %s28, 0
      %p179 = por %p177, %p178
      %s180 = ssub.s32 %s30, %s37
      %s181 = ssub.s32 %s29, %s41
      %s182 = sor.u32 %s180, %s181
      %p183 = scmp.eq.s32.totalorder %s182, 0
      %s185 = sadd.s32 %s184, 1
      %s186 = scalar_select %p183, %s184, %s185
      %p189 = pneg %p183
      %p190 = scmp.eq.s32.totalorder %s22, 3
      %p191 = por %p189, %p190
      %p192 = scmp.ne.s32.totalorder %s184, %s187
      %p193 = scmp.eq.s32.totalorder %s22, 0
      %p194 = por %p192, %p193
      %p195 = scmp.ne.s32.totalorder %s184, %s187
      %p196 = scmp.eq.s32.totalorder %s27, 3
      %p197 = por %p195, %p196
      %p198 = scmp.ne.s32.totalorder %s187, %s188
      %p199 = scmp.eq.s32.totalorder %s27, 0
      %p200 = por %p198, %p199
      %p201 = scmp.ne.s32.totalorder %s187, %s188
      %p202 = scmp.eq.s32.totalorder %s28, 3
      %p203 = por %p201, %p202
      %p205 = scmp.ne.s32.totalorder %s188, %s204
      %p206 = scmp.eq.s32.totalorder %s28, 0
      %p207 = por %p205, %p206
      %p208 = scmp.le.s32.totalorder 1, %s22
      %p209 = scmp.lt.s32.totalorder %s22, 5
      %p210 = pnand %p208, %p209
      %p211 = pneg %p210
      // Predicated region
      $region9: #{tpu_custom_call.1} parent=5 // pred_check
        _
      $region10: #{tpu_custom_call.1} parent=5 // pred_check_branch
        %213 = sbr.rel (%p210) target = $region12
      $region11: #{tpu_custom_call.1} parent=5 // pred_region
        %s214 = ssub.s32 %s22, 1
        // Predicated region
        $region13: #{tpu_custom_call.1} parent=11 // pred_check
          %p215 = pneg %p83
        $region14: #{tpu_custom_call.1} parent=11 // pred_check_branch
          %217 = sbr.rel (%p215) target = $region16
        $region15: #{tpu_custom_call.1} parent=11 // pred_region
          %s219 = ssub.s32 2048, 2048
          %220 = vsyncadd [#allocation6], %s219
          %s221 = sshll.u32 [#allocation5], 4
          %s222 = int_to_ptr.vmem [resolvable:$true] %s221
          %227 = dma.hbm_to_vmem [thread:$0]  %s1, 2048, %s222, [#allocation6], 128, 128, 8
        $region16: #{tpu_custom_call.1} parent=11 // pred_fallthru
          _
        // Predicated region
        $region17: #{tpu_custom_call.1} parent=11 // pred_check
          %p228 = pneg %p104
        $region18: #{tpu_custom_call.1} parent=11 // pred_check_branch
          %230 = sbr.rel (%p228) target = $region20
        $region19: #{tpu_custom_call.1} parent=11 // pred_region
          %s232 = ssub.s32 2048, 2048
          %233 = vsyncadd [#allocation6], %s232
          %s234 = sshll.u32 [#allocation7], 4
          %s235 = int_to_ptr.vmem [resolvable:$true] %s234
          %240 = dma.hbm_to_vmem [thread:$0]  %s2, 2048, %s235, [#allocation6], 128, 128, 8
        $region20: #{tpu_custom_call.1} parent=11 // pred_fallthru
          _
        // Predicated region
        $region21: #{tpu_custom_call.1} parent=11 // pred_check
          %p241 = pneg %p125
        $region22: #{tpu_custom_call.1} parent=11 // pred_check_branch
          %243 = sbr.rel (%p241) target = $region24
        $region23: #{tpu_custom_call.1} parent=11 // pred_region
          _
        $region24: #{tpu_custom_call.1} parent=11 // pred_fallthru
          _
        // Predicated region
        $region25: #{tpu_custom_call.1} parent=11 // pred_check
          %p244 = pneg %p172
        $region26: #{tpu_custom_call.1} parent=11 // pred_check_branch
          %246 = sbr.rel (%p244) target = $region28
        $region27: #{tpu_custom_call.1} parent=11 // pred_region
          _
        $region28: #{tpu_custom_call.1} parent=11 // pred_fallthru
          _
      $region12: #{tpu_custom_call.1} parent=5 // pred_fallthru
        _
      %p247 = scmp.lt.s32.totalorder %s22, 4
      // Predicated region
      $region29: #{tpu_custom_call.1} parent=5 // pred_check
        %p248 = pneg %p247
      $region30: #{tpu_custom_call.1} parent=5 // pred_check_branch
        %250 = sbr.rel (%p248) target = $region32
      $region31: #{tpu_custom_call.1} parent=5 // pred_region
        // Predicated region
        $region33: #{tpu_custom_call.1} parent=31 // pred_check
          %p251 = pneg %p56
        $region34: #{tpu_custom_call.1} parent=31 // pred_check_branch
          %253 = sbr.rel (%p251) target = $region36
        $region35: #{tpu_custom_call.1} parent=31 // pred_region
          #allocation12 [shape = 'u32[6]{0}', space=smem, size = 0x18, scoped, tag = 'DMA stride descriptor']
          %s254 = sand.u32 %s46, 1
          %s255 = scalar_lea.sflag [#allocation3], %s254
          %s256 = sand.u32 %s46, 1
          %s257 = smul.addr %s256, 128
          %s258 = scalar_lea.vmem [#allocation2], %s257
          %s259 = smul.u32 4, %s30
          %s261 = ssub.s32 2048, 2048
          %262 = vsyncadd %s255, %s261
          %s263 = smul.addr %s29, 4
          %s264 = smul.addr %s259, 8
          %s265 = sadd.s32 %s263, %s264
          %s266 = smul.addr %s265, 128
          %s267 = scalar_lea.hbm %s0, %s266
          %s269 = sshll.u32 1, 14
          %s270 = sxor.u32 4294967295, %s269
          %s272 = sld [smem:[#allocation0]]
          %s273 = sadd.s32 2, %s272
          %s275 = sshll.u32 7, 26
          %s276 = sxor.u32 4294967295, %s275
          %s277 = sand.u32 0, %s276
          %s278 = sshll.u32 %s273, 26
          %s279 = sor.u32 %s277, %s278
          %s280 = sshll.u32 %s258, 4
          %s281 = int_to_ptr.vmem [resolvable:$true] %s280
          %287 = sst [smem:[#allocation12]] 1024
          %s288 = scalar_lea.smem [#allocation12], 1
          %289 = sst [smem:[%s288]] 512
          %s290 = scalar_lea.smem [#allocation12], 2
          %291 = sst [smem:[%s290]] 4
          %s292 = scalar_lea.smem [#allocation12], 3
          %293 = sst [smem:[%s292]] 128
          %s294 = scalar_lea.smem [#allocation12], 4
          %295 = sst [smem:[%s294]] 128
          %s296 = scalar_lea.smem [#allocation12], 5
          %297 = sst [smem:[%s296]] 8
          %299 = dma.general %s267, 2048, %s281, %s255, [#allocation11], [#allocation12], %s279, 0
        $region36: #{tpu_custom_call.1} parent=31 // pred_fallthru
          _
        // Predicated region
        $region37: #{tpu_custom_call.1} parent=31 // pred_check
          %p300 = pneg %p145
        $region38: #{tpu_custom_call.1} parent=31 // pred_check_branch
          %302 = sbr.rel (%p300) target = $region40
        $region39: #{tpu_custom_call.1} parent=31 // pred_region
          %s303 = sand.u32 %s135, 1
          %s304 = scalar_lea.sflag [#allocation9], %s303
          %s305 = sand.u32 %s135, 1
          %s306 = smul.addr %s305, 128
          %s307 = scalar_lea.vmem [#allocation8], %s306
          %s309 = ssub.s32 2048, 2048
          %310 = vsyncadd %s304, %s309
          %s311 = smul.addr %s29, 16
          %s312 = smul.addr %s311, 128
          %s313 = scalar_lea.hbm %s4, %s312
          %s314 = sshll.u32 %s307, 4
          %s315 = int_to_ptr.vmem [resolvable:$true] %s314
          %320 = dma.hbm_to_vmem [thread:$0]  %s313, 2048, %s315, %s304, 128, 128, 8
        $region40: #{tpu_custom_call.1} parent=31 // pred_fallthru
          _
      $region32: #{tpu_custom_call.1} parent=5 // pred_fallthru
        _
      %p321 = scmp.le.s32.totalorder 1, %s22
      %p322 = scmp.lt.s32.totalorder %s22, 5
      %p323 = pnand %p321, %p322
      %p324 = pneg %p323
      // Predicated region
      $region41: #{tpu_custom_call.1} parent=5 // pred_check
        _
      $region42: #{tpu_custom_call.1} parent=5 // pred_check_branch
        %326 = sbr.rel (%p323) target = $region44
      $region43: #{tpu_custom_call.1} parent=5 // pred_region
        %s327 = ssub.s32 %s22, 1
        %s328 = sand.u32 %s49, 1
        %s329 = scalar_lea.sflag [#allocation3], %s328
        %s330 = sand.u32 %s49, 1
        %s331 = smul.addr %s330, 128
        %s332 = scalar_lea.vmem [#allocation2], %s331
        // Predicated region
        $region45: #{tpu_custom_call.1} parent=43 // pred_check
          %p333 = pneg %p62
        $region46: #{tpu_custom_call.1} parent=43 // pred_check_branch
          %335 = sbr.rel (%p333) target = $region48
        $region47: #{tpu_custom_call.1} parent=43 // pred_region
          %336 = dma.done %s329, 2048
        $region48: #{tpu_custom_call.1} parent=43 // pred_fallthru
          _
        // Predicated region
        $region49: #{tpu_custom_call.1} parent=43 // pred_check
          %p337 = pneg %p83
        $region50: #{tpu_custom_call.1} parent=43 // pred_check_branch
          %339 = sbr.rel (%p337) target = $region52
        $region51: #{tpu_custom_call.1} parent=43 // pred_region
          %340 = dma.done [#allocation6], 2048
        $region52: #{tpu_custom_call.1} parent=43 // pred_fallthru
          _
        // Predicated region
        $region53: #{tpu_custom_call.1} parent=43 // pred_check
          %p341 = pneg %p104
        $region54: #{tpu_custom_call.1} parent=43 // pred_check_branch
          %343 = sbr.rel (%p341) target = $region56
        $region55: #{tpu_custom_call.1} parent=43 // pred_region
          %344 = dma.done [#allocation6], 2048
        $region56: #{tpu_custom_call.1} parent=43 // pred_fallthru
          _
        %s345 = sand.u32 %s138, 1
        %s346 = scalar_lea.sflag [#allocation9], %s345
        %s347 = sand.u32 %s138, 1
        %s348 = smul.addr %s347, 128
        %s349 = scalar_lea.vmem [#allocation8], %s348
        // Predicated region
        $region57: #{tpu_custom_call.1} parent=43 // pred_check
          %p350 = pneg %p151
        $region58: #{tpu_custom_call.1} parent=43 // pred_check_branch
          %352 = sbr.rel (%p350) target = $region60
        $region59: #{tpu_custom_call.1} parent=43 // pred_region
          %353 = dma.done %s346, 2048
        $region60: #{tpu_custom_call.1} parent=43 // pred_fallthru
          _
        %s354 = sand.u32 %s49, 1
        %s355 = scalar_lea.sflag [#allocation3], %s354
        %s356 = sand.u32 %s49, 1
        %s357 = smul.addr %s356, 128
        %s358 = scalar_lea.vmem [#allocation2], %s357
        %p359 = pneg %p62
        %p360 = pneg %p59
        %p361 = pneg %p83
        %p362 = pneg %p80
        %p363 = pneg %p104
        %p364 = pneg %p101
        %p365 = pneg %p125
        %p366 = pneg %p122
        %s367 = sand.u32 %s138, 1
        %s368 = scalar_lea.sflag [#allocation9], %s367
        %s369 = sand.u32 %s138, 1
        %s370 = smul.addr %s369, 128
        %s371 = scalar_lea.vmem [#allocation8], %s370
        %p372 = pneg %p151
        %p373 = pneg %p148
        %p374 = pneg %p172
        %p375 = pneg %p169
        %p376 = pneg %p200
        %p377 = pneg %p197
        %s378 = sand.u32 %s187, 1
        %s379 = scalar_lea.sflag [#allocation4], %s378
        %s380 = sand.u32 %s187, 1
        %s381 = smul.addr %s380, 128
        %s382 = scalar_lea.vmem [#allocation10], %s381
        %s383 = smul.u32 4, %s32
        %s384 = smul.u32 4, %s32
        %v385 = vld [vmem:[%s332] sm:$0xff]
        %v386 = vld [vmem:[%s332 + $0x8] sm:$0xff]
        %v387 = vld [vmem:[%s332 + $0x10] sm:$0xff]
        %v388 = vld [vmem:[%s332 + $0x18] sm:$0xff]
        %v389 = vld [vmem:[%s332 + $0x20] sm:$0xff]
        %v390 = vld [vmem:[%s332 + $0x28] sm:$0xff]
        %v391 = vld [vmem:[%s332 + $0x30] sm:$0xff]
        %v392 = vld [vmem:[%s332 + $0x38] sm:$0xff]
        %v393 = vld [vmem:[%s332 + $0x40] sm:$0xff]
        %v394 = vld [vmem:[%s332 + $0x48] sm:$0xff]
        %v395 = vld [vmem:[%s332 + $0x50] sm:$0xff]
        %v396 = vld [vmem:[%s332 + $0x58] sm:$0xff]
        %v397 = vld [vmem:[%s332 + $0x60] sm:$0xff]
        %v398 = vld [vmem:[%s332 + $0x68] sm:$0xff]
        %v399 = vld [vmem:[%s332 + $0x70] sm:$0xff]
        %v400 = vld [vmem:[%s332 + $0x78] sm:$0xff]
        %v401 = vld [vmem:[#allocation5] sm:$0xff]
        %v402 = vld [vmem:[#allocation5 + $0x8] sm:$0xff]
        %v403 = vld [vmem:[#allocation5 + $0x10] sm:$0xff]
        %v404 = vld [vmem:[#allocation5 + $0x18] sm:$0xff]
        %v405 = vld [vmem:[%s3] sm:$0x1]
        %v407 = vlaneseq
        %v408 = vshrl.u32 %v407, 7
        %v409 = vsub.s32 0, %v408
        %v410 = vrot.slane %v405, %v409
        %vm412 = vcmask 261120
        %v414 = vsel %vm412, %v385, 0
        %v417 = vsel %vm412, %v386, 0
        %v420 = vsel %vm412, %v387, 0
        %v423 = vsel %vm412, %v388, 0
        %v426 = vsel %vm412, %v389, 0
        %v429 = vsel %vm412, %v390, 0
        %v432 = vsel %vm412, %v391, 0
        %v435 = vsel %vm412, %v392, 0
        %v438 = vsel %vm412, %v393, 0
        %v441 = vsel %vm412, %v394, 0
        %v444 = vsel %vm412, %v395, 0
        %v447 = vsel %vm412, %v396, 0
        %v450 = vsel %vm412, %v397, 0
        %v453 = vsel %vm412, %v398, 0
        %v456 = vsel %vm412, %v399, 0
        %v459 = vsel %vm412, %v400, 0
        %461 = vmatprep.subr.mxu0 0.0
        %462 = vmatpush1.msra.mxu0 %v401
        %463 = vmatprep.subr.mxu0 0.0
        %464 = vmatpush1.msra.mxu0 %v402
        %465 = vmatprep.subr.mxu0 0.0
        %466 = vmatpush1.msra.mxu0 %v403
        %467 = vmatprep.subr.mxu0 0.0
        %468 = vmatpush1.msra.mxu0 %v404
        %469 = vmatprep.subr.mxu0 0.0
        %470 = vmatpush1.msra.mxu0 0.0
        %471 = vmatprep.subr.mxu0 0.0
        %472 = vmatpush1.msra.mxu0 0.0
        %473 = vmatprep.subr.mxu0 0.0
        %474 = vmatpush1.msra.mxu0 0.0
        %475 = vmatprep.subr.mxu0 0.0
        %476 = vmatpush1.msra.mxu0 0.0
        %477 = vmatprep.subr.mxu0 0.0
        %478 = vmatpush1.msra.mxu0 0.0
        %479 = vmatprep.subr.mxu0 0.0
        %480 = vmatpush1.msra.mxu0 0.0
        %481 = vmatprep.subr.mxu0 0.0
        %482 = vmatpush1.msra.mxu0 0.0
        %483 = vmatprep.subr.mxu0 0.0
        %484 = vmatpush1.msra.mxu0 0.0
        %485 = vmatprep.subr.mxu0 0.0
        %486 = vmatpush1.msra.mxu0 0.0
        %487 = vmatprep.subr.mxu0 0.0
        %488 = vmatpush1.msra.mxu0 0.0
        %489 = vmatprep.subr.mxu0 0.0
        %490 = vmatpush1.msra.mxu0 0.0
        %491 = vmatprep.subr.mxu0 0.0
        %492 = vmatpush1.msra.mxu0 0.0
        %493 = vmatprep.subr.mxu0 0.0
        %494 = vmatpush1.msra.mxu0 0.0
        %495 = vmatprep.subr.mxu0 0.0
        %496 = vmatpush1.msra.mxu0 0.0
        %497 = vmatprep.subr.mxu0 0.0
        %498 = vmatpush1.msra.mxu0 0.0
        %499 = vmatprep.subr.mxu0 0.0
        %500 = vmatpush1.msra.mxu0 0.0
        %501 = vmatprep.subr.mxu0 0.0
        %502 = vmatpush1.msra.mxu0 0.0
        %503 = vmatprep.subr.mxu0 0.0
        %504 = vmatpush1.msra.mxu0 0.0
        %505 = vmatprep.subr.mxu0 0.0
        %506 = vmatpush1.msra.mxu0 0.0
        %507 = vmatprep.subr.mxu0 0.0
        %508 = vmatpush1.msra.mxu0 0.0
        %509 = vmatprep.subr.mxu0 0.0
        %510 = vmatpush1.msra.mxu0 0.0
        %511 = vmatprep.subr.mxu0 0.0
        %512 = vmatpush1.msra.mxu0 0.0
        %513 = vmatprep.subr.mxu0 0.0
        %514 = vmatpush1.msra.mxu0 0.0
        %515 = vmatprep.subr.mxu0 0.0
        %516 = vmatpush1.msra.mxu0 0.0
        %517 = vmatprep.subr.mxu0 0.0
        %518 = vmatpush1.msra.mxu0 0.0
        %519 = vmatprep.subr.mxu0 0.0
        %520 = vmatpush1.msra.mxu0 0.0
        %521 = vmatprep.subr.mxu0 0.0
        %522 = vmatpush1.msra.mxu0 0.0
        %523 = vmatprep.subr.mxu0 0.0
        %524 = vmatpush1.msra.mxu0 0.0
        %525 = vmatprep.mubr.f32.mxu0 0.0
        %526 = vmatmul.mubr.f32.gmra.mrb[0].mxu0 %v414
        %v527 = vpop.f32.mrb[0].mxu0
        %v528 = vadd.f32 %v410, %v527
        %v529 = vpop.f32.mrb[0].mxu0
        %530 = vmatprep.mubr.f32.mxu0 0.0
        %531 = vmatmul.mubr.f32.gmra.mrb[0].mxu0 %v417
        %v532 = vpop.f32.mrb[0].mxu0
        %v533 = vadd.f32 %v410, %v532
        %v534 = vpop.f32.mrb[0].mxu0
        %535 = vmatprep.mubr.f32.mxu0 0.0
        %536 = vmatmul.mubr.f32.gmra.mrb[0].mxu0 %v420
        %v537 = vpop.f32.mrb[0].mxu0
        %v538 = vadd.f32 %v410, %v537
        %v539 = vpop.f32.mrb[0].mxu0
        %540 = vmatprep.mubr.f32.mxu0 0.0
        %541 = vmatmul.mubr.f32.gmra.mrb[0].mxu0 %v423
        %v542 = vpop.f32.mrb[0].mxu0
        %v543 = vadd.f32 %v410, %v542
        %v544 = vpop.f32.mrb[0].mxu0
        %545 = vmatprep.mubr.f32.mxu0 0.0
        %546 = vmatmul.mubr.f32.gmra.mrb[0].mxu0 %v426
        %v547 = vpop.f32.mrb[0].mxu0
        %v548 = vadd.f32 %v410, %v547
        %v549 = vpop.f32.mrb[0].mxu0
        %550 = vmatprep.mubr.f32.mxu0 0.0
        %551 = vmatmul.mubr.f32.gmra.mrb[0].mxu0 %v429
        %v552 = vpop.f32.mrb[0].mxu0
        %v553 = vadd.f32 %v410, %v552
        %v554 = vpop.f32.mrb[0].mxu0
        %555 = vmatprep.mubr.f32.mxu0 0.0
        %556 = vmatmul.mubr.f32.gmra.mrb[0].mxu0 %v432
        %v557 = vpop.f32.mrb[0].mxu0
        %v558 = vadd.f32 %v410, %v557
        %v559 = vpop.f32.mrb[0].mxu0
        %560 = vmatprep.mubr.f32.mxu0 0.0
        %561 = vmatmul.mubr.f32.gmra.mrb[0].mxu0 %v435
        %v562 = vpop.f32.mrb[0].mxu0
        %v563 = vadd.f32 %v410, %v562
        %v564 = vpop.f32.mrb[0].mxu0
        %565 = vmatprep.mubr.f32.mxu0 0.0
        %566 = vmatmul.mubr.f32.gmra.mrb[0].mxu0 %v438
        %v567 = vpop.f32.mrb[0].mxu0
        %v568 = vadd.f32 %v410, %v567
        %v569 = vpop.f32.mrb[0].mxu0
        %570 = vmatprep.mubr.f32.mxu0 0.0
        %571 = vmatmul.mubr.f32.gmra.mrb[0].mxu0 %v441
        %v572 = vpop.f32.mrb[0].mxu0
        %v573 = vadd.f32 %v410, %v572
        %v574 = vpop.f32.mrb[0].mxu0
        %575 = vmatprep.mubr.f32.mxu0 0.0
        %576 = vmatmul.mubr.f32.gmra.mrb[0].mxu0 %v444
        %v577 = vpop.f32.mrb[0].mxu0
        %v578 = vadd.f32 %v410, %v577
        %v579 = vpop.f32.mrb[0].mxu0
        %580 = vmatprep.mubr.f32.mxu0 0.0
        %581 = vmatmul.mubr.f32.gmra.mrb[0].mxu0 %v447
        %v582 = vpop.f32.mrb[0].mxu0
        %v583 = vadd.f32 %v410, %v582
        %v584 = vpop.f32.mrb[0].mxu0
        %585 = vmatprep.mubr.f32.mxu0 0.0
        %586 = vmatmul.mubr.f32.gmra.mrb[0].mxu0 %v450
        %v587 = vpop.f32.mrb[0].mxu0
        %v588 = vadd.f32 %v410, %v587
        %v589 = vpop.f32.mrb[0].mxu0
        %590 = vmatprep.mubr.f32.mxu0 0.0
        %591 = vmatmul.mubr.f32.gmra.mrb[0].mxu0 %v453
        %v592 = vpop.f32.mrb[0].mxu0
        %v593 = vadd.f32 %v410, %v592
        %v594 = vpop.f32.mrb[0].mxu0
        %595 = vmatprep.mubr.f32.mxu0 0.0
        %596 = vmatmul.mubr.f32.gmra.mrb[0].mxu0 %v456
        %v597 = vpop.f32.mrb[0].mxu0
        %v598 = vadd.f32 %v410, %v597
        %v599 = vpop.f32.mrb[0].mxu0
        %600 = vmatprep.mubr.f32.mxu0 0.0
        %601 = vmatmul.mubr.f32.gmra.mrb[0].mxu0 %v459
        %v602 = vpop.f32.mrb[0].mxu0
        %v603 = vadd.f32 %v410, %v602
        %v604 = vpop.f32.mrb[0].mxu0
        %605 = vdwg.mxu0
        %v606 = vld [vmem:[#allocation7] sm:$0xff]
        %v607 = vld [vmem:[#allocation7 + $0x8] sm:$0xff]
        %v608 = vld [vmem:[#allocation7 + $0x10] sm:$0xff]
        %v609 = vld [vmem:[#allocation7 + $0x18] sm:$0xff]
        %610 = vmatprep.subr.mxu0 0.0
        %611 = vmatpush1.msra.mxu0 %v606
        %612 = vmatprep.subr.mxu0 0.0
        %613 = vmatpush1.msra.mxu0 %v607
        %614 = vmatprep.subr.mxu0 0.0
        %615 = vmatpush1.msra.mxu0 %v608
        %616 = vmatprep.subr.mxu0 0.0
        %617 = vmatpush1.msra.mxu0 %v609
        %618 = vmatprep.subr.mxu0 0.0
        %619 = vmatpush1.msra.mxu0 0.0
        %620 = vmatprep.subr.mxu0 0.0
        %621 = vmatpush1.msra.mxu0 0.0
        %622 = vmatprep.subr.mxu0 0.0
        %623 = vmatpush1.msra.mxu0 0.0
        %624 = vmatprep.subr.mxu0 0.0
        %625 = vmatpush1.msra.mxu0 0.0
        %626 = vmatprep.subr.mxu0 0.0
        %627 = vmatpush1.msra.mxu0 0.0
        %628 = vmatprep.subr.mxu0 0.0
        %629 = vmatpush1.msra.mxu0 0.0
        %630 = vmatprep.subr.mxu0 0.0
        %631 = vmatpush1.msra.mxu0 0.0
        %632 = vmatprep.subr.mxu0 0.0
        %633 = vmatpush1.msra.mxu0 0.0
        %634 = vmatprep.subr.mxu0 0.0
        %635 = vmatpush1.msra.mxu0 0.0
        %636 = vmatprep.subr.mxu0 0.0
        %637 = vmatpush1.msra.mxu0 0.0
        %638 = vmatprep.subr.mxu0 0.0
        %639 = vmatpush1.msra.mxu0 0.0
        %640 = vmatprep.subr.mxu0 0.0
        %641 = vmatpush1.msra.mxu0 0.0
        %642 = vmatprep.subr.mxu0 0.0
        %643 = vmatpush1.msra.mxu0 0.0
        %644 = vmatprep.subr.mxu0 0.0
        %645 = vmatpush1.msra.mxu0 0.0
        %646 = vmatprep.subr.mxu0 0.0
        %647 = vmatpush1.msra.mxu0 0.0
        %648 = vmatprep.subr.mxu0 0.0
        %649 = vmatpush1.msra.mxu0 0.0
        %650 = vmatprep.subr.mxu0 0.0
        %651 = vmatpush1.msra.mxu0 0.0
        %652 = vmatprep.subr.mxu0 0.0
        %653 = vmatpush1.msra.mxu0 0.0
        %654 = vmatprep.subr.mxu0 0.0
        %655 = vmatpush1.msra.mxu0 0.0
        %656 = vmatprep.subr.mxu0 0.0
        %657 = vmatpush1.msra.mxu0 0.0
        %658 = vmatprep.subr.mxu0 0.0
        %659 = vmatpush1.msra.mxu0 0.0
        %660 = vmatprep.subr.mxu0 0.0
        %661 = vmatpush1.msra.mxu0 0.0
        %662 = vmatprep.subr.mxu0 0.0
        %663 = vmatpush1.msra.mxu0 0.0
        %664 = vmatprep.subr.mxu0 0.0
        %665 = vmatpush1.msra.mxu0 0.0
        %666 = vmatprep.subr.mxu0 0.0
        %667 = vmatpush1.msra.mxu0 0.0
        %668 = vmatprep.subr.mxu0 0.0
        %669 = vmatpush1.msra.mxu0 0.0
        %670 = vmatprep.subr.mxu0 0.0
        %671 = vmatpush1.msra.mxu0 0.0
        %672 = vmatprep.subr.mxu0 0.0
        %673 = vmatpush1.msra.mxu0 0.0
        %674 = vmatprep.mubr.f32.mxu0 0.0
        %675 = vmatmul.mubr.f32.gmra.mrb[0].mxu0 %v414
        %v676 = vpop.f32.mrb[0].mxu0
        %v677 = vadd.f32 0.0, %v676
        %v678 = vpop.f32.mrb[0].mxu0
        %679 = vmatprep.mubr.f32.mxu0 0.0
        %680 = vmatmul.mubr.f32.gmra.mrb[0].mxu0 %v417
        %v681 = vpop.f32.mrb[0].mxu0
        %v682 = vadd.f32 0.0, %v681
        %v683 = vpop.f32.mrb[0].mxu0
        %684 = vmatprep.mubr.f32.mxu0 0.0
        %685 = vmatmul.mubr.f32.gmra.mrb[0].mxu0 %v420
        %v686 = vpop.f32.mrb[0].mxu0
        %v687 = vadd.f32 0.0, %v686
        %v688 = vpop.f32.mrb[0].mxu0
        %689 = vmatprep.mubr.f32.mxu0 0.0
        %690 = vmatmul.mubr.f32.gmra.mrb[0].mxu0 %v423
        %v691 = vpop.f32.mrb[0].mxu0
        %v692 = vadd.f32 0.0, %v691
        %v693 = vpop.f32.mrb[0].mxu0
        %694 = vmatprep.mubr.f32.mxu0 0.0
        %695 = vmatmul.mubr.f32.gmra.mrb[0].mxu0 %v426
        %v696 = vpop.f32.mrb[0].mxu0
        %v697 = vadd.f32 0.0, %v696
        %v698 = vpop.f32.mrb[0].mxu0
        %699 = vmatprep.mubr.f32.mxu0 0.0
        %700 = vmatmul.mubr.f32.gmra.mrb[0].mxu0 %v429
        %v701 = vpop.f32.mrb[0].mxu0
        %v702 = vadd.f32 0.0, %v701
        %v703 = vpop.f32.mrb[0].mxu0
        %704 = vmatprep.mubr.f32.mxu0 0.0
        %705 = vmatmul.mubr.f32.gmra.mrb[0].mxu0 %v432
        %v706 = vpop.f32.mrb[0].mxu0
        %v707 = vadd.f32 0.0, %v706
        %v708 = vpop.f32.mrb[0].mxu0
        %709 = vmatprep.mubr.f32.mxu0 0.0
        %710 = vmatmul.mubr.f32.gmra.mrb[0].mxu0 %v435
        %v711 = vpop.f32.mrb[0].mxu0
        %v712 = vadd.f32 0.0, %v711
        %v713 = vpop.f32.mrb[0].mxu0
        %714 = vmatprep.mubr.f32.mxu0 0.0
        %715 = vmatmul.mubr.f32.gmra.mrb[0].mxu0 %v438
        %v716 = vpop.f32.mrb[0].mxu0
        %v717 = vadd.f32 0.0, %v716
        %v718 = vpop.f32.mrb[0].mxu0
        %719 = vmatprep.mubr.f32.mxu0 0.0
        %720 = vmatmul.mubr.f32.gmra.mrb[0].mxu0 %v441
        %v721 = vpop.f32.mrb[0].mxu0
        %v722 = vadd.f32 0.0, %v721
        %v723 = vpop.f32.mrb[0].mxu0
        %724 = vmatprep.mubr.f32.mxu0 0.0
        %725 = vmatmul.mubr.f32.gmra.mrb[0].mxu0 %v444
        %v726 = vpop.f32.mrb[0].mxu0
        %v727 = vadd.f32 0.0, %v726
        %v728 = vpop.f32.mrb[0].mxu0
        %729 = vmatprep.mubr.f32.mxu0 0.0
        %730 = vmatmul.mubr.f32.gmra.mrb[0].mxu0 %v447
        %v731 = vpop.f32.mrb[0].mxu0
        %v732 = vadd.f32 0.0, %v731
        %v733 = vpop.f32.mrb[0].mxu0
        %734 = vmatprep.mubr.f32.mxu0 0.0
        %735 = vmatmul.mubr.f32.gmra.mrb[0].mxu0 %v450
        %v736 = vpop.f32.mrb[0].mxu0
        %v737 = vadd.f32 0.0, %v736
        %v738 = vpop.f32.mrb[0].mxu0
        %739 = vmatprep.mubr.f32.mxu0 0.0
        %740 = vmatmul.mubr.f32.gmra.mrb[0].mxu0 %v453
        %v741 = vpop.f32.mrb[0].mxu0
        %v742 = vadd.f32 0.0, %v741
        %v743 = vpop.f32.mrb[0].mxu0
        %744 = vmatprep.mubr.f32.mxu0 0.0
        %745 = vmatmul.mubr.f32.gmra.mrb[0].mxu0 %v456
        %v746 = vpop.f32.mrb[0].mxu0
        %v747 = vadd.f32 0.0, %v746
        %v748 = vpop.f32.mrb[0].mxu0
        %749 = vmatprep.mubr.f32.mxu0 0.0
        %750 = vmatmul.mubr.f32.gmra.mrb[0].mxu0 %v459
        %v751 = vpop.f32.mrb[0].mxu0
        %v752 = vadd.f32 0.0, %v751
        %v753 = vpop.f32.mrb[0].mxu0
        %754 = vdwg.mxu0
        %v755 = vld [vmem:[%s349] sm:$0xff]
        %v756 = vld [vmem:[%s349 + $0x8] sm:$0xff]
        %v757 = vld [vmem:[%s349 + $0x10] sm:$0xff]
        %v758 = vld [vmem:[%s349 + $0x18] sm:$0xff]
        %v760 = vsel %vm412, %v528, 0
        %v763 = vsel %vm412, %v533, 0
        %v766 = vsel %vm412, %v538, 0
        %v769 = vsel %vm412, %v543, 0
        %771 = vmatprep.subr.mxu0 0.0
        %772 = vmatpush1.xpose.msra.mxu0 %v414
        %773 = vmatprep.subr.mxu0 0.0
        %774 = vmatpush1.xpose.msra.mxu0 %v417
        %775 = vmatprep.subr.mxu0 0.0
        %776 = vmatpush1.xpose.msra.mxu0 %v420
        %777 = vmatprep.subr.mxu0 0.0
        %778 = vmatpush1.xpose.msra.mxu0 %v423
        %779 = vmatprep.subr.mxu0 0.0
        %780 = vmatpush1.xpose.msra.mxu0 0.0
        %781 = vmatprep.subr.mxu0 0.0
        %782 = vmatpush1.xpose.msra.mxu0 0.0
        %783 = vmatprep.subr.mxu0 0.0
        %784 = vmatpush1.xpose.msra.mxu0 0.0
        %785 = vmatprep.subr.mxu0 0.0
        %786 = vmatpush1.xpose.msra.mxu0 0.0
        %787 = vmatprep.subr.mxu0 0.0
        %788 = vmatpush1.xpose.msra.mxu0 0.0
        %789 = vmatprep.subr.mxu0 0.0
        %790 = vmatpush1.xpose.msra.mxu0 0.0
        %791 = vmatprep.subr.mxu0 0.0
        %792 = vmatpush1.xpose.msra.mxu0 0.0
        %793 = vmatprep.subr.mxu0 0.0
        %794 = vmatpush1.xpose.msra.mxu0 0.0
        %795 = vmatprep.subr.mxu0 0.0
        %796 = vmatpush1.xpose.msra.mxu0 0.0
        %797 = vmatprep.subr.mxu0 0.0
        %798 = vmatpush1.xpose.msra.mxu0 0.0
        %799 = vmatprep.subr.mxu0 0.0
        %800 = vmatpush1.xpose.msra.mxu0 0.0
        %801 = vmatprep.subr.mxu0 0.0
        %802 = vmatpush1.xpose.msra.mxu0 0.0
        %803 = vmatprep.subr.mxu0 0.0
        %804 = vmatpush1.xpose.msra.mxu0 0.0
        %805 = vmatprep.subr.mxu0 0.0
        %806 = vmatpush1.xpose.msra.mxu0 0.0
        %807 = vmatprep.subr.mxu0 0.0
        %808 = vmatpush1.xpose.msra.mxu0 0.0
        %809 = vmatprep.subr.mxu0 0.0
        %810 = vmatpush1.xpose.msra.mxu0 0.0
        %811 = vmatprep.subr.mxu0 0.0
        %812 = vmatpush1.xpose.msra.mxu0 0.0
        %813 = vmatprep.subr.mxu0 0.0
        %814 = vmatpush1.xpose.msra.mxu0 0.0
        %815 = vmatprep.subr.mxu0 0.0
        %816 = vmatpush1.xpose.msra.mxu0 0.0
        %817 = vmatprep.subr.mxu0 0.0
        %818 = vmatpush1.xpose.msra.mxu0 0.0
        %819 = vmatprep.subr.mxu0 0.0
        %820 = vmatpush1.xpose.msra.mxu0 0.0
        %821 = vmatprep.subr.mxu0 0.0
        %822 = vmatpush1.xpose.msra.mxu0 0.0
        %823 = vmatprep.subr.mxu0 0.0
        %824 = vmatpush1.xpose.msra.mxu0 0.0
        %825 = vmatprep.subr.mxu0 0.0
        %826 = vmatpush1.xpose.msra.mxu0 0.0
        %827 = vmatprep.subr.mxu0 0.0
        %828 = vmatpush1.xpose.msra.mxu0 0.0
        %829 = vmatprep.subr.mxu0 0.0
        %830 = vmatpush1.xpose.msra.mxu0 0.0
        %831 = vmatprep.subr.mxu0 0.0
        %832 = vmatpush1.xpose.msra.mxu0 0.0
        %833 = vmatprep.subr.mxu0 0.0
        %834 = vmatpush1.xpose.msra.mxu0 0.0
        %835 = vmatprep.mubr.f32.mxu0 0.0
        %836 = vmatmul.mubr.f32.gmra.mrb[0].mxu0 %v760
        %v837 = vpop.f32.mrb[0].mxu0
        %v838 = vadd.f32 %v755, %v837
        %v839 = vpop.f32.mrb[0].mxu0
        %840 = vmatprep.mubr.f32.mxu0 0.0
        %841 = vmatmul.mubr.f32.gmra.mrb[0].mxu0 %v763
        %v842 = vpop.f32.mrb[0].mxu0
        %v843 = vadd.f32 %v756, %v842
        %v844 = vpop.f32.mrb[0].mxu0
        %845 = vmatprep.mubr.f32.mxu0 0.0
        %846 = vmatmul.mubr.f32.gmra.mrb[0].mxu0 %v766
        %v847 = vpop.f32.mrb[0].mxu0
        %v848 = vadd.f32 %v757, %v847
        %v849 = vpop.f32.mrb[0].mxu0
        %850 = vmatprep.mubr.f32.mxu0 0.0
        %851 = vmatmul.mubr.f32.gmra.mrb[0].mxu0 %v769
        %v852 = vpop.f32.mrb[0].mxu0
        %v853 = vadd.f32 %v758, %v852
        %v854 = vpop.f32.mrb[0].mxu0
        %855 = vdwg.mxu0
        %v857 = vsel %vm412, %v548, 0
        %v860 = vsel %vm412, %v553, 0
        %v863 = vsel %vm412, %v558, 0
        %v866 = vsel %vm412, %v563, 0
        %868 = vmatprep.subr.mxu0 0.0
        %869 = vmatpush1.xpose.msra.mxu0 %v426
        %870 = vmatprep.subr.mxu0 0.0
        %871 = vmatpush1.xpose.msra.mxu0 %v429
        %872 = vmatprep.subr.mxu0 0.0
        %873 = vmatpush1.xpose.msra.mxu0 %v432
        %874 = vmatprep.subr.mxu0 0.0
        %875 = vmatpush1.xpose.msra.mxu0 %v435
        %876 = vmatprep.subr.mxu0 0.0
        %877 = vmatpush1.xpose.msra.mxu0 0.0
        %878 = vmatprep.subr.mxu0 0.0
        %879 = vmatpush1.xpose.msra.mxu0 0.0
        %880 = vmatprep.subr.mxu0 0.0
        %881 = vmatpush1.xpose.msra.mxu0 0.0
        %882 = vmatprep.subr.mxu0 0.0
        %883 = vmatpush1.xpose.msra.mxu0 0.0
        %884 = vmatprep.subr.mxu0 0.0
        %885 = vmatpush1.xpose.msra.mxu0 0.0
        %886 = vmatprep.subr.mxu0 0.0
        %887 = vmatpush1.xpose.msra.mxu0 0.0
        %888 = vmatprep.subr.mxu0 0.0
        %889 = vmatpush1.xpose.msra.mxu0 0.0
        %890 = vmatprep.subr.mxu0 0.0
        %891 = vmatpush1.xpose.msra.mxu0 0.0
        %892 = vmatprep.subr.mxu0 0.0
        %893 = vmatpush1.xpose.msra.mxu0 0.0
        %894 = vmatprep.subr.mxu0 0.0
        %895 = vmatpush1.xpose.msra.mxu0 0.0
        %896 = vmatprep.subr.mxu0 0.0
        %897 = vmatpush1.xpose.msra.mxu0 0.0
        %898 = vmatprep.subr.mxu0 0.0
        %899 = vmatpush1.xpose.msra.mxu0 0.0
        %900 = vmatprep.subr.mxu0 0.0
        %901 = vmatpush1.xpose.msra.mxu0 0.0
        %902 = vmatprep.subr.mxu0 0.0
        %903 = vmatpush1.xpose.msra.mxu0 0.0
        %904 = vmatprep.subr.mxu0 0.0
        %905 = vmatpush1.xpose.msra.mxu0 0.0
        %906 = vmatprep.subr.mxu0 0.0
        %907 = vmatpush1.xpose.msra.mxu0 0.0
        %908 = vmatprep.subr.mxu0 0.0
        %909 = vmatpush1.xpose.msra.mxu0 0.0
        %910 = vmatprep.subr.mxu0 0.0
        %911 = vmatpush1.xpose.msra.mxu0 0.0
        %912 = vmatprep.subr.mxu0 0.0
        %913 = vmatpush1.xpose.msra.mxu0 0.0
        %914 = vmatprep.subr.mxu0 0.0
        %915 = vmatpush1.xpose.msra.mxu0 0.0
        %916 = vmatprep.subr.mxu0 0.0
        %917 = vmatpush1.xpose.msra.mxu0 0.0
        %918 = vmatprep.subr.mxu0 0.0
        %919 = vmatpush1.xpose.msra.mxu0 0.0
        %920 = vmatprep.subr.mxu0 0.0
        %921 = vmatpush1.xpose.msra.mxu0 0.0
        %922 = vmatprep.subr.mxu0 0.0
        %923 = vmatpush1.xpose.msra.mxu0 0.0
        %924 = vmatprep.subr.mxu0 0.0
        %925 = vmatpush1.xpose.msra.mxu0 0.0
        %926 = vmatprep.subr.mxu0 0.0
        %927 = vmatpush1.xpose.msra.mxu0 0.0
        %928 = vmatprep.subr.mxu0 0.0
        %929 = vmatpush1.xpose.msra.mxu0 0.0
        %930 = vmatprep.subr.mxu0 0.0
        %931 = vmatpush1.xpose.msra.mxu0 0.0
        %932 = vmatprep.mubr.f32.mxu0 0.0
        %933 = vmatmul.mubr.f32.gmra.mrb[0].mxu0 %v857
        %v934 = vpop.f32.mrb[0].mxu0
        %v935 = vadd.f32 %v755, %v934
        %v936 = vpop.f32.mrb[0].mxu0
        %937 = vmatprep.mubr.f32.mxu0 0.0
        %938 = vmatmul.mubr.f32.gmra.mrb[0].mxu0 %v860
        %v939 = vpop.f32.mrb[0].mxu0
        %v940 = vadd.f32 %v756, %v939
        %v941 = vpop.f32.mrb[0].mxu0
        %942 = vmatprep.mubr.f32.mxu0 0.0
        %943 = vmatmul.mubr.f32.gmra.mrb[0].mxu0 %v863
        %v944 = vpop.f32.mrb[0].mxu0
        %v945 = vadd.f32 %v757, %v944
        %v946 = vpop.f32.mrb[0].mxu0
        %947 = vmatprep.mubr.f32.mxu0 0.0
        %948 = vmatmul.mubr.f32.gmra.mrb[0].mxu0 %v866
        %v949 = vpop.f32.mrb[0].mxu0
        %v950 = vadd.f32 %v758, %v949
        %v951 = vpop.f32.mrb[0].mxu0
        %952 = vdwg.mxu0
        %v954 = vsel %vm412, %v568, 0
        %v957 = vsel %vm412, %v573, 0
        %v960 = vsel %vm412, %v578, 0
        %v963 = vsel %vm412, %v583, 0
        %965 = vmatprep.subr.mxu0 0.0
        %966 = vmatpush1.xpose.msra.mxu0 %v438
        %967 = vmatprep.subr.mxu0 0.0
        %968 = vmatpush1.xpose.msra.mxu0 %v441
        %969 = vmatprep.subr.mxu0 0.0
        %970 = vmatpush1.xpose.msra.mxu0 %v444
        %971 = vmatprep.subr.mxu0 0.0
        %972 = vmatpush1.xpose.msra.mxu0 %v447
        %973 = vmatprep.subr.mxu0 0.0
        %974 = vmatpush1.xpose.msra.mxu0 0.0
        %975 = vmatprep.subr.mxu0 0.0
        %976 = vmatpush1.xpose.msra.mxu0 0.0
        %977 = vmatprep.subr.mxu0 0.0
        %978 = vmatpush1.xpose.msra.mxu0 0.0
        %979 = vmatprep.subr.mxu0 0.0
        %980 = vmatpush1.xpose.msra.mxu0 0.0
        %981 = vmatprep.subr.mxu0 0.0
        %982 = vmatpush1.xpose.msra.mxu0 0.0
        %983 = vmatprep.subr.mxu0 0.0
        %984 = vmatpush1.xpose.msra.mxu0 0.0
        %985 = vmatprep.subr.mxu0 0.0
        %986 = vmatpush1.xpose.msra.mxu0 0.0
        %987 = vmatprep.subr.mxu0 0.0
        %988 = vmatpush1.xpose.msra.mxu0 0.0
        %989 = vmatprep.subr.mxu0 0.0
        %990 = vmatpush1.xpose.msra.mxu0 0.0
        %991 = vmatprep.subr.mxu0 0.0
        %992 = vmatpush1.xpose.msra.mxu0 0.0
        %993 = vmatprep.subr.mxu0 0.0
        %994 = vmatpush1.xpose.msra.mxu0 0.0
        %995 = vmatprep.subr.mxu0 0.0
        %996 = vmatpush1.xpose.msra.mxu0 0.0
        %997 = vmatprep.subr.mxu0 0.0
        %998 = vmatpush1.xpose.msra.mxu0 0.0
        %999 = vmatprep.subr.mxu0 0.0
        %1000 = vmatpush1.xpose.msra.mxu0 0.0
        %1001 = vmatprep.subr.mxu0 0.0
        %1002 = vmatpush1.xpose.msra.mxu0 0.0
        %1003 = vmatprep.subr.mxu0 0.0
        %1004 = vmatpush1.xpose.msra.mxu0 0.0
        %1005 = vmatprep.subr.mxu0 0.0
        %1006 = vmatpush1.xpose.msra.mxu0 0.0
        %1007 = vmatprep.subr.mxu0 0.0
        %1008 = vmatpush1.xpose.msra.mxu0 0.0
        %1009 = vmatprep.subr.mxu0 0.0
        %1010 = vmatpush1.xpose.msra.mxu0 0.0
        %1011 = vmatprep.subr.mxu0 0.0
        %1012 = vmatpush1.xpose.msra.mxu0 0.0
        %1013 = vmatprep.subr.mxu0 0.0
        %1014 = vmatpush1.xpose.msra.mxu0 0.0
        %1015 = vmatprep.subr.mxu0 0.0
        %1016 = vmatpush1.xpose.msra.mxu0 0.0
        %1017 = vmatprep.subr.mxu0 0.0
        %1018 = vmatpush1.xpose.msra.mxu0 0.0
        %1019 = vmatprep.subr.mxu0 0.0
        %1020 = vmatpush1.xpose.msra.mxu0 0.0
        %1021 = vmatprep.subr.mxu0 0.0
        %1022 = vmatpush1.xpose.msra.mxu0 0.0
        %1023 = vmatprep.subr.mxu0 0.0
        %1024 = vmatpush1.xpose.msra.mxu0 0.0
        %1025 = vmatprep.subr.mxu0 0.0
        %1026 = vmatpush1.xpose.msra.mxu0 0.0
        %1027 = vmatprep.subr.mxu0 0.0
        %1028 = vmatpush1.xpose.msra.mxu0 0.0
        %1029 = vmatprep.mubr.f32.mxu0 0.0
        %1030 = vmatmul.mubr.f32.gmra.mrb[0].mxu0 %v954
        %v1031 = vpop.f32.mrb[0].mxu0
        %v1032 = vadd.f32 %v755, %v1031
        %v1033 = vpop.f32.mrb[0].mxu0
        %1034 = vmatprep.mubr.f32.mxu0 0.0
        %1035 = vmatmul.mubr.f32.gmra.mrb[0].mxu0 %v957
        %v1036 = vpop.f32.mrb[0].mxu0
        %v1037 = vadd.f32 %v756, %v1036
        %v1038 = vpop.f32.mrb[0].mxu0
        %1039 = vmatprep.mubr.f32.mxu0 0.0
        %1040 = vmatmul.mubr.f32.gmra.mrb[0].mxu0 %v960
        %v1041 = vpop.f32.mrb[0].mxu0
        %v1042 = vadd.f32 %v757, %v1041
        %v1043 = vpop.f32.mrb[0].mxu0
        %1044 = vmatprep.mubr.f32.mxu0 0.0
        %1045 = vmatmul.mubr.f32.gmra.mrb[0].mxu0 %v963
        %v1046 = vpop.f32.mrb[0].mxu0
        %v1047 = vadd.f32 %v758, %v1046
        %v1048 = vpop.f32.mrb[0].mxu0
        %1049 = vdwg.mxu0
        %v1051 = vsel %vm412, %v588, 0
        %v1054 = vsel %vm412, %v593, 0
        %v1057 = vsel %vm412, %v598, 0
        %v1060 = vsel %vm412, %v603, 0
        %1062 = vmatprep.subr.mxu0 0.0
        %1063 = vmatpush1.xpose.msra.mxu0 %v450
        %1064 = vmatprep.subr.mxu0 0.0
        %1065 = vmatpush1.xpose.msra.mxu0 %v453
        %1066 = vmatprep.subr.mxu0 0.0
        %1067 = vmatpush1.xpose.msra.mxu0 %v456
        %1068 = vmatprep.subr.mxu0 0.0
        %1069 = vmatpush1.xpose.msra.mxu0 %v459
        %1070 = vmatprep.subr.mxu0 0.0
        %1071 = vmatpush1.xpose.msra.mxu0 0.0
        %1072 = vmatprep.subr.mxu0 0.0
        %1073 = vmatpush1.xpose.msra.mxu0 0.0
        %1074 = vmatprep.subr.mxu0 0.0
        %1075 = vmatpush1.xpose.msra.mxu0 0.0
        %1076 = vmatprep.subr.mxu0 0.0
        %1077 = vmatpush1.xpose.msra.mxu0 0.0
        %1078 = vmatprep.subr.mxu0 0.0
        %1079 = vmatpush1.xpose.msra.mxu0 0.0
        %1080 = vmatprep.subr.mxu0 0.0
        %1081 = vmatpush1.xpose.msra.mxu0 0.0
        %1082 = vmatprep.subr.mxu0 0.0
        %1083 = vmatpush1.xpose.msra.mxu0 0.0
        %1084 = vmatprep.subr.mxu0 0.0
        %1085 = vmatpush1.xpose.msra.mxu0 0.0
        %1086 = vmatprep.subr.mxu0 0.0
        %1087 = vmatpush1.xpose.msra.mxu0 0.0
        %1088 = vmatprep.subr.mxu0 0.0
        %1089 = vmatpush1.xpose.msra.mxu0 0.0
        %1090 = vmatprep.subr.mxu0 0.0
        %1091 = vmatpush1.xpose.msra.mxu0 0.0
        %1092 = vmatprep.subr.mxu0 0.0
        %1093 = vmatpush1.xpose.msra.mxu0 0.0
        %1094 = vmatprep.subr.mxu0 0.0
        %1095 = vmatpush1.xpose.msra.mxu0 0.0
        %1096 = vmatprep.subr.mxu0 0.0
        %1097 = vmatpush1.xpose.msra.mxu0 0.0
        %1098 = vmatprep.subr.mxu0 0.0
        %1099 = vmatpush1.xpose.msra.mxu0 0.0
        %1100 = vmatprep.subr.mxu0 0.0
        %1101 = vmatpush1.xpose.msra.mxu0 0.0
        %1102 = vmatprep.subr.mxu0 0.0
        %1103 = vmatpush1.xpose.msra.mxu0 0.0
        %1104 = vmatprep.subr.mxu0 0.0
        %1105 = vmatpush1.xpose.msra.mxu0 0.0
        %1106 = vmatprep.subr.mxu0 0.0
        %1107 = vmatpush1.xpose.msra.mxu0 0.0
        %1108 = vmatprep.subr.mxu0 0.0
        %1109 = vmatpush1.xpose.msra.mxu0 0.0
        %1110 = vmatprep.subr.mxu0 0.0
        %1111 = vmatpush1.xpose.msra.mxu0 0.0
        %1112 = vmatprep.subr.mxu0 0.0
        %1113 = vmatpush1.xpose.msra.mxu0 0.0
        %1114 = vmatprep.subr.mxu0 0.0
        %1115 = vmatpush1.xpose.msra.mxu0 0.0
        %1116 = vmatprep.subr.mxu0 0.0
        %1117 = vmatpush1.xpose.msra.mxu0 0.0
        %1118 = vmatprep.subr.mxu0 0.0
        %1119 = vmatpush1.xpose.msra.mxu0 0.0
        %1120 = vmatprep.subr.mxu0 0.0
        %1121 = vmatpush1.xpose.msra.mxu0 0.0
        %1122 = vmatprep.subr.mxu0 0.0
        %1123 = vmatpush1.xpose.msra.mxu0 0.0
        %1124 = vmatprep.subr.mxu0 0.0
        %1125 = vmatpush1.xpose.msra.mxu0 0.0
        %1126 = vmatprep.mubr.f32.mxu0 0.0
        %1127 = vmatmul.mubr.f32.gmra.mrb[0].mxu0 %v1051
        %v1128 = vpop.f32.mrb[0].mxu0
        %v1129 = vadd.f32 %v755, %v1128
        %v1130 = vpop.f32.mrb[0].mxu0
        %1131 = vmatprep.mubr.f32.mxu0 0.0
        %1132 = vmatmul.mubr.f32.gmra.mrb[0].mxu0 %v1054
        %v1133 = vpop.f32.mrb[0].mxu0
        %v1134 = vadd.f32 %v756, %v1133
        %v1135 = vpop.f32.mrb[0].mxu0
        %1136 = vmatprep.mubr.f32.mxu0 0.0
        %1137 = vmatmul.mubr.f32.gmra.mrb[0].mxu0 %v1057
        %v1138 = vpop.f32.mrb[0].mxu0
        %v1139 = vadd.f32 %v757, %v1138
        %v1140 = vpop.f32.mrb[0].mxu0
        %1141 = vmatprep.mubr.f32.mxu0 0.0
        %1142 = vmatmul.mubr.f32.gmra.mrb[0].mxu0 %v1060
        %v1143 = vpop.f32.mrb[0].mxu0
        %v1144 = vadd.f32 %v758, %v1143
        %v1145 = vpop.f32.mrb[0].mxu0
        %1146 = vdwg.mxu0
        %v1147 = vsel %vm412, %v838, -inf
        %1148 = vmax.xlane.f32.xlu0 %v1147
        %v1149 = vpop.xlane.xlu0 %1148
        %v1150 = vsel %vm412, %v843, -inf
        %1151 = vmax.xlane.f32.xlu0 %v1150
        %v1152 = vpop.xlane.xlu0 %1151
        %v1153 = vsel %vm412, %v848, -inf
        %1154 = vmax.xlane.f32.xlu0 %v1153
        %v1155 = vpop.xlane.xlu0 %1154
        %v1156 = vsel %vm412, %v853, -inf
        %1157 = vmax.xlane.f32.xlu0 %v1156
        %v1158 = vpop.xlane.xlu0 %1157
        %v1159 = vsel %vm412, %v935, -inf
        %1160 = vmax.xlane.f32.xlu0 %v1159
        %v1161 = vpop.xlane.xlu0 %1160
        %v1162 = vsel %vm412, %v940, -inf
        %1163 = vmax.xlane.f32.xlu0 %v1162
        %v1164 = vpop.xlane.xlu0 %1163
        %v1165 = vsel %vm412, %v945, -inf
        %1166 = vmax.xlane.f32.xlu0 %v1165
        %v1167 = vpop.xlane.xlu0 %1166
        %v1168 = vsel %vm412, %v950, -inf
        %1169 = vmax.xlane.f32.xlu0 %v1168
        %v1170 = vpop.xlane.xlu0 %1169
        %v1171 = vsel %vm412, %v1032, -inf
        %1172 = vmax.xlane.f32.xlu0 %v1171
        %v1173 = vpop.xlane.xlu0 %1172
        %v1174 = vsel %vm412, %v1037, -inf
        %1175 = vmax.xlane.f32.xlu0 %v1174
        %v1176 = vpop.xlane.xlu0 %1175
        %v1177 = vsel %vm412, %v1042, -inf
        %1178 = vmax.xlane.f32.xlu0 %v1177
        %v1179 = vpop.xlane.xlu0 %1178
        %v1180 = vsel %vm412, %v1047, -inf
        %1181 = vmax.xlane.f32.xlu0 %v1180
        %v1182 = vpop.xlane.xlu0 %1181
        %v1183 = vsel %vm412, %v1129, -inf
        %1184 = vmax.xlane.f32.xlu0 %v1183
        %v1185 = vpop.xlane.xlu0 %1184
        %v1186 = vsel %vm412, %v1134, -inf
        %1187 = vmax.xlane.f32.xlu0 %v1186
        %v1188 = vpop.xlane.xlu0 %1187
        %v1189 = vsel %vm412, %v1139, -inf
        %1190 = vmax.xlane.f32.xlu0 %v1189
        %v1191 = vpop.xlane.xlu0 %1190
        %v1192 = vsel %vm412, %v1144, -inf
        %1193 = vmax.xlane.f32.xlu0 %v1192
        %v1194 = vpop.xlane.xlu0 %1193
        %v1195 = vsub.f32 %v838, %v1149
        %v1196 = vsub.f32 %v843, %v1152
        %v1197 = vsub.f32 %v848, %v1155
        %v1198 = vsub.f32 %v853, %v1158
        %v1199 = vsub.f32 %v935, %v1161
        %v1200 = vsub.f32 %v940, %v1164
        %v1201 = vsub.f32 %v945, %v1167
        %v1202 = vsub.f32 %v950, %v1170
        %v1203 = vsub.f32 %v1032, %v1173
        %v1204 = vsub.f32 %v1037, %v1176
        %v1205 = vsub.f32 %v1042, %v1179
        %v1206 = vsub.f32 %v1047, %v1182
        %v1207 = vsub.f32 %v1129, %v1185
        %v1208 = vsub.f32 %v1134, %v1188
        %v1209 = vsub.f32 %v1139, %v1191
        %v1210 = vsub.f32 %v1144, %v1194
        %v1211 = vmul.f32 %v1195, 1.442695
        %v1212 = vpow.pop %v1211
        %v1213 = vmul.f32 %v1196, 1.442695
        %v1214 = vpow.pop %v1213
        %v1215 = vmul.f32 %v1197, 1.442695
        %v1216 = vpow.pop %v1215
        %v1217 = vmul.f32 %v1198, 1.442695
        %v1218 = vpow.pop %v1217
        %v1219 = vmul.f32 %v1199, 1.442695
        %v1220 = vpow.pop %v1219
        %v1221 = vmul.f32 %v1200, 1.442695
        %v1222 = vpow.pop %v1221
        %v1223 = vmul.f32 %v1201, 1.442695
        %v1224 = vpow.pop %v1223
        %v1225 = vmul.f32 %v1202, 1.442695
        %v1226 = vpow.pop %v1225
        %v1227 = vmul.f32 %v1203, 1.442695
        %v1228 = vpow.pop %v1227
        %v1229 = vmul.f32 %v1204, 1.442695
        %v1230 = vpow.pop %v1229
        %v1231 = vmul.f32 %v1205, 1.442695
        %v1232 = vpow.pop %v1231
        %v1233 = vmul.f32 %v1206, 1.442695
        %v1234 = vpow.pop %v1233
        %v1235 = vmul.f32 %v1207, 1.442695
        %v1236 = vpow.pop %v1235
        %v1237 = vmul.f32 %v1208, 1.442695
        %v1238 = vpow.pop %v1237
        %v1239 = vmul.f32 %v1209, 1.442695
        %v1240 = vpow.pop %v1239
        %v1241 = vmul.f32 %v1210, 1.442695
        %v1242 = vpow.pop %v1241
        %v1243 = vsel %vm412, %v1212, 0.0
        %1244 = vadd.xlane.f32.xlu0 %v1243
        %v1245 = vpop.xlane.xlu0 %1244
        %v1246 = vsel %vm412, %v1214, 0.0
        %1247 = vadd.xlane.f32.xlu0 %v1246
        %v1248 = vpop.xlane.xlu0 %1247
        %v1249 = vsel %vm412, %v1216, 0.0
        %1250 = vadd.xlane.f32.xlu0 %v1249
        %v1251 = vpop.xlane.xlu0 %1250
        %v1252 = vsel %vm412, %v1218, 0.0
        %1253 = vadd.xlane.f32.xlu0 %v1252
        %v1254 = vpop.xlane.xlu0 %1253
        %v1255 = vsel %vm412, %v1220, 0.0
        %1256 = vadd.xlane.f32.xlu0 %v1255
        %v1257 = vpop.xlane.xlu0 %1256
        %v1258 = vsel %vm412, %v1222, 0.0
        %1259 = vadd.xlane.f32.xlu0 %v1258
        %v1260 = vpop.xlane.xlu0 %1259
        %v1261 = vsel %vm412, %v1224, 0.0
        %1262 = vadd.xlane.f32.xlu0 %v1261
        %v1263 = vpop.xlane.xlu0 %1262
        %v1264 = vsel %vm412, %v1226, 0.0
        %1265 = vadd.xlane.f32.xlu0 %v1264
        %v1266 = vpop.xlane.xlu0 %1265
        %v1267 = vsel %vm412, %v1228, 0.0
        %1268 = vadd.xlane.f32.xlu0 %v1267
        %v1269 = vpop.xlane.xlu0 %1268
        %v1270 = vsel %vm412, %v1230, 0.0
        %1271 = vadd.xlane.f32.xlu0 %v1270
        %v1272 = vpop.xlane.xlu0 %1271
        %v1273 = vsel %vm412, %v1232, 0.0
        %1274 = vadd.xlane.f32.xlu0 %v1273
        %v1275 = vpop.xlane.xlu0 %1274
        %v1276 = vsel %vm412, %v1234, 0.0
        %1277 = vadd.xlane.f32.xlu0 %v1276
        %v1278 = vpop.xlane.xlu0 %1277
        %v1279 = vsel %vm412, %v1236, 0.0
        %1280 = vadd.xlane.f32.xlu0 %v1279
        %v1281 = vpop.xlane.xlu0 %1280
        %v1282 = vsel %vm412, %v1238, 0.0
        %1283 = vadd.xlane.f32.xlu0 %v1282
        %v1284 = vpop.xlane.xlu0 %1283
        %v1285 = vsel %vm412, %v1240, 0.0
        %1286 = vadd.xlane.f32.xlu0 %v1285
        %v1287 = vpop.xlane.xlu0 %1286
        %v1288 = vsel %vm412, %v1242, 0.0
        %1289 = vadd.xlane.f32.xlu0 %v1288
        %v1290 = vpop.xlane.xlu0 %1289
        %v1291 = vrcp.pop %v1245
        %v1292 = vrcp.pop %v1248
        %v1293 = vrcp.pop %v1251
        %v1294 = vrcp.pop %v1254
        %v1295 = vrcp.pop %v1257
        %v1296 = vrcp.pop %v1260
        %v1297 = vrcp.pop %v1263
        %v1298 = vrcp.pop %v1266
        %v1299 = vrcp.pop %v1269
        %v1300 = vrcp.pop %v1272
        %v1301 = vrcp.pop %v1275
        %v1302 = vrcp.pop %v1278
        %v1303 = vrcp.pop %v1281
        %v1304 = vrcp.pop %v1284
        %v1305 = vrcp.pop %v1287
        %v1306 = vrcp.pop %v1290
        %v1307 = vmul.f32 %v1212, %v1291
        %v1308 = vmul.f32 %v1214, %v1292
        %v1309 = vmul.f32 %v1216, %v1293
        %v1310 = vmul.f32 %v1218, %v1294
        %v1311 = vmul.f32 %v1220, %v1295
        %v1312 = vmul.f32 %v1222, %v1296
        %v1313 = vmul.f32 %v1224, %v1297
        %v1314 = vmul.f32 %v1226, %v1298
        %v1315 = vmul.f32 %v1228, %v1299
        %v1316 = vmul.f32 %v1230, %v1300
        %v1317 = vmul.f32 %v1232, %v1301
        %v1318 = vmul.f32 %v1234, %v1302
        %v1319 = vmul.f32 %v1236, %v1303
        %v1320 = vmul.f32 %v1238, %v1304
        %v1321 = vmul.f32 %v1240, %v1305
        %v1322 = vmul.f32 %v1242, %v1306
        %s1323 = scalar_lea.vmem [#allocation5], 32
        %v1324 = vld [vmem:[%s1323] sm:$0xff]
        %v1325 = vld [vmem:[%s1323 + $0x8] sm:$0xff]
        %v1326 = vld [vmem:[%s1323 + $0x10] sm:$0xff]
        %v1327 = vld [vmem:[%s1323 + $0x18] sm:$0xff]
        %s1328 = scalar_lea.vmem %s3, 1
        %v1329 = vld [vmem:[%s1328] sm:$0x1]
        %v1331 = vlaneseq
        %v1332 = vshrl.u32 %v1331, 7
        %v1333 = vsub.s32 0, %v1332
        %v1334 = vrot.slane %v1329, %v1333
        %1336 = vmatprep.subr.mxu0 0.0
        %1337 = vmatpush1.msra.mxu0 %v1324
        %1338 = vmatprep.subr.mxu0 0.0
        %1339 = vmatpush1.msra.mxu0 %v1325
        %1340 = vmatprep.subr.mxu0 0.0
        %1341 = vmatpush1.msra.mxu0 %v1326
        %1342 = vmatprep.subr.mxu0 0.0
        %1343 = vmatpush1.msra.mxu0 %v1327
        %1344 = vmatprep.subr.mxu0 0.0
        %1345 = vmatpush1.msra.mxu0 0.0
        %1346 = vmatprep.subr.mxu0 0.0
        %1347 = vmatpush1.msra.mxu0 0.0
        %1348 = vmatprep.subr.mxu0 0.0
        %1349 = vmatpush1.msra.mxu0 0.0
        %1350 = vmatprep.subr.mxu0 0.0
        %1351 = vmatpush1.msra.mxu0 0.0
        %1352 = vmatprep.subr.mxu0 0.0
        %1353 = vmatpush1.msra.mxu0 0.0
        %1354 = vmatprep.subr.mxu0 0.0
        %1355 = vmatpush1.msra.mxu0 0.0
        %1356 = vmatprep.subr.mxu0 0.0
        %1357 = vmatpush1.msra.mxu0 0.0
        %1358 = vmatprep.subr.mxu0 0.0
        %1359 = vmatpush1.msra.mxu0 0.0
        %1360 = vmatprep.subr.mxu0 0.0
        %1361 = vmatpush1.msra.mxu0 0.0
        %1362 = vmatprep.subr.mxu0 0.0
        %1363 = vmatpush1.msra.mxu0 0.0
        %1364 = vmatprep.subr.mxu0 0.0
        %1365 = vmatpush1.msra.mxu0 0.0
        %1366 = vmatprep.subr.mxu0 0.0
        %1367 = vmatpush1.msra.mxu0 0.0
        %1368 = vmatprep.subr.mxu0 0.0
        %1369 = vmatpush1.msra.mxu0 0.0
        %1370 = vmatprep.subr.mxu0 0.0
        %1371 = vmatpush1.msra.mxu0 0.0
        %1372 = vmatprep.subr.mxu0 0.0
        %1373 = vmatpush1.msra.mxu0 0.0
        %1374 = vmatprep.subr.mxu0 0.0
        %1375 = vmatpush1.msra.mxu0 0.0
        %1376 = vmatprep.subr.mxu0 0.0
        %1377 = vmatpush1.msra.mxu0 0.0
        %1378 = vmatprep.subr.mxu0 0.0
        %1379 = vmatpush1.msra.mxu0 0.0
        %1380 = vmatprep.subr.mxu0 0.0
        %1381 = vmatpush1.msra.mxu0 0.0
        %1382 = vmatprep.subr.mxu0 0.0
        %1383 = vmatpush1.msra.mxu0 0.0
        %1384 = vmatprep.subr.mxu0 0.0
        %1385 = vmatpush1.msra.mxu0 0.0
        %1386 = vmatprep.subr.mxu0 0.0
        %1387 = vmatpush1.msra.mxu0 0.0
        %1388 = vmatprep.subr.mxu0 0.0
        %1389 = vmatpush1.msra.mxu0 0.0
        %1390 = vmatprep.subr.mxu0 0.0
        %1391 = vmatpush1.msra.mxu0 0.0
        %1392 = vmatprep.subr.mxu0 0.0
        %1393 = vmatpush1.msra.mxu0 0.0
        %1394 = vmatprep.subr.mxu0 0.0
        %1395 = vmatpush1.msra.mxu0 0.0
        %1396 = vmatprep.subr.mxu0 0.0
        %1397 = vmatpush1.msra.mxu0 0.0
        %1398 = vmatprep.subr.mxu0 0.0
        %1399 = vmatpush1.msra.mxu0 0.0
        %1400 = vmatprep.mubr.f32.mxu0 0.0
        %1401 = vmatmul.mubr.f32.gmra.mrb[0].mxu0 %v414
        %v1402 = vpop.f32.mrb[0].mxu0
        %v1403 = vadd.f32 %v1334, %v1402
        %v1404 = vpop.f32.mrb[0].mxu0
        %1405 = vmatprep.mubr.f32.mxu0 0.0
        %1406 = vmatmul.mubr.f32.gmra.mrb[0].mxu0 %v417
        %v1407 = vpop.f32.mrb[0].mxu0
        %v1408 = vadd.f32 %v1334, %v1407
        %v1409 = vpop.f32.mrb[0].mxu0
        %1410 = vmatprep.mubr.f32.mxu0 0.0
        %1411 = vmatmul.mubr.f32.gmra.mrb[0].mxu0 %v420
        %v1412 = vpop.f32.mrb[0].mxu0
        %v1413 = vadd.f32 %v1334, %v1412
        %v1414 = vpop.f32.mrb[0].mxu0
        %1415 = vmatprep.mubr.f32.mxu0 0.0
        %1416 = vmatmul.mubr.f32.gmra.mrb[0].mxu0 %v423
        %v1417 = vpop.f32.mrb[0].mxu0
        %v1418 = vadd.f32 %v1334, %v1417
        %v1419 = vpop.f32.mrb[0].mxu0
        %1420 = vmatprep.mubr.f32.mxu0 0.0
        %1421 = vmatmul.mubr.f32.gmra.mrb[0].mxu0 %v426
        %v1422 = vpop.f32.mrb[0].mxu0
        %v1423 = vadd.f32 %v1334, %v1422
        %v1424 = vpop.f32.mrb[0].mxu0
        %1425 = vmatprep.mubr.f32.mxu0 0.0
        %1426 = vmatmul.mubr.f32.gmra.mrb[0].mxu0 %v429
        %v1427 = vpop.f32.mrb[0].mxu0
        %v1428 = vadd.f32 %v1334, %v1427
        %v1429 = vpop.f32.mrb[0].mxu0
        %1430 = vmatprep.mubr.f32.mxu0 0.0
        %1431 = vmatmul.mubr.f32.gmra.mrb[0].mxu0 %v432
        %v1432 = vpop.f32.mrb[0].mxu0
        %v1433 = vadd.f32 %v1334, %v1432
        %v1434 = vpop.f32.mrb[0].mxu0
        %1435 = vmatprep.mubr.f32.mxu0 0.0
        %1436 = vmatmul.mubr.f32.gmra.mrb[0].mxu0 %v435
        %v1437 = vpop.f32.mrb[0].mxu0
        %v1438 = vadd.f32 %v1334, %v1437
        %v1439 = vpop.f32.mrb[0].mxu0
        %1440 = vmatprep.mubr.f32.mxu0 0.0
        %1441 = vmatmul.mubr.f32.gmra.mrb[0].mxu0 %v438
        %v1442 = vpop.f32.mrb[0].mxu0
        %v1443 = vadd.f32 %v1334, %v1442
        %v1444 = vpop.f32.mrb[0].mxu0
        %1445 = vmatprep.mubr.f32.mxu0 0.0
        %1446 = vmatmul.mubr.f32.gmra.mrb[0].mxu0 %v441
        %v1447 = vpop.f32.mrb[0].mxu0
        %v1448 = vadd.f32 %v1334, %v1447
        %v1449 = vpop.f32.mrb[0].mxu0
        %1450 = vmatprep.mubr.f32.mxu0 0.0
        %1451 = vmatmul.mubr.f32.gmra.mrb[0].mxu0 %v444
        %v1452 = vpop.f32.mrb[0].mxu0
        %v1453 = vadd.f32 %v1334, %v1452
        %v1454 = vpop.f32.mrb[0].mxu0
        %1455 = vmatprep.mubr.f32.mxu0 0.0
        %1456 = vmatmul.mubr.f32.gmra.mrb[0].mxu0 %v447
        %v1457 = vpop.f32.mrb[0].mxu0
        %v1458 = vadd.f32 %v1334, %v1457
        %v1459 = vpop.f32.mrb[0].mxu0
        %1460 = vmatprep.mubr.f32.mxu0 0.0
        %1461 = vmatmul.mubr.f32.gmra.mrb[0].mxu0 %v450
        %v1462 = vpop.f32.mrb[0].mxu0
        %v1463 = vadd.f32 %v1334, %v1462
        %v1464 = vpop.f32.mrb[0].mxu0
        %1465 = vmatprep.mubr.f32.mxu0 0.0
        %1466 = vmatmul.mubr.f32.gmra.mrb[0].mxu0 %v453
        %v1467 = vpop.f32.mrb[0].mxu0
        %v1468 = vadd.f32 %v1334, %v1467
        %v1469 = vpop.f32.mrb[0].mxu0
        %1470 = vmatprep.mubr.f32.mxu0 0.0
        %1471 = vmatmul.mubr.f32.gmra.mrb[0].mxu0 %v456
        %v1472 = vpop.f32.mrb[0].mxu0
        %v1473 = vadd.f32 %v1334, %v1472
        %v1474 = vpop.f32.mrb[0].mxu0
        %1475 = vmatprep.mubr.f32.mxu0 0.0
        %1476 = vmatmul.mubr.f32.gmra.mrb[0].mxu0 %v459
        %v1477 = vpop.f32.mrb[0].mxu0
        %v1478 = vadd.f32 %v1334, %v1477
        %v1479 = vpop.f32.mrb[0].mxu0
        %1480 = vdwg.mxu0
        %s1481 = scalar_lea.vmem [#allocation7], 32
        %v1482 = vld [vmem:[%s1481] sm:$0xff]
        %v1483 = vld [vmem:[%s1481 + $0x8] sm:$0xff]
        %v1484 = vld [vmem:[%s1481 + $0x10] sm:$0xff]
        %v1485 = vld [vmem:[%s1481 + $0x18] sm:$0xff]
        %1486 = vmatprep.subr.mxu0 0.0
        %1487 = vmatpush1.msra.mxu0 %v1482
        %1488 = vmatprep.subr.mxu0 0.0
        %1489 = vmatpush1.msra.mxu0 %v1483
        %1490 = vmatprep.subr.mxu0 0.0
        %1491 = vmatpush1.msra.mxu0 %v1484
        %1492 = vmatprep.subr.mxu0 0.0
        %1493 = vmatpush1.msra.mxu0 %v1485
        %1494 = vmatprep.subr.mxu0 0.0
        %1495 = vmatpush1.msra.mxu0 0.0
        %1496 = vmatprep.subr.mxu0 0.0
        %1497 = vmatpush1.msra.mxu0 0.0
        %1498 = vmatprep.subr.mxu0 0.0
        %1499 = vmatpush1.msra.mxu0 0.0
        %1500 = vmatprep.subr.mxu0 0.0
        %1501 = vmatpush1.msra.mxu0 0.0
        %1502 = vmatprep.subr.mxu0 0.0
        %1503 = vmatpush1.msra.mxu0 0.0
        %1504 = vmatprep.subr.mxu0 0.0
        %1505 = vmatpush1.msra.mxu0 0.0
        %1506 = vmatprep.subr.mxu0 0.0
        %1507 = vmatpush1.msra.mxu0 0.0
        %1508 = vmatprep.subr.mxu0 0.0
        %1509 = vmatpush1.msra.mxu0 0.0
        %1510 = vmatprep.subr.mxu0 0.0
        %1511 = vmatpush1.msra.mxu0 0.0
        %1512 = vmatprep.subr.mxu0 0.0
        %1513 = vmatpush1.msra.mxu0 0.0
        %1514 = vmatprep.subr.mxu0 0.0
        %1515 = vmatpush1.msra.mxu0 0.0
        %1516 = vmatprep.subr.mxu0 0.0
        %1517 = vmatpush1.msra.mxu0 0.0
        %1518 = vmatprep.subr.mxu0 0.0
        %1519 = vmatpush1.msra.mxu0 0.0
        %1520 = vmatprep.subr.mxu0 0.0
        %1521 = vmatpush1.msra.mxu0 0.0
        %1522 = vmatprep.subr.mxu0 0.0
        %1523 = vmatpush1.msra.mxu0 0.0
        %1524 = vmatprep.subr.mxu0 0.0
        %1525 = vmatpush1.msra.mxu0 0.0
        %1526 = vmatprep.subr.mxu0 0.0
        %1527 = vmatpush1.msra.mxu0 0.0
        %1528 = vmatprep.subr.mxu0 0.0
        %1529 = vmatpush1.msra.mxu0 0.0
        %1530 = vmatprep.subr.mxu0 0.0
        %1531 = vmatpush1.msra.mxu0 0.0
        %1532 = vmatprep.subr.mxu0 0.0
        %1533 = vmatpush1.msra.mxu0 0.0
        %1534 = vmatprep.subr.mxu0 0.0
        %1535 = vmatpush1.msra.mxu0 0.0
        %1536 = vmatprep.subr.mxu0 0.0
        %1537 = vmatpush1.msra.mxu0 0.0
        %1538 = vmatprep.subr.mxu0 0.0
        %1539 = vmatpush1.msra.mxu0 0.0
        %1540 = vmatprep.subr.mxu0 0.0
        %1541 = vmatpush1.msra.mxu0 0.0
        %1542 = vmatprep.subr.mxu0 0.0
        %1543 = vmatpush1.msra.mxu0 0.0
        %1544 = vmatprep.subr.mxu0 0.0
        %1545 = vmatpush1.msra.mxu0 0.0
        %1546 = vmatprep.subr.mxu0 0.0
        %1547 = vmatpush1.msra.mxu0 0.0
        %1548 = vmatprep.subr.mxu0 0.0
        %1549 = vmatpush1.msra.mxu0 0.0
        %1550 = vmatprep.mubr.f32.mxu0 0.0
        %1551 = vmatmul.mubr.f32.gmra.mrb[0].mxu0 %v414
        %v1552 = vpop.f32.mrb[0].mxu0
        %v1553 = vadd.f32 0.0, %v1552
        %v1554 = vpop.f32.mrb[0].mxu0
        %1555 = vmatprep.mubr.f32.mxu0 0.0
        %1556 = vmatmul.mubr.f32.gmra.mrb[0].mxu0 %v417
        %v1557 = vpop.f32.mrb[0].mxu0
        %v1558 = vadd.f32 0.0, %v1557
        %v1559 = vpop.f32.mrb[0].mxu0
        %1560 = vmatprep.mubr.f32.mxu0 0.0
        %1561 = vmatmul.mubr.f32.gmra.mrb[0].mxu0 %v420
        %v1562 = vpop.f32.mrb[0].mxu0
        %v1563 = vadd.f32 0.0, %v1562
        %v1564 = vpop.f32.mrb[0].mxu0
        %1565 = vmatprep.mubr.f32.mxu0 0.0
        %1566 = vmatmul.mubr.f32.gmra.mrb[0].mxu0 %v423
        %v1567 = vpop.f32.mrb[0].mxu0
        %v1568 = vadd.f32 0.0, %v1567
        %v1569 = vpop.f32.mrb[0].mxu0
        %1570 = vmatprep.mubr.f32.mxu0 0.0
        %1571 = vmatmul.mubr.f32.gmra.mrb[0].mxu0 %v426
        %v1572 = vpop.f32.mrb[0].mxu0
        %v1573 = vadd.f32 0.0, %v1572
        %v1574 = vpop.f32.mrb[0].mxu0
        %1575 = vmatprep.mubr.f32.mxu0 0.0
        %1576 = vmatmul.mubr.f32.gmra.mrb[0].mxu0 %v429
        %v1577 = vpop.f32.mrb[0].mxu0
        %v1578 = vadd.f32 0.0, %v1577
        %v1579 = vpop.f32.mrb[0].mxu0
        %1580 = vmatprep.mubr.f32.mxu0 0.0
        %1581 = vmatmul.mubr.f32.gmra.mrb[0].mxu0 %v432
        %v1582 = vpop.f32.mrb[0].mxu0
        %v1583 = vadd.f32 0.0, %v1582
        %v1584 = vpop.f32.mrb[0].mxu0
        %1585 = vmatprep.mubr.f32.mxu0 0.0
        %1586 = vmatmul.mubr.f32.gmra.mrb[0].mxu0 %v435
        %v1587 = vpop.f32.mrb[0].mxu0
        %v1588 = vadd.f32 0.0, %v1587
        %v1589 = vpop.f32.mrb[0].mxu0
        %1590 = vmatprep.mubr.f32.mxu0 0.0
        %1591 = vmatmul.mubr.f32.gmra.mrb[0].mxu0 %v438
        %v1592 = vpop.f32.mrb[0].mxu0
        %v1593 = vadd.f32 0.0, %v1592
        %v1594 = vpop.f32.mrb[0].mxu0
        %1595 = vmatprep.mubr.f32.mxu0 0.0
        %1596 = vmatmul.mubr.f32.gmra.mrb[0].mxu0 %v441
        %v1597 = vpop.f32.mrb[0].mxu0
        %v1598 = vadd.f32 0.0, %v1597
        %v1599 = vpop.f32.mrb[0].mxu0
        %1600 = vmatprep.mubr.f32.mxu0 0.0
        %1601 = vmatmul.mubr.f32.gmra.mrb[0].mxu0 %v444
        %v1602 = vpop.f32.mrb[0].mxu0
        %v1603 = vadd.f32 0.0, %v1602
        %v1604 = vpop.f32.mrb[0].mxu0
        %1605 = vmatprep.mubr.f32.mxu0 0.0
        %1606 = vmatmul.mubr.f32.gmra.mrb[0].mxu0 %v447
        %v1607 = vpop.f32.mrb[0].mxu0
        %v1608 = vadd.f32 0.0, %v1607
        %v1609 = vpop.f32.mrb[0].mxu0
        %1610 = vmatprep.mubr.f32.mxu0 0.0
        %1611 = vmatmul.mubr.f32.gmra.mrb[0].mxu0 %v450
        %v1612 = vpop.f32.mrb[0].mxu0
        %v1613 = vadd.f32 0.0, %v1612
        %v1614 = vpop.f32.mrb[0].mxu0
        %1615 = vmatprep.mubr.f32.mxu0 0.0
        %1616 = vmatmul.mubr.f32.gmra.mrb[0].mxu0 %v453
        %v1617 = vpop.f32.mrb[0].mxu0
        %v1618 = vadd.f32 0.0, %v1617
        %v1619 = vpop.f32.mrb[0].mxu0
        %1620 = vmatprep.mubr.f32.mxu0 0.0
        %1621 = vmatmul.mubr.f32.gmra.mrb[0].mxu0 %v456
        %v1622 = vpop.f32.mrb[0].mxu0
        %v1623 = vadd.f32 0.0, %v1622
        %v1624 = vpop.f32.mrb[0].mxu0
        %1625 = vmatprep.mubr.f32.mxu0 0.0
        %1626 = vmatmul.mubr.f32.gmra.mrb[0].mxu0 %v459
        %v1627 = vpop.f32.mrb[0].mxu0
        %v1628 = vadd.f32 0.0, %v1627
        %v1629 = vpop.f32.mrb[0].mxu0
        %1630 = vdwg.mxu0
        %s1631 = scalar_lea.vmem %s349, 32 [#allocation8]
        %v1632 = vld [vmem:[%s1631] sm:$0xff]
        %v1633 = vld [vmem:[%s1631 + $0x8] sm:$0xff]
        %v1634 = vld [vmem:[%s1631 + $0x10] sm:$0xff]
        %v1635 = vld [vmem:[%s1631 + $0x18] sm:$0xff]
        %v1637 = vsel %vm412, %v1403, 0
        %v1640 = vsel %vm412, %v1408, 0
        %v1643 = vsel %vm412, %v1413, 0
        %v1646 = vsel %vm412, %v1418, 0
        %1648 = vmatprep.subr.mxu0 0.0
        %1649 = vmatpush1.xpose.msra.mxu0 %v414
        %1650 = vmatprep.subr.mxu0 0.0
        %1651 = vmatpush1.xpose.msra.mxu0 %v417
        %1652 = vmatprep.subr.mxu0 0.0
        %1653 = vmatpush1.xpose.msra.mxu0 %v420
        %1654 = vmatprep.subr.mxu0 0.0
        %1655 = vmatpush1.xpose.msra.mxu0 %v423
        %1656 = vmatprep.subr.mxu0 0.0
        %1657 = vmatpush1.xpose.msra.mxu0 0.0
        %1658 = vmatprep.subr.mxu0 0.0
        %1659 = vmatpush1.xpose.msra.mxu0 0.0
        %1660 = vmatprep.subr.mxu0 0.0
        %1661 = vmatpush1.xpose.msra.mxu0 0.0
        %1662 = vmatprep.subr.mxu0 0.0
        %1663 = vmatpush1.xpose.msra.mxu0 0.0
        %1664 = vmatprep.subr.mxu0 0.0
        %1665 = vmatpush1.xpose.msra.mxu0 0.0
        %1666 = vmatprep.subr.mxu0 0.0
        %1667 = vmatpush1.xpose.msra.mxu0 0.0
        %1668 = vmatprep.subr.mxu0 0.0
        %1669 = vmatpush1.xpose.msra.mxu0 0.0
        %1670 = vmatprep.subr.mxu0 0.0
        %1671 = vmatpush1.xpose.msra.mxu0 0.0
        %1672 = vmatprep.subr.mxu0 0.0
        %1673 = vmatpush1.xpose.msra.mxu0 0.0
        %1674 = vmatprep.subr.mxu0 0.0
        %1675 = vmatpush1.xpose.msra.mxu0 0.0
        %1676 = vmatprep.subr.mxu0 0.0
        %1677 = vmatpush1.xpose.msra.mxu0 0.0
        %1678 = vmatprep.subr.mxu0 0.0
        %1679 = vmatpush1.xpose.msra.mxu0 0.0
        %1680 = vmatprep.subr.mxu0 0.0
        %1681 = vmatpush1.xpose.msra.mxu0 0.0
        %1682 = vmatprep.subr.mxu0 0.0
        %1683 = vmatpush1.xpose.msra.mxu0 0.0
        %1684 = vmatprep.subr.mxu0 0.0
        %1685 = vmatpush1.xpose.msra.mxu0 0.0
        %1686 = vmatprep.subr.mxu0 0.0
        %1687 = vmatpush1.xpose.msra.mxu0 0.0
        %1688 = vmatprep.subr.mxu0 0.0
        %1689 = vmatpush1.xpose.msra.mxu0 0.0
        %1690 = vmatprep.subr.mxu0 0.0
        %1691 = vmatpush1.xpose.msra.mxu0 0.0
        %1692 = vmatprep.subr.mxu0 0.0
        %1693 = vmatpush1.xpose.msra.mxu0 0.0
        %1694 = vmatprep.subr.mxu0 0.0
        %1695 = vmatpush1.xpose.msra.mxu0 0.0
        %1696 = vmatprep.subr.mxu0 0.0
        %1697 = vmatpush1.xpose.msra.mxu0 0.0
        %1698 = vmatprep.subr.mxu0 0.0
        %1699 = vmatpush1.xpose.msra.mxu0 0.0
        %1700 = vmatprep.subr.mxu0 0.0
        %1701 = vmatpush1.xpose.msra.mxu0 0.0
        %1702 = vmatprep.subr.mxu0 0.0
        %1703 = vmatpush1.xpose.msra.mxu0 0.0
        %1704 = vmatprep.subr.mxu0 0.0
        %1705 = vmatpush1.xpose.msra.mxu0 0.0
        %1706 = vmatprep.subr.mxu0 0.0
        %1707 = vmatpush1.xpose.msra.mxu0 0.0
        %1708 = vmatprep.subr.mxu0 0.0
        %1709 = vmatpush1.xpose.msra.mxu0 0.0
        %1710 = vmatprep.subr.mxu0 0.0
        %1711 = vmatpush1.xpose.msra.mxu0 0.0
        %1712 = vmatprep.mubr.f32.mxu0 0.0
        %1713 = vmatmul.mubr.f32.gmra.mrb[0].mxu0 %v1637
        %v1714 = vpop.f32.mrb[0].mxu0
        %v1715 = vadd.f32 %v1632, %v1714
        %v1716 = vpop.f32.mrb[0].mxu0
        %1717 = vmatprep.mubr.f32.mxu0 0.0
        %1718 = vmatmul.mubr.f32.gmra.mrb[0].mxu0 %v1640
        %v1719 = vpop.f32.mrb[0].mxu0
        %v1720 = vadd.f32 %v1633, %v1719
        %v1721 = vpop.f32.mrb[0].mxu0
        %1722 = vmatprep.mubr.f32.mxu0 0.0
        %1723 = vmatmul.mubr.f32.gmra.mrb[0].mxu0 %v1643
        %v1724 = vpop.f32.mrb[0].mxu0
        %v1725 = vadd.f32 %v1634, %v1724
        %v1726 = vpop.f32.mrb[0].mxu0
        %1727 = vmatprep.mubr.f32.mxu0 0.0
        %1728 = vmatmul.mubr.f32.gmra.mrb[0].mxu0 %v1646
        %v1729 = vpop.f32.mrb[0].mxu0
        %v1730 = vadd.f32 %v1635, %v1729
        %v1731 = vpop.f32.mrb[0].mxu0
        %1732 = vdwg.mxu0
        %v1734 = vsel %vm412, %v1423, 0
        %v1737 = vsel %vm412, %v1428, 0
        %v1740 = vsel %vm412, %v1433, 0
        %v1743 = vsel %vm412, %v1438, 0
        %1745 = vmatprep.subr.mxu0 0.0
        %1746 = vmatpush1.xpose.msra.mxu0 %v426
        %1747 = vmatprep.subr.mxu0 0.0
        %1748 = vmatpush1.xpose.msra.mxu0 %v429
        %1749 = vmatprep.subr.mxu0 0.0
        %1750 = vmatpush1.xpose.msra.mxu0 %v432
        %1751 = vmatprep.subr.mxu0 0.0
        %1752 = vmatpush1.xpose.msra.mxu0 %v435
        %1753 = vmatprep.subr.mxu0 0.0
        %1754 = vmatpush1.xpose.msra.mxu0 0.0
        %1755 = vmatprep.subr.mxu0 0.0
        %1756 = vmatpush1.xpose.msra.mxu0 0.0
        %1757 = vmatprep.subr.mxu0 0.0
        %1758 = vmatpush1.xpose.msra.mxu0 0.0
        %1759 = vmatprep.subr.mxu0 0.0
        %1760 = vmatpush1.xpose.msra.mxu0 0.0
        %1761 = vmatprep.subr.mxu0 0.0
        %1762 = vmatpush1.xpose.msra.mxu0 0.0
        %1763 = vmatprep.subr.mxu0 0.0
        %1764 = vmatpush1.xpose.msra.mxu0 0.0
        %1765 = vmatprep.subr.mxu0 0.0
        %1766 = vmatpush1.xpose.msra.mxu0 0.0
        %1767 = vmatprep.subr.mxu0 0.0
        %1768 = vmatpush1.xpose.msra.mxu0 0.0
        %1769 = vmatprep.subr.mxu0 0.0
        %1770 = vmatpush1.xpose.msra.mxu0 0.0
        %1771 = vmatprep.subr.mxu0 0.0
        %1772 = vmatpush1.xpose.msra.mxu0 0.0
        %1773 = vmatprep.subr.mxu0 0.0
        %1774 = vmatpush1.xpose.msra.mxu0 0.0
        %1775 = vmatprep.subr.mxu0 0.0
        %1776 = vmatpush1.xpose.msra.mxu0 0.0
        %1777 = vmatprep.subr.mxu0 0.0
        %1778 = vmatpush1.xpose.msra.mxu0 0.0
        %1779 = vmatprep.subr.mxu0 0.0
        %1780 = vmatpush1.xpose.msra.mxu0 0.0
        %1781 = vmatprep.subr.mxu0 0.0
        %1782 = vmatpush1.xpose.msra.mxu0 0.0
        %1783 = vmatprep.subr.mxu0 0.0
        %1784 = vmatpush1.xpose.msra.mxu0 0.0
        %1785 = vmatprep.subr.mxu0 0.0
        %1786 = vmatpush1.xpose.msra.mxu0 0.0
        %1787 = vmatprep.subr.mxu0 0.0
        %1788 = vmatpush1.xpose.msra.mxu0 0.0
        %1789 = vmatprep.subr.mxu0 0.0
        %1790 = vmatpush1.xpose.msra.mxu0 0.0
        %1791 = vmatprep.subr.mxu0 0.0
        %1792 = vmatpush1.xpose.msra.mxu0 0.0
        %1793 = vmatprep.subr.mxu0 0.0
        %1794 = vmatpush1.xpose.msra.mxu0 0.0
        %1795 = vmatprep.subr.mxu0 0.0
        %1796 = vmatpush1.xpose.msra.mxu0 0.0
        %1797 = vmatprep.subr.mxu0 0.0
        %1798 = vmatpush1.xpose.msra.mxu0 0.0
        %1799 = vmatprep.subr.mxu0 0.0
        %1800 = vmatpush1.xpose.msra.mxu0 0.0
        %1801 = vmatprep.subr.mxu0 0.0
        %1802 = vmatpush1.xpose.msra.mxu0 0.0
        %1803 = vmatprep.subr.mxu0 0.0
        %1804 = vmatpush1.xpose.msra.mxu0 0.0
        %1805 = vmatprep.subr.mxu0 0.0
        %1806 = vmatpush1.xpose.msra.mxu0 0.0
        %1807 = vmatprep.subr.mxu0 0.0
        %1808 = vmatpush1.xpose.msra.mxu0 0.0
        %1809 = vmatprep.mubr.f32.mxu0 0.0
        %1810 = vmatmul.mubr.f32.gmra.mrb[0].mxu0 %v1734
        %v1811 = vpop.f32.mrb[0].mxu0
        %v1812 = vadd.f32 %v1632, %v1811
        %v1813 = vpop.f32.mrb[0].mxu0
        %1814 = vmatprep.mubr.f32.mxu0 0.0
        %1815 = vmatmul.mubr.f32.gmra.mrb[0].mxu0 %v1737
        %v1816 = vpop.f32.mrb[0].mxu0
        %v1817 = vadd.f32 %v1633, %v1816
        %v1818 = vpop.f32.mrb[0].mxu0
        %1819 = vmatprep.mubr.f32.mxu0 0.0
        %1820 = vmatmul.mubr.f32.gmra.mrb[0].mxu0 %v1740
        %v1821 = vpop.f32.mrb[0].mxu0
        %v1822 = vadd.f32 %v1634, %v1821
        %v1823 = vpop.f32.mrb[0].mxu0
        %1824 = vmatprep.mubr.f32.mxu0 0.0
        %1825 = vmatmul.mubr.f32.gmra.mrb[0].mxu0 %v1743
        %v1826 = vpop.f32.mrb[0].mxu0
        %v1827 = vadd.f32 %v1635, %v1826
        %v1828 = vpop.f32.mrb[0].mxu0
        %1829 = vdwg.mxu0
        %v1831 = vsel %vm412, %v1443, 0
        %v1834 = vsel %vm412, %v1448, 0
        %v1837 = vsel %vm412, %v1453, 0
        %v1840 = vsel %vm412, %v1458, 0
        %1842 = vmatprep.subr.mxu0 0.0
        %1843 = vmatpush1.xpose.msra.mxu0 %v438
        %1844 = vmatprep.subr.mxu0 0.0
        %1845 = vmatpush1.xpose.msra.mxu0 %v441
        %1846 = vmatprep.subr.mxu0 0.0
        %1847 = vmatpush1.xpose.msra.mxu0 %v444
        %1848 = vmatprep.subr.mxu0 0.0
        %1849 = vmatpush1.xpose.msra.mxu0 %v447
        %1850 = vmatprep.subr.mxu0 0.0
        %1851 = vmatpush1.xpose.msra.mxu0 0.0
        %1852 = vmatprep.subr.mxu0 0.0
        %1853 = vmatpush1.xpose.msra.mxu0 0.0
        %1854 = vmatprep.subr.mxu0 0.0
        %1855 = vmatpush1.xpose.msra.mxu0 0.0
        %1856 = vmatprep.subr.mxu0 0.0
        %1857 = vmatpush1.xpose.msra.mxu0 0.0
        %1858 = vmatprep.subr.mxu0 0.0
        %1859 = vmatpush1.xpose.msra.mxu0 0.0
        %1860 = vmatprep.subr.mxu0 0.0
        %1861 = vmatpush1.xpose.msra.mxu0 0.0
        %1862 = vmatprep.subr.mxu0 0.0
        %1863 = vmatpush1.xpose.msra.mxu0 0.0
        %1864 = vmatprep.subr.mxu0 0.0
        %1865 = vmatpush1.xpose.msra.mxu0 0.0
        %1866 = vmatprep.subr.mxu0 0.0
        %1867 = vmatpush1.xpose.msra.mxu0 0.0
        %1868 = vmatprep.subr.mxu0 0.0
        %1869 = vmatpush1.xpose.msra.mxu0 0.0
        %1870 = vmatprep.subr.mxu0 0.0
        %1871 = vmatpush1.xpose.msra.mxu0 0.0
        %1872 = vmatprep.subr.mxu0 0.0
        %1873 = vmatpush1.xpose.msra.mxu0 0.0
        %1874 = vmatprep.subr.mxu0 0.0
        %1875 = vmatpush1.xpose.msra.mxu0 0.0
        %1876 = vmatprep.subr.mxu0 0.0
        %1877 = vmatpush1.xpose.msra.mxu0 0.0
        %1878 = vmatprep.subr.mxu0 0.0
        %1879 = vmatpush1.xpose.msra.mxu0 0.0
        %1880 = vmatprep.subr.mxu0 0.0
        %1881 = vmatpush1.xpose.msra.mxu0 0.0
        %1882 = vmatprep.subr.mxu0 0.0
        %1883 = vmatpush1.xpose.msra.mxu0 0.0
        %1884 = vmatprep.subr.mxu0 0.0
        %1885 = vmatpush1.xpose.msra.mxu0 0.0
        %1886 = vmatprep.subr.mxu0 0.0
        %1887 = vmatpush1.xpose.msra.mxu0 0.0
        %1888 = vmatprep.subr.mxu0 0.0
        %1889 = vmatpush1.xpose.msra.mxu0 0.0
        %1890 = vmatprep.subr.mxu0 0.0
        %1891 = vmatpush1.xpose.msra.mxu0 0.0
        %1892 = vmatprep.subr.mxu0 0.0
        %1893 = vmatpush1.xpose.msra.mxu0 0.0
        %1894 = vmatprep.subr.mxu0 0.0
        %1895 = vmatpush1.xpose.msra.mxu0 0.0
        %1896 = vmatprep.subr.mxu0 0.0
        %1897 = vmatpush1.xpose.msra.mxu0 0.0
        %1898 = vmatprep.subr.mxu0 0.0
        %1899 = vmatpush1.xpose.msra.mxu0 0.0
        %1900 = vmatprep.subr.mxu0 0.0
        %1901 = vmatpush1.xpose.msra.mxu0 0.0
        %1902 = vmatprep.subr.mxu0 0.0
        %1903 = vmatpush1.xpose.msra.mxu0 0.0
        %1904 = vmatprep.subr.mxu0 0.0
        %1905 = vmatpush1.xpose.msra.mxu0 0.0
        %1906 = vmatprep.mubr.f32.mxu0 0.0
        %1907 = vmatmul.mubr.f32.gmra.mrb[0].mxu0 %v1831
        %v1908 = vpop.f32.mrb[0].mxu0
        %v1909 = vadd.f32 %v1632, %v1908
        %v1910 = vpop.f32.mrb[0].mxu0
        %1911 = vmatprep.mubr.f32.mxu0 0.0
        %1912 = vmatmul.mubr.f32.gmra.mrb[0].mxu0 %v1834
        %v1913 = vpop.f32.mrb[0].mxu0
        %v1914 = vadd.f32 %v1633, %v1913
        %v1915 = vpop.f32.mrb[0].mxu0
        %1916 = vmatprep.mubr.f32.mxu0 0.0
        %1917 = vmatmul.mubr.f32.gmra.mrb[0].mxu0 %v1837
        %v1918 = vpop.f32.mrb[0].mxu0
        %v1919 = vadd.f32 %v1634, %v1918
        %v1920 = vpop.f32.mrb[0].mxu0
        %1921 = vmatprep.mubr.f32.mxu0 0.0
        %1922 = vmatmul.mubr.f32.gmra.mrb[0].mxu0 %v1840
        %v1923 = vpop.f32.mrb[0].mxu0
        %v1924 = vadd.f32 %v1635, %v1923
        %v1925 = vpop.f32.mrb[0].mxu0
        %1926 = vdwg.mxu0
        %v1928 = vsel %vm412, %v1463, 0
        %v1931 = vsel %vm412, %v1468, 0
        %v1934 = vsel %vm412, %v1473, 0
        %v1937 = vsel %vm412, %v1478, 0
        %1939 = vmatprep.subr.mxu0 0.0
        %1940 = vmatpush1.xpose.msra.mxu0 %v450
        %1941 = vmatprep.subr.mxu0 0.0
        %1942 = vmatpush1.xpose.msra.mxu0 %v453
        %1943 = vmatprep.subr.mxu0 0.0
        %1944 = vmatpush1.xpose.msra.mxu0 %v456
        %1945 = vmatprep.subr.mxu0 0.0
        %1946 = vmatpush1.xpose.msra.mxu0 %v459
        %1947 = vmatprep.subr.mxu0 0.0
        %1948 = vmatpush1.xpose.msra.mxu0 0.0
        %1949 = vmatprep.subr.mxu0 0.0
        %1950 = vmatpush1.xpose.msra.mxu0 0.0
        %1951 = vmatprep.subr.mxu0 0.0
        %1952 = vmatpush1.xpose.msra.mxu0 0.0
        %1953 = vmatprep.subr.mxu0 0.0
        %1954 = vmatpush1.xpose.msra.mxu0 0.0
        %1955 = vmatprep.subr.mxu0 0.0
        %1956 = vmatpush1.xpose.msra.mxu0 0.0
        %1957 = vmatprep.subr.mxu0 0.0
        %1958 = vmatpush1.xpose.msra.mxu0 0.0
        %1959 = vmatprep.subr.mxu0 0.0
        %1960 = vmatpush1.xpose.msra.mxu0 0.0
        %1961 = vmatprep.subr.mxu0 0.0
        %1962 = vmatpush1.xpose.msra.mxu0 0.0
        %1963 = vmatprep.subr.mxu0 0.0
        %1964 = vmatpush1.xpose.msra.mxu0 0.0
        %1965 = vmatprep.subr.mxu0 0.0
        %1966 = vmatpush1.xpose.msra.mxu0 0.0
        %1967 = vmatprep.subr.mxu0 0.0
        %1968 = vmatpush1.xpose.msra.mxu0 0.0
        %1969 = vmatprep.subr.mxu0 0.0
        %1970 = vmatpush1.xpose.msra.mxu0 0.0
        %1971 = vmatprep.subr.mxu0 0.0
        %1972 = vmatpush1.xpose.msra.mxu0 0.0
        %1973 = vmatprep.subr.mxu0 0.0
        %1974 = vmatpush1.xpose.msra.mxu0 0.0
        %1975 = vmatprep.subr.mxu0 0.0
        %1976 = vmatpush1.xpose.msra.mxu0 0.0
        %1977 = vmatprep.subr.mxu0 0.0
        %1978 = vmatpush1.xpose.msra.mxu0 0.0
        %1979 = vmatprep.subr.mxu0 0.0
        %1980 = vmatpush1.xpose.msra.mxu0 0.0
        %1981 = vmatprep.subr.mxu0 0.0
        %1982 = vmatpush1.xpose.msra.mxu0 0.0
        %1983 = vmatprep.subr.mxu0 0.0
        %1984 = vmatpush1.xpose.msra.mxu0 0.0
        %1985 = vmatprep.subr.mxu0 0.0
        %1986 = vmatpush1.xpose.msra.mxu0 0.0
        %1987 = vmatprep.subr.mxu0 0.0
        %1988 = vmatpush1.xpose.msra.mxu0 0.0
        %1989 = vmatprep.subr.mxu0 0.0
        %1990 = vmatpush1.xpose.msra.mxu0 0.0
        %1991 = vmatprep.subr.mxu0 0.0
        %1992 = vmatpush1.xpose.msra.mxu0 0.0
        %1993 = vmatprep.subr.mxu0 0.0
        %1994 = vmatpush1.xpose.msra.mxu0 0.0
        %1995 = vmatprep.subr.mxu0 0.0
        %1996 = vmatpush1.xpose.msra.mxu0 0.0
        %1997 = vmatprep.subr.mxu0 0.0
        %1998 = vmatpush1.xpose.msra.mxu0 0.0
        %1999 = vmatprep.subr.mxu0 0.0
        %2000 = vmatpush1.xpose.msra.mxu0 0.0
        %2001 = vmatprep.subr.mxu0 0.0
        %2002 = vmatpush1.xpose.msra.mxu0 0.0
        %2003 = vmatprep.mubr.f32.mxu0 0.0
        %2004 = vmatmul.mubr.f32.gmra.mrb[0].mxu0 %v1928
        %v2005 = vpop.f32.mrb[0].mxu0
        %v2006 = vadd.f32 %v1632, %v2005
        %v2007 = vpop.f32.mrb[0].mxu0
        %2008 = vmatprep.mubr.f32.mxu0 0.0
        %2009 = vmatmul.mubr.f32.gmra.mrb[0].mxu0 %v1931
        %v2010 = vpop.f32.mrb[0].mxu0
        %v2011 = vadd.f32 %v1633, %v2010
        %v2012 = vpop.f32.mrb[0].mxu0
        %2013 = vmatprep.mubr.f32.mxu0 0.0
        %2014 = vmatmul.mubr.f32.gmra.mrb[0].mxu0 %v1934
        %v2015 = vpop.f32.mrb[0].mxu0
        %v2016 = vadd.f32 %v1634, %v2015
        %v2017 = vpop.f32.mrb[0].mxu0
        %2018 = vmatprep.mubr.f32.mxu0 0.0
        %2019 = vmatmul.mubr.f32.gmra.mrb[0].mxu0 %v1937
        %v2020 = vpop.f32.mrb[0].mxu0
        %v2021 = vadd.f32 %v1635, %v2020
        %v2022 = vpop.f32.mrb[0].mxu0
        %2023 = vdwg.mxu0
        %v2024 = vsel %vm412, %v1715, -inf
        %2025 = vmax.xlane.f32.xlu0 %v2024
        %v2026 = vpop.xlane.xlu0 %2025
        %v2027 = vsel %vm412, %v1720, -inf
        %2028 = vmax.xlane.f32.xlu0 %v2027
        %v2029 = vpop.xlane.xlu0 %2028
        %v2030 = vsel %vm412, %v1725, -inf
        %2031 = vmax.xlane.f32.xlu0 %v2030
        %v2032 = vpop.xlane.xlu0 %2031
        %v2033 = vsel %vm412, %v1730, -inf
        %2034 = vmax.xlane.f32.xlu0 %v2033
        %v2035 = vpop.xlane.xlu0 %2034
        %v2036 = vsel %vm412, %v1812, -inf
        %2037 = vmax.xlane.f32.xlu0 %v2036
        %v2038 = vpop.xlane.xlu0 %2037
        %v2039 = vsel %vm412, %v1817, -inf
        %2040 = vmax.xlane.f32.xlu0 %v2039
        %v2041 = vpop.xlane.xlu0 %2040
        %v2042 = vsel %vm412, %v1822, -inf
        %2043 = vmax.xlane.f32.xlu0 %v2042
        %v2044 = vpop.xlane.xlu0 %2043
        %v2045 = vsel %vm412, %v1827, -inf
        %2046 = vmax.xlane.f32.xlu0 %v2045
        %v2047 = vpop.xlane.xlu0 %2046
        %v2048 = vsel %vm412, %v1909, -inf
        %2049 = vmax.xlane.f32.xlu0 %v2048
        %v2050 = vpop.xlane.xlu0 %2049
        %v2051 = vsel %vm412, %v1914, -inf
        %2052 = vmax.xlane.f32.xlu0 %v2051
        %v2053 = vpop.xlane.xlu0 %2052
        %v2054 = vsel %vm412, %v1919, -inf
        %2055 = vmax.xlane.f32.xlu0 %v2054
        %v2056 = vpop.xlane.xlu0 %2055
        %v2057 = vsel %vm412, %v1924, -inf
        %2058 = vmax.xlane.f32.xlu0 %v2057
        %v2059 = vpop.xlane.xlu0 %2058
        %v2060 = vsel %vm412, %v2006, -inf
        %2061 = vmax.xlane.f32.xlu0 %v2060
        %v2062 = vpop.xlane.xlu0 %2061
        %v2063 = vsel %vm412, %v2011, -inf
        %2064 = vmax.xlane.f32.xlu0 %v2063
        %v2065 = vpop.xlane.xlu0 %2064
        %v2066 = vsel %vm412, %v2016, -inf
        %2067 = vmax.xlane.f32.xlu0 %v2066
        %v2068 = vpop.xlane.xlu0 %2067
        %v2069 = vsel %vm412, %v2021, -inf
        %2070 = vmax.xlane.f32.xlu0 %v2069
        %v2071 = vpop.xlane.xlu0 %2070
        %v2072 = vsub.f32 %v1715, %v2026
        %v2073 = vsub.f32 %v1720, %v2029
        %v2074 = vsub.f32 %v1725, %v2032
        %v2075 = vsub.f32 %v1730, %v2035
        %v2076 = vsub.f32 %v1812, %v2038
        %v2077 = vsub.f32 %v1817, %v2041
        %v2078 = vsub.f32 %v1822, %v2044
        %v2079 = vsub.f32 %v1827, %v2047
        %v2080 = vsub.f32 %v1909, %v2050
        %v2081 = vsub.f32 %v1914, %v2053
        %v2082 = vsub.f32 %v1919, %v2056
        %v2083 = vsub.f32 %v1924, %v2059
        %v2084 = vsub.f32 %v2006, %v2062
        %v2085 = vsub.f32 %v2011, %v2065
        %v2086 = vsub.f32 %v2016, %v2068
        %v2087 = vsub.f32 %v2021, %v2071
        %v2088 = vmul.f32 %v2072, 1.442695
        %v2089 = vpow.pop %v2088
        %v2090 = vmul.f32 %v2073, 1.442695
        %v2091 = vpow.pop %v2090
        %v2092 = vmul.f32 %v2074, 1.442695
        %v2093 = vpow.pop %v2092
        %v2094 = vmul.f32 %v2075, 1.442695
        %v2095 = vpow.pop %v2094
        %v2096 = vmul.f32 %v2076, 1.442695
        %v2097 = vpow.pop %v2096
        %v2098 = vmul.f32 %v2077, 1.442695
        %v2099 = vpow.pop %v2098
        %v2100 = vmul.f32 %v2078, 1.442695
        %v2101 = vpow.pop %v2100
        %v2102 = vmul.f32 %v2079, 1.442695
        %v2103 = vpow.pop %v2102
        %v2104 = vmul.f32 %v2080, 1.442695
        %v2105 = vpow.pop %v2104
        %v2106 = vmul.f32 %v2081, 1.442695
        %v2107 = vpow.pop %v2106
        %v2108 = vmul.f32 %v2082, 1.442695
        %v2109 = vpow.pop %v2108
        %v2110 = vmul.f32 %v2083, 1.442695
        %v2111 = vpow.pop %v2110
        %v2112 = vmul.f32 %v2084, 1.442695
        %v2113 = vpow.pop %v2112
        %v2114 = vmul.f32 %v2085, 1.442695
        %v2115 = vpow.pop %v2114
        %v2116 = vmul.f32 %v2086, 1.442695
        %v2117 = vpow.pop %v2116
        %v2118 = vmul.f32 %v2087, 1.442695
        %v2119 = vpow.pop %v2118
        %v2120 = vsel %vm412, %v2089, 0.0
        %2121 = vadd.xlane.f32.xlu0 %v2120
        %v2122 = vpop.xlane.xlu0 %2121
        %v2123 = vsel %vm412, %v2091, 0.0
        %2124 = vadd.xlane.f32.xlu0 %v2123
        %v2125 = vpop.xlane.xlu0 %2124
        %v2126 = vsel %vm412, %v2093, 0.0
        %2127 = vadd.xlane.f32.xlu0 %v2126
        %v2128 = vpop.xlane.xlu0 %2127
        %v2129 = vsel %vm412, %v2095, 0.0
        %2130 = vadd.xlane.f32.xlu0 %v2129
        %v2131 = vpop.xlane.xlu0 %2130
        %v2132 = vsel %vm412, %v2097, 0.0
        %2133 = vadd.xlane.f32.xlu0 %v2132
        %v2134 = vpop.xlane.xlu0 %2133
        %v2135 = vsel %vm412, %v2099, 0.0
        %2136 = vadd.xlane.f32.xlu0 %v2135
        %v2137 = vpop.xlane.xlu0 %2136
        %v2138 = vsel %vm412, %v2101, 0.0
        %2139 = vadd.xlane.f32.xlu0 %v2138
        %v2140 = vpop.xlane.xlu0 %2139
        %v2141 = vsel %vm412, %v2103, 0.0
        %2142 = vadd.xlane.f32.xlu0 %v2141
        %v2143 = vpop.xlane.xlu0 %2142
        %v2144 = vsel %vm412, %v2105, 0.0
        %2145 = vadd.xlane.f32.xlu0 %v2144
        %v2146 = vpop.xlane.xlu0 %2145
        %v2147 = vsel %vm412, %v2107, 0.0
        %2148 = vadd.xlane.f32.xlu0 %v2147
        %v2149 = vpop.xlane.xlu0 %2148
        %v2150 = vsel %vm412, %v2109, 0.0
        %2151 = vadd.xlane.f32.xlu0 %v2150
        %v2152 = vpop.xlane.xlu0 %2151
        %v2153 = vsel %vm412, %v2111, 0.0
        %2154 = vadd.xlane.f32.xlu0 %v2153
        %v2155 = vpop.xlane.xlu0 %2154
        %v2156 = vsel %vm412, %v2113, 0.0
        %2157 = vadd.xlane.f32.xlu0 %v2156
        %v2158 = vpop.xlane.xlu0 %2157
        %v2159 = vsel %vm412, %v2115, 0.0
        %2160 = vadd.xlane.f32.xlu0 %v2159
        %v2161 = vpop.xlane.xlu0 %2160
        %v2162 = vsel %vm412, %v2117, 0.0
        %2163 = vadd.xlane.f32.xlu0 %v2162
        %v2164 = vpop.xlane.xlu0 %2163
        %v2165 = vsel %vm412, %v2119, 0.0
        %2166 = vadd.xlane.f32.xlu0 %v2165
        %v2167 = vpop.xlane.xlu0 %2166
        %v2168 = vrcp.pop %v2122
        %v2169 = vrcp.pop %v2125
        %v2170 = vrcp.pop %v2128
        %v2171 = vrcp.pop %v2131
        %v2172 = vrcp.pop %v2134
        %v2173 = vrcp.pop %v2137
        %v2174 = vrcp.pop %v2140
        %v2175 = vrcp.pop %v2143
        %v2176 = vrcp.pop %v2146
        %v2177 = vrcp.pop %v2149
        %v2178 = vrcp.pop %v2152
        %v2179 = vrcp.pop %v2155
        %v2180 = vrcp.pop %v2158
        %v2181 = vrcp.pop %v2161
        %v2182 = vrcp.pop %v2164
        %v2183 = vrcp.pop %v2167
        %v2184 = vmul.f32 %v2089, %v2168
        %v2185 = vmul.f32 %v2091, %v2169
        %v2186 = vmul.f32 %v2093, %v2170
        %v2187 = vmul.f32 %v2095, %v2171
        %v2188 = vmul.f32 %v2097, %v2172
        %v2189 = vmul.f32 %v2099, %v2173
        %v2190 = vmul.f32 %v2101, %v2174
        %v2191 = vmul.f32 %v2103, %v2175
        %v2192 = vmul.f32 %v2105, %v2176
        %v2193 = vmul.f32 %v2107, %v2177
        %v2194 = vmul.f32 %v2109, %v2178
        %v2195 = vmul.f32 %v2111, %v2179
        %v2196 = vmul.f32 %v2113, %v2180
        %v2197 = vmul.f32 %v2115, %v2181
        %v2198 = vmul.f32 %v2117, %v2182
        %v2199 = vmul.f32 %v2119, %v2183
        %v2201 = vsel %vm412, %v2184, 0
        %v2204 = vsel %vm412, %v2185, 0
        %v2207 = vsel %vm412, %v2186, 0
        %v2210 = vsel %vm412, %v2187, 0
        %2212 = vmatprep.subr.mxu0 0.0
        %2213 = vmatpush1.msra.mxu0 %v1553
        %2214 = vmatprep.subr.mxu0 0.0
        %2215 = vmatpush1.msra.mxu0 %v1558
        %2216 = vmatprep.subr.mxu0 0.0
        %2217 = vmatpush1.msra.mxu0 %v1563
        %2218 = vmatprep.subr.mxu0 0.0
        %2219 = vmatpush1.msra.mxu0 %v1568
        %2220 = vmatprep.subr.mxu0 0.0
        %2221 = vmatpush1.msra.mxu0 0.0
        %2222 = vmatprep.subr.mxu0 0.0
        %2223 = vmatpush1.msra.mxu0 0.0
        %2224 = vmatprep.subr.mxu0 0.0
        %2225 = vmatpush1.msra.mxu0 0.0
        %2226 = vmatprep.subr.mxu0 0.0
        %2227 = vmatpush1.msra.mxu0 0.0
        %2228 = vmatprep.subr.mxu0 0.0
        %2229 = vmatpush1.msra.mxu0 0.0
        %2230 = vmatprep.subr.mxu0 0.0
        %2231 = vmatpush1.msra.mxu0 0.0
        %2232 = vmatprep.subr.mxu0 0.0
        %2233 = vmatpush1.msra.mxu0 0.0
        %2234 = vmatprep.subr.mxu0 0.0
        %2235 = vmatpush1.msra.mxu0 0.0
        %2236 = vmatprep.subr.mxu0 0.0
        %2237 = vmatpush1.msra.mxu0 0.0
        %2238 = vmatprep.subr.mxu0 0.0
        %2239 = vmatpush1.msra.mxu0 0.0
        %2240 = vmatprep.subr.mxu0 0.0
        %2241 = vmatpush1.msra.mxu0 0.0
        %2242 = vmatprep.subr.mxu0 0.0
        %2243 = vmatpush1.msra.mxu0 0.0
        %2244 = vmatprep.subr.mxu0 0.0
        %2245 = vmatpush1.msra.mxu0 0.0
        %2246 = vmatprep.subr.mxu0 0.0
        %2247 = vmatpush1.msra.mxu0 0.0
        %2248 = vmatprep.subr.mxu0 0.0
        %2249 = vmatpush1.msra.mxu0 0.0
        %2250 = vmatprep.subr.mxu0 0.0
        %2251 = vmatpush1.msra.mxu0 0.0
        %2252 = vmatprep.subr.mxu0 0.0
        %2253 = vmatpush1.msra.mxu0 0.0
        %2254 = vmatprep.subr.mxu0 0.0
        %2255 = vmatpush1.msra.mxu0 0.0
        %2256 = vmatprep.subr.mxu0 0.0
        %2257 = vmatpush1.msra.mxu0 0.0
        %2258 = vmatprep.subr.mxu0 0.0
        %2259 = vmatpush1.msra.mxu0 0.0
        %2260 = vmatprep.subr.mxu0 0.0
        %2261 = vmatpush1.msra.mxu0 0.0
        %2262 = vmatprep.subr.mxu0 0.0
        %2263 = vmatpush1.msra.mxu0 0.0
        %2264 = vmatprep.subr.mxu0 0.0
        %2265 = vmatpush1.msra.mxu0 0.0
        %2266 = vmatprep.subr.mxu0 0.0
        %2267 = vmatpush1.msra.mxu0 0.0
        %2268 = vmatprep.subr.mxu0 0.0
        %2269 = vmatpush1.msra.mxu0 0.0
        %2270 = vmatprep.subr.mxu0 0.0
        %2271 = vmatpush1.msra.mxu0 0.0
        %2272 = vmatprep.subr.mxu0 0.0
        %2273 = vmatpush1.msra.mxu0 0.0
        %2274 = vmatprep.subr.mxu0 0.0
        %2275 = vmatpush1.msra.mxu0 0.0
        %2276 = vmatprep.mubr.f32.mxu0 0.0
        %2277 = vmatmul.mubr.f32.gmra.mrb[0].mxu0 %v2201
        %v2278 = vpop.f32.mrb[0].mxu0
        %v2279 = vadd.f32 0.0, %v2278
        %v2280 = vpop.f32.mrb[0].mxu0
        %2281 = vmatprep.mubr.f32.mxu0 0.0
        %2282 = vmatmul.mubr.f32.gmra.mrb[0].mxu0 %v2204
        %v2283 = vpop.f32.mrb[0].mxu0
        %v2284 = vadd.f32 0.0, %v2283
        %v2285 = vpop.f32.mrb[0].mxu0
        %2286 = vmatprep.mubr.f32.mxu0 0.0
        %2287 = vmatmul.mubr.f32.gmra.mrb[0].mxu0 %v2207
        %v2288 = vpop.f32.mrb[0].mxu0
        %v2289 = vadd.f32 0.0, %v2288
        %v2290 = vpop.f32.mrb[0].mxu0
        %2291 = vmatprep.mubr.f32.mxu0 0.0
        %2292 = vmatmul.mubr.f32.gmra.mrb[0].mxu0 %v2210
        %v2293 = vpop.f32.mrb[0].mxu0
        %v2294 = vadd.f32 0.0, %v2293
        %v2295 = vpop.f32.mrb[0].mxu0
        %2296 = vdwg.mxu0
        %v2298 = vsel %vm412, %v2188, 0
        %v2301 = vsel %vm412, %v2189, 0
        %v2304 = vsel %vm412, %v2190, 0
        %v2307 = vsel %vm412, %v2191, 0
        %2309 = vmatprep.subr.mxu0 0.0
        %2310 = vmatpush1.msra.mxu0 %v1573
        %2311 = vmatprep.subr.mxu0 0.0
        %2312 = vmatpush1.msra.mxu0 %v1578
        %2313 = vmatprep.subr.mxu0 0.0
        %2314 = vmatpush1.msra.mxu0 %v1583
        %2315 = vmatprep.subr.mxu0 0.0
        %2316 = vmatpush1.msra.mxu0 %v1588
        %2317 = vmatprep.subr.mxu0 0.0
        %2318 = vmatpush1.msra.mxu0 0.0
        %2319 = vmatprep.subr.mxu0 0.0
        %2320 = vmatpush1.msra.mxu0 0.0
        %2321 = vmatprep.subr.mxu0 0.0
        %2322 = vmatpush1.msra.mxu0 0.0
        %2323 = vmatprep.subr.mxu0 0.0
        %2324 = vmatpush1.msra.mxu0 0.0
        %2325 = vmatprep.subr.mxu0 0.0
        %2326 = vmatpush1.msra.mxu0 0.0
        %2327 = vmatprep.subr.mxu0 0.0
        %2328 = vmatpush1.msra.mxu0 0.0
        %2329 = vmatprep.subr.mxu0 0.0
        %2330 = vmatpush1.msra.mxu0 0.0
        %2331 = vmatprep.subr.mxu0 0.0
        %2332 = vmatpush1.msra.mxu0 0.0
        %2333 = vmatprep.subr.mxu0 0.0
        %2334 = vmatpush1.msra.mxu0 0.0
        %2335 = vmatprep.subr.mxu0 0.0
        %2336 = vmatpush1.msra.mxu0 0.0
        %2337 = vmatprep.subr.mxu0 0.0
        %2338 = vmatpush1.msra.mxu0 0.0
        %2339 = vmatprep.subr.mxu0 0.0
        %2340 = vmatpush1.msra.mxu0 0.0
        %2341 = vmatprep.subr.mxu0 0.0
        %2342 = vmatpush1.msra.mxu0 0.0
        %2343 = vmatprep.subr.mxu0 0.0
        %2344 = vmatpush1.msra.mxu0 0.0
        %2345 = vmatprep.subr.mxu0 0.0
        %2346 = vmatpush1.msra.mxu0 0.0
        %2347 = vmatprep.subr.mxu0 0.0
        %2348 = vmatpush1.msra.mxu0 0.0
        %2349 = vmatprep.subr.mxu0 0.0
        %2350 = vmatpush1.msra.mxu0 0.0
        %2351 = vmatprep.subr.mxu0 0.0
        %2352 = vmatpush1.msra.mxu0 0.0
        %2353 = vmatprep.subr.mxu0 0.0
        %2354 = vmatpush1.msra.mxu0 0.0
        %2355 = vmatprep.subr.mxu0 0.0
        %2356 = vmatpush1.msra.mxu0 0.0
        %2357 = vmatprep.subr.mxu0 0.0
        %2358 = vmatpush1.msra.mxu0 0.0
        %2359 = vmatprep.subr.mxu0 0.0
        %2360 = vmatpush1.msra.mxu0 0.0
        %2361 = vmatprep.subr.mxu0 0.0
        %2362 = vmatpush1.msra.mxu0 0.0
        %2363 = vmatprep.subr.mxu0 0.0
        %2364 = vmatpush1.msra.mxu0 0.0
        %2365 = vmatprep.subr.mxu0 0.0
        %2366 = vmatpush1.msra.mxu0 0.0
        %2367 = vmatprep.subr.mxu0 0.0
        %2368 = vmatpush1.msra.mxu0 0.0
        %2369 = vmatprep.subr.mxu0 0.0
        %2370 = vmatpush1.msra.mxu0 0.0
        %2371 = vmatprep.subr.mxu0 0.0
        %2372 = vmatpush1.msra.mxu0 0.0
        %2373 = vmatprep.mubr.f32.mxu0 0.0
        %2374 = vmatmul.mubr.f32.gmra.mrb[0].mxu0 %v2298
        %v2375 = vpop.f32.mrb[0].mxu0
        %v2376 = vadd.f32 0.0, %v2375
        %v2377 = vpop.f32.mrb[0].mxu0
        %2378 = vmatprep.mubr.f32.mxu0 0.0
        %2379 = vmatmul.mubr.f32.gmra.mrb[0].mxu0 %v2301
        %v2380 = vpop.f32.mrb[0].mxu0
        %v2381 = vadd.f32 0.0, %v2380
        %v2382 = vpop.f32.mrb[0].mxu0
        %2383 = vmatprep.mubr.f32.mxu0 0.0
        %2384 = vmatmul.mubr.f32.gmra.mrb[0].mxu0 %v2304
        %v2385 = vpop.f32.mrb[0].mxu0
        %v2386 = vadd.f32 0.0, %v2385
        %v2387 = vpop.f32.mrb[0].mxu0
        %2388 = vmatprep.mubr.f32.mxu0 0.0
        %2389 = vmatmul.mubr.f32.gmra.mrb[0].mxu0 %v2307
        %v2390 = vpop.f32.mrb[0].mxu0
        %v2391 = vadd.f32 0.0, %v2390
        %v2392 = vpop.f32.mrb[0].mxu0
        %2393 = vdwg.mxu0
        %v2395 = vsel %vm412, %v2192, 0
        %v2398 = vsel %vm412, %v2193, 0
        %v2401 = vsel %vm412, %v2194, 0
        %v2404 = vsel %vm412, %v2195, 0
        %2406 = vmatprep.subr.mxu0 0.0
        %2407 = vmatpush1.msra.mxu0 %v1593
        %2408 = vmatprep.subr.mxu0 0.0
        %2409 = vmatpush1.msra.mxu0 %v1598
        %2410 = vmatprep.subr.mxu0 0.0
        %2411 = vmatpush1.msra.mxu0 %v1603
        %2412 = vmatprep.subr.mxu0 0.0
        %2413 = vmatpush1.msra.mxu0 %v1608
        %2414 = vmatprep.subr.mxu0 0.0
        %2415 = vmatpush1.msra.mxu0 0.0
        %2416 = vmatprep.subr.mxu0 0.0
        %2417 = vmatpush1.msra.mxu0 0.0
        %2418 = vmatprep.subr.mxu0 0.0
        %2419 = vmatpush1.msra.mxu0 0.0
        %2420 = vmatprep.subr.mxu0 0.0
        %2421 = vmatpush1.msra.mxu0 0.0
        %2422 = vmatprep.subr.mxu0 0.0
        %2423 = vmatpush1.msra.mxu0 0.0
        %2424 = vmatprep.subr.mxu0 0.0
        %2425 = vmatpush1.msra.mxu0 0.0
        %2426 = vmatprep.subr.mxu0 0.0
        %2427 = vmatpush1.msra.mxu0 0.0
        %2428 = vmatprep.subr.mxu0 0.0
        %2429 = vmatpush1.msra.mxu0 0.0
        %2430 = vmatprep.subr.mxu0 0.0
        %2431 = vmatpush1.msra.mxu0 0.0
        %2432 = vmatprep.subr.mxu0 0.0
        %2433 = vmatpush1.msra.mxu0 0.0
        %2434 = vmatprep.subr.mxu0 0.0
        %2435 = vmatpush1.msra.mxu0 0.0
        %2436 = vmatprep.subr.mxu0 0.0
        %2437 = vmatpush1.msra.mxu0 0.0
        %2438 = vmatprep.subr.mxu0 0.0
        %2439 = vmatpush1.msra.mxu0 0.0
        %2440 = vmatprep.subr.mxu0 0.0
        %2441 = vmatpush1.msra.mxu0 0.0
        %2442 = vmatprep.subr.mxu0 0.0
        %2443 = vmatpush1.msra.mxu0 0.0
        %2444 = vmatprep.subr.mxu0 0.0
        %2445 = vmatpush1.msra.mxu0 0.0
        %2446 = vmatprep.subr.mxu0 0.0
        %2447 = vmatpush1.msra.mxu0 0.0
        %2448 = vmatprep.subr.mxu0 0.0
        %2449 = vmatpush1.msra.mxu0 0.0
        %2450 = vmatprep.subr.mxu0 0.0
        %2451 = vmatpush1.msra.mxu0 0.0
        %2452 = vmatprep.subr.mxu0 0.0
        %2453 = vmatpush1.msra.mxu0 0.0
        %2454 = vmatprep.subr.mxu0 0.0
        %2455 = vmatpush1.msra.mxu0 0.0
        %2456 = vmatprep.subr.mxu0 0.0
        %2457 = vmatpush1.msra.mxu0 0.0
        %2458 = vmatprep.subr.mxu0 0.0
        %2459 = vmatpush1.msra.mxu0 0.0
        %2460 = vmatprep.subr.mxu0 0.0
        %2461 = vmatpush1.msra.mxu0 0.0
        %2462 = vmatprep.subr.mxu0 0.0
        %2463 = vmatpush1.msra.mxu0 0.0
        %2464 = vmatprep.subr.mxu0 0.0
        %2465 = vmatpush1.msra.mxu0 0.0
        %2466 = vmatprep.subr.mxu0 0.0
        %2467 = vmatpush1.msra.mxu0 0.0
        %2468 = vmatprep.subr.mxu0 0.0
        %2469 = vmatpush1.msra.mxu0 0.0
        %2470 = vmatprep.mubr.f32.mxu0 0.0
        %2471 = vmatmul.mubr.f32.gmra.mrb[0].mxu0 %v2395
        %v2472 = vpop.f32.mrb[0].mxu0
        %v2473 = vadd.f32 0.0, %v2472
        %v2474 = vpop.f32.mrb[0].mxu0
        %2475 = vmatprep.mubr.f32.mxu0 0.0
        %2476 = vmatmul.mubr.f32.gmra.mrb[0].mxu0 %v2398
        %v2477 = vpop.f32.mrb[0].mxu0
        %v2478 = vadd.f32 0.0, %v2477
        %v2479 = vpop.f32.mrb[0].mxu0
        %2480 = vmatprep.mubr.f32.mxu0 0.0
        %2481 = vmatmul.mubr.f32.gmra.mrb[0].mxu0 %v2401
        %v2482 = vpop.f32.mrb[0].mxu0
        %v2483 = vadd.f32 0.0, %v2482
        %v2484 = vpop.f32.mrb[0].mxu0
        %2485 = vmatprep.mubr.f32.mxu0 0.0
        %2486 = vmatmul.mubr.f32.gmra.mrb[0].mxu0 %v2404
        %v2487 = vpop.f32.mrb[0].mxu0
        %v2488 = vadd.f32 0.0, %v2487
        %v2489 = vpop.f32.mrb[0].mxu0
        %2490 = vdwg.mxu0
        %v2492 = vsel %vm412, %v2196, 0
        %v2495 = vsel %vm412, %v2197, 0
        %v2498 = vsel %vm412, %v2198, 0
        %v2501 = vsel %vm412, %v2199, 0
        %2503 = vmatprep.subr.mxu0 0.0
        %2504 = vmatpush1.msra.mxu0 %v1613
        %2505 = vmatprep.subr.mxu0 0.0
        %2506 = vmatpush1.msra.mxu0 %v1618
        %2507 = vmatprep.subr.mxu0 0.0
        %2508 = vmatpush1.msra.mxu0 %v1623
        %2509 = vmatprep.subr.mxu0 0.0
        %2510 = vmatpush1.msra.mxu0 %v1628
        %2511 = vmatprep.subr.mxu0 0.0
        %2512 = vmatpush1.msra.mxu0 0.0
        %2513 = vmatprep.subr.mxu0 0.0
        %2514 = vmatpush1.msra.mxu0 0.0
        %2515 = vmatprep.subr.mxu0 0.0
        %2516 = vmatpush1.msra.mxu0 0.0
        %2517 = vmatprep.subr.mxu0 0.0
        %2518 = vmatpush1.msra.mxu0 0.0
        %2519 = vmatprep.subr.mxu0 0.0
        %2520 = vmatpush1.msra.mxu0 0.0
        %2521 = vmatprep.subr.mxu0 0.0
        %2522 = vmatpush1.msra.mxu0 0.0
        %2523 = vmatprep.subr.mxu0 0.0
        %2524 = vmatpush1.msra.mxu0 0.0
        %2525 = vmatprep.subr.mxu0 0.0
        %2526 = vmatpush1.msra.mxu0 0.0
        %2527 = vmatprep.subr.mxu0 0.0
        %2528 = vmatpush1.msra.mxu0 0.0
        %2529 = vmatprep.subr.mxu0 0.0
        %2530 = vmatpush1.msra.mxu0 0.0
        %2531 = vmatprep.subr.mxu0 0.0
        %2532 = vmatpush1.msra.mxu0 0.0
        %2533 = vmatprep.subr.mxu0 0.0
        %2534 = vmatpush1.msra.mxu0 0.0
        %2535 = vmatprep.subr.mxu0 0.0
        %2536 = vmatpush1.msra.mxu0 0.0
        %2537 = vmatprep.subr.mxu0 0.0
        %2538 = vmatpush1.msra.mxu0 0.0
        %2539 = vmatprep.subr.mxu0 0.0
        %2540 = vmatpush1.msra.mxu0 0.0
        %2541 = vmatprep.subr.mxu0 0.0
        %2542 = vmatpush1.msra.mxu0 0.0
        %2543 = vmatprep.subr.mxu0 0.0
        %2544 = vmatpush1.msra.mxu0 0.0
        %2545 = vmatprep.subr.mxu0 0.0
        %2546 = vmatpush1.msra.mxu0 0.0
        %2547 = vmatprep.subr.mxu0 0.0
        %2548 = vmatpush1.msra.mxu0 0.0
        %2549 = vmatprep.subr.mxu0 0.0
        %2550 = vmatpush1.msra.mxu0 0.0
        %2551 = vmatprep.subr.mxu0 0.0
        %2552 = vmatpush1.msra.mxu0 0.0
        %2553 = vmatprep.subr.mxu0 0.0
        %2554 = vmatpush1.msra.mxu0 0.0
        %2555 = vmatprep.subr.mxu0 0.0
        %2556 = vmatpush1.msra.mxu0 0.0
        %2557 = vmatprep.subr.mxu0 0.0
        %2558 = vmatpush1.msra.mxu0 0.0
        %2559 = vmatprep.subr.mxu0 0.0
        %2560 = vmatpush1.msra.mxu0 0.0
        %2561 = vmatprep.subr.mxu0 0.0
        %2562 = vmatpush1.msra.mxu0 0.0
        %2563 = vmatprep.subr.mxu0 0.0
        %2564 = vmatpush1.msra.mxu0 0.0
        %2565 = vmatprep.subr.mxu0 0.0
        %2566 = vmatpush1.msra.mxu0 0.0
        %2567 = vmatprep.mubr.f32.mxu0 0.0
        %2568 = vmatmul.mubr.f32.gmra.mrb[0].mxu0 %v2492
        %v2569 = vpop.f32.mrb[0].mxu0
        %v2570 = vadd.f32 0.0, %v2569
        %v2571 = vpop.f32.mrb[0].mxu0
        %2572 = vmatprep.mubr.f32.mxu0 0.0
        %2573 = vmatmul.mubr.f32.gmra.mrb[0].mxu0 %v2495
        %v2574 = vpop.f32.mrb[0].mxu0
        %v2575 = vadd.f32 0.0, %v2574
        %v2576 = vpop.f32.mrb[0].mxu0
        %2577 = vmatprep.mubr.f32.mxu0 0.0
        %2578 = vmatmul.mubr.f32.gmra.mrb[0].mxu0 %v2498
        %v2579 = vpop.f32.mrb[0].mxu0
        %v2580 = vadd.f32 0.0, %v2579
        %v2581 = vpop.f32.mrb[0].mxu0
        %2582 = vmatprep.mubr.f32.mxu0 0.0
        %2583 = vmatmul.mubr.f32.gmra.mrb[0].mxu0 %v2501
        %v2584 = vpop.f32.mrb[0].mxu0
        %v2585 = vadd.f32 0.0, %v2584
        %v2586 = vpop.f32.mrb[0].mxu0
        %2587 = vdwg.mxu0
        %v2589 = vsel %vm412, %v1307, 0
        %v2592 = vsel %vm412, %v1308, 0
        %v2595 = vsel %vm412, %v1309, 0
        %v2598 = vsel %vm412, %v1310, 0
        %2600 = vmatprep.subr.mxu0 0.0
        %2601 = vmatpush1.msra.mxu0 %v677
        %2602 = vmatprep.subr.mxu0 0.0
        %2603 = vmatpush1.msra.mxu0 %v682
        %2604 = vmatprep.subr.mxu0 0.0
        %2605 = vmatpush1.msra.mxu0 %v687
        %2606 = vmatprep.subr.mxu0 0.0
        %2607 = vmatpush1.msra.mxu0 %v692
        %2608 = vmatprep.subr.mxu0 0.0
        %2609 = vmatpush1.msra.mxu0 0.0
        %2610 = vmatprep.subr.mxu0 0.0
        %2611 = vmatpush1.msra.mxu0 0.0
        %2612 = vmatprep.subr.mxu0 0.0
        %2613 = vmatpush1.msra.mxu0 0.0
        %2614 = vmatprep.subr.mxu0 0.0
        %2615 = vmatpush1.msra.mxu0 0.0
        %2616 = vmatprep.subr.mxu0 0.0
        %2617 = vmatpush1.msra.mxu0 0.0
        %2618 = vmatprep.subr.mxu0 0.0
        %2619 = vmatpush1.msra.mxu0 0.0
        %2620 = vmatprep.subr.mxu0 0.0
        %2621 = vmatpush1.msra.mxu0 0.0
        %2622 = vmatprep.subr.mxu0 0.0
        %2623 = vmatpush1.msra.mxu0 0.0
        %2624 = vmatprep.subr.mxu0 0.0
        %2625 = vmatpush1.msra.mxu0 0.0
        %2626 = vmatprep.subr.mxu0 0.0
        %2627 = vmatpush1.msra.mxu0 0.0
        %2628 = vmatprep.subr.mxu0 0.0
        %2629 = vmatpush1.msra.mxu0 0.0
        %2630 = vmatprep.subr.mxu0 0.0
        %2631 = vmatpush1.msra.mxu0 0.0
        %2632 = vmatprep.subr.mxu0 0.0
        %2633 = vmatpush1.msra.mxu0 0.0
        %2634 = vmatprep.subr.mxu0 0.0
        %2635 = vmatpush1.msra.mxu0 0.0
        %2636 = vmatprep.subr.mxu0 0.0
        %2637 = vmatpush1.msra.mxu0 0.0
        %2638 = vmatprep.subr.mxu0 0.0
        %2639 = vmatpush1.msra.mxu0 0.0
        %2640 = vmatprep.subr.mxu0 0.0
        %2641 = vmatpush1.msra.mxu0 0.0
        %2642 = vmatprep.subr.mxu0 0.0
        %2643 = vmatpush1.msra.mxu0 0.0
        %2644 = vmatprep.subr.mxu0 0.0
        %2645 = vmatpush1.msra.mxu0 0.0
        %2646 = vmatprep.subr.mxu0 0.0
        %2647 = vmatpush1.msra.mxu0 0.0
        %2648 = vmatprep.subr.mxu0 0.0
        %2649 = vmatpush1.msra.mxu0 0.0
        %2650 = vmatprep.subr.mxu0 0.0
        %2651 = vmatpush1.msra.mxu0 0.0
        %2652 = vmatprep.subr.mxu0 0.0
        %2653 = vmatpush1.msra.mxu0 0.0
        %2654 = vmatprep.subr.mxu0 0.0
        %2655 = vmatpush1.msra.mxu0 0.0
        %2656 = vmatprep.subr.mxu0 0.0
        %2657 = vmatpush1.msra.mxu0 0.0
        %2658 = vmatprep.subr.mxu0 0.0
        %2659 = vmatpush1.msra.mxu0 0.0
        %2660 = vmatprep.subr.mxu0 0.0
        %2661 = vmatpush1.msra.mxu0 0.0
        %2662 = vmatprep.subr.mxu0 0.0
        %2663 = vmatpush1.msra.mxu0 0.0
        %2664 = vmatprep.mubr.f32.mxu0 0.0
        %2665 = vmatmul.mubr.f32.gmra.mrb[0].mxu0 %v2589
        %v2666 = vpop.f32.mrb[0].mxu0
        %v2667 = vadd.f32 %v2279, %v2666
        %v2668 = vpop.f32.mrb[0].mxu0
        %2669 = vmatprep.mubr.f32.mxu0 0.0
        %2670 = vmatmul.mubr.f32.gmra.mrb[0].mxu0 %v2592
        %v2671 = vpop.f32.mrb[0].mxu0
        %v2672 = vadd.f32 %v2284, %v2671
        %v2673 = vpop.f32.mrb[0].mxu0
        %2674 = vmatprep.mubr.f32.mxu0 0.0
        %2675 = vmatmul.mubr.f32.gmra.mrb[0].mxu0 %v2595
        %v2676 = vpop.f32.mrb[0].mxu0
        %v2677 = vadd.f32 %v2289, %v2676
        %v2678 = vpop.f32.mrb[0].mxu0
        %2679 = vmatprep.mubr.f32.mxu0 0.0
        %2680 = vmatmul.mubr.f32.gmra.mrb[0].mxu0 %v2598
        %v2681 = vpop.f32.mrb[0].mxu0
        %v2682 = vadd.f32 %v2294, %v2681
        %v2683 = vpop.f32.mrb[0].mxu0
        %2684 = vdwg.mxu0
        %v2686 = vsel %vm412, %v1311, 0
        %v2689 = vsel %vm412, %v1312, 0
        %v2692 = vsel %vm412, %v1313, 0
        %v2695 = vsel %vm412, %v1314, 0
        %2697 = vmatprep.subr.mxu0 0.0
        %2698 = vmatpush1.msra.mxu0 %v697
        %2699 = vmatprep.subr.mxu0 0.0
        %2700 = vmatpush1.msra.mxu0 %v702
        %2701 = vmatprep.subr.mxu0 0.0
        %2702 = vmatpush1.msra.mxu0 %v707
        %2703 = vmatprep.subr.mxu0 0.0
        %2704 = vmatpush1.msra.mxu0 %v712
        %2705 = vmatprep.subr.mxu0 0.0
        %2706 = vmatpush1.msra.mxu0 0.0
        %2707 = vmatprep.subr.mxu0 0.0
        %2708 = vmatpush1.msra.mxu0 0.0
        %2709 = vmatprep.subr.mxu0 0.0
        %2710 = vmatpush1.msra.mxu0 0.0
        %2711 = vmatprep.subr.mxu0 0.0
        %2712 = vmatpush1.msra.mxu0 0.0
        %2713 = vmatprep.subr.mxu0 0.0
        %2714 = vmatpush1.msra.mxu0 0.0
        %2715 = vmatprep.subr.mxu0 0.0
        %2716 = vmatpush1.msra.mxu0 0.0
        %2717 = vmatprep.subr.mxu0 0.0
        %2718 = vmatpush1.msra.mxu0 0.0
        %2719 = vmatprep.subr.mxu0 0.0
        %2720 = vmatpush1.msra.mxu0 0.0
        %2721 = vmatprep.subr.mxu0 0.0
        %2722 = vmatpush1.msra.mxu0 0.0
        %2723 = vmatprep.subr.mxu0 0.0
        %2724 = vmatpush1.msra.mxu0 0.0
        %2725 = vmatprep.subr.mxu0 0.0
        %2726 = vmatpush1.msra.mxu0 0.0
        %2727 = vmatprep.subr.mxu0 0.0
        %2728 = vmatpush1.msra.mxu0 0.0
        %2729 = vmatprep.subr.mxu0 0.0
        %2730 = vmatpush1.msra.mxu0 0.0
        %2731 = vmatprep.subr.mxu0 0.0
        %2732 = vmatpush1.msra.mxu0 0.0
        %2733 = vmatprep.subr.mxu0 0.0
        %2734 = vmatpush1.msra.mxu0 0.0
        %2735 = vmatprep.subr.mxu0 0.0
        %2736 = vmatpush1.msra.mxu0 0.0
        %2737 = vmatprep.subr.mxu0 0.0
        %2738 = vmatpush1.msra.mxu0 0.0
        %2739 = vmatprep.subr.mxu0 0.0
        %2740 = vmatpush1.msra.mxu0 0.0
        %2741 = vmatprep.subr.mxu0 0.0
        %2742 = vmatpush1.msra.mxu0 0.0
        %2743 = vmatprep.subr.mxu0 0.0
        %2744 = vmatpush1.msra.mxu0 0.0
        %2745 = vmatprep.subr.mxu0 0.0
        %2746 = vmatpush1.msra.mxu0 0.0
        %2747 = vmatprep.subr.mxu0 0.0
        %2748 = vmatpush1.msra.mxu0 0.0
        %2749 = vmatprep.subr.mxu0 0.0
        %2750 = vmatpush1.msra.mxu0 0.0
        %2751 = vmatprep.subr.mxu0 0.0
        %2752 = vmatpush1.msra.mxu0 0.0
        %2753 = vmatprep.subr.mxu0 0.0
        %2754 = vmatpush1.msra.mxu0 0.0
        %2755 = vmatprep.subr.mxu0 0.0
        %2756 = vmatpush1.msra.mxu0 0.0
        %2757 = vmatprep.subr.mxu0 0.0
        %2758 = vmatpush1.msra.mxu0 0.0
        %2759 = vmatprep.subr.mxu0 0.0
        %2760 = vmatpush1.msra.mxu0 0.0
        %2761 = vmatprep.mubr.f32.mxu0 0.0
        %2762 = vmatmul.mubr.f32.gmra.mrb[0].mxu0 %v2686
        %v2763 = vpop.f32.mrb[0].mxu0
        %v2764 = vadd.f32 %v2376, %v2763
        %v2765 = vpop.f32.mrb[0].mxu0
        %2766 = vmatprep.mubr.f32.mxu0 0.0
        %2767 = vmatmul.mubr.f32.gmra.mrb[0].mxu0 %v2689
        %v2768 = vpop.f32.mrb[0].mxu0
        %v2769 = vadd.f32 %v2381, %v2768
        %v2770 = vpop.f32.mrb[0].mxu0
        %2771 = vmatprep.mubr.f32.mxu0 0.0
        %2772 = vmatmul.mubr.f32.gmra.mrb[0].mxu0 %v2692
        %v2773 = vpop.f32.mrb[0].mxu0
        %v2774 = vadd.f32 %v2386, %v2773
        %v2775 = vpop.f32.mrb[0].mxu0
        %2776 = vmatprep.mubr.f32.mxu0 0.0
        %2777 = vmatmul.mubr.f32.gmra.mrb[0].mxu0 %v2695
        %v2778 = vpop.f32.mrb[0].mxu0
        %v2779 = vadd.f32 %v2391, %v2778
        %v2780 = vpop.f32.mrb[0].mxu0
        %2781 = vdwg.mxu0
        %v2783 = vsel %vm412, %v1315, 0
        %v2786 = vsel %vm412, %v1316, 0
        %v2789 = vsel %vm412, %v1317, 0
        %v2792 = vsel %vm412, %v1318, 0
        %2794 = vmatprep.subr.mxu0 0.0
        %2795 = vmatpush1.msra.mxu0 %v717
        %2796 = vmatprep.subr.mxu0 0.0
        %2797 = vmatpush1.msra.mxu0 %v722
        %2798 = vmatprep.subr.mxu0 0.0
        %2799 = vmatpush1.msra.mxu0 %v727
        %2800 = vmatprep.subr.mxu0 0.0
        %2801 = vmatpush1.msra.mxu0 %v732
        %2802 = vmatprep.subr.mxu0 0.0
        %2803 = vmatpush1.msra.mxu0 0.0
        %2804 = vmatprep.subr.mxu0 0.0
        %2805 = vmatpush1.msra.mxu0 0.0
        %2806 = vmatprep.subr.mxu0 0.0
        %2807 = vmatpush1.msra.mxu0 0.0
        %2808 = vmatprep.subr.mxu0 0.0
        %2809 = vmatpush1.msra.mxu0 0.0
        %2810 = vmatprep.subr.mxu0 0.0
        %2811 = vmatpush1.msra.mxu0 0.0
        %2812 = vmatprep.subr.mxu0 0.0
        %2813 = vmatpush1.msra.mxu0 0.0
        %2814 = vmatprep.subr.mxu0 0.0
        %2815 = vmatpush1.msra.mxu0 0.0
        %2816 = vmatprep.subr.mxu0 0.0
        %2817 = vmatpush1.msra.mxu0 0.0
        %2818 = vmatprep.subr.mxu0 0.0
        %2819 = vmatpush1.msra.mxu0 0.0
        %2820 = vmatprep.subr.mxu0 0.0
        %2821 = vmatpush1.msra.mxu0 0.0
        %2822 = vmatprep.subr.mxu0 0.0
        %2823 = vmatpush1.msra.mxu0 0.0
        %2824 = vmatprep.subr.mxu0 0.0
        %2825 = vmatpush1.msra.mxu0 0.0
        %2826 = vmatprep.subr.mxu0 0.0
        %2827 = vmatpush1.msra.mxu0 0.0
        %2828 = vmatprep.subr.mxu0 0.0
        %2829 = vmatpush1.msra.mxu0 0.0
        %2830 = vmatprep.subr.mxu0 0.0
        %2831 = vmatpush1.msra.mxu0 0.0
        %2832 = vmatprep.subr.mxu0 0.0
        %2833 = vmatpush1.msra.mxu0 0.0
        %2834 = vmatprep.subr.mxu0 0.0
        %2835 = vmatpush1.msra.mxu0 0.0
        %2836 = vmatprep.subr.mxu0 0.0
        %2837 = vmatpush1.msra.mxu0 0.0
        %2838 = vmatprep.subr.mxu0 0.0
        %2839 = vmatpush1.msra.mxu0 0.0
        %2840 = vmatprep.subr.mxu0 0.0
        %2841 = vmatpush1.msra.mxu0 0.0
        %2842 = vmatprep.subr.mxu0 0.0
        %2843 = vmatpush1.msra.mxu0 0.0
        %2844 = vmatprep.subr.mxu0 0.0
        %2845 = vmatpush1.msra.mxu0 0.0
        %2846 = vmatprep.subr.mxu0 0.0
        %2847 = vmatpush1.msra.mxu0 0.0
        %2848 = vmatprep.subr.mxu0 0.0
        %2849 = vmatpush1.msra.mxu0 0.0
        %2850 = vmatprep.subr.mxu0 0.0
        %2851 = vmatpush1.msra.mxu0 0.0
        %2852 = vmatprep.subr.mxu0 0.0
        %2853 = vmatpush1.msra.mxu0 0.0
        %2854 = vmatprep.subr.mxu0 0.0
        %2855 = vmatpush1.msra.mxu0 0.0
        %2856 = vmatprep.subr.mxu0 0.0
        %2857 = vmatpush1.msra.mxu0 0.0
        %2858 = vmatprep.mubr.f32.mxu0 0.0
        %2859 = vmatmul.mubr.f32.gmra.mrb[0].mxu0 %v2783
        %v2860 = vpop.f32.mrb[0].mxu0
        %v2861 = vadd.f32 %v2473, %v2860
        %v2862 = vpop.f32.mrb[0].mxu0
        %2863 = vmatprep.mubr.f32.mxu0 0.0
        %2864 = vmatmul.mubr.f32.gmra.mrb[0].mxu0 %v2786
        %v2865 = vpop.f32.mrb[0].mxu0
        %v2866 = vadd.f32 %v2478, %v2865
        %v2867 = vpop.f32.mrb[0].mxu0
        %2868 = vmatprep.mubr.f32.mxu0 0.0
        %2869 = vmatmul.mubr.f32.gmra.mrb[0].mxu0 %v2789
        %v2870 = vpop.f32.mrb[0].mxu0
        %v2871 = vadd.f32 %v2483, %v2870
        %v2872 = vpop.f32.mrb[0].mxu0
        %2873 = vmatprep.mubr.f32.mxu0 0.0
        %2874 = vmatmul.mubr.f32.gmra.mrb[0].mxu0 %v2792
        %v2875 = vpop.f32.mrb[0].mxu0
        %v2876 = vadd.f32 %v2488, %v2875
        %v2877 = vpop.f32.mrb[0].mxu0
        %2878 = vdwg.mxu0
        %v2880 = vsel %vm412, %v1319, 0
        %v2883 = vsel %vm412, %v1320, 0
        %v2886 = vsel %vm412, %v1321, 0
        %v2889 = vsel %vm412, %v1322, 0
        %2891 = vmatprep.subr.mxu0 0.0
        %2892 = vmatpush1.msra.mxu0 %v737
        %2893 = vmatprep.subr.mxu0 0.0
        %2894 = vmatpush1.msra.mxu0 %v742
        %2895 = vmatprep.subr.mxu0 0.0
        %2896 = vmatpush1.msra.mxu0 %v747
        %2897 = vmatprep.subr.mxu0 0.0
        %2898 = vmatpush1.msra.mxu0 %v752
        %2899 = vmatprep.subr.mxu0 0.0
        %2900 = vmatpush1.msra.mxu0 0.0
        %2901 = vmatprep.subr.mxu0 0.0
        %2902 = vmatpush1.msra.mxu0 0.0
        %2903 = vmatprep.subr.mxu0 0.0
        %2904 = vmatpush1.msra.mxu0 0.0
        %2905 = vmatprep.subr.mxu0 0.0
        %2906 = vmatpush1.msra.mxu0 0.0
        %2907 = vmatprep.subr.mxu0 0.0
        %2908 = vmatpush1.msra.mxu0 0.0
        %2909 = vmatprep.subr.mxu0 0.0
        %2910 = vmatpush1.msra.mxu0 0.0
        %2911 = vmatprep.subr.mxu0 0.0
        %2912 = vmatpush1.msra.mxu0 0.0
        %2913 = vmatprep.subr.mxu0 0.0
        %2914 = vmatpush1.msra.mxu0 0.0
        %2915 = vmatprep.subr.mxu0 0.0
        %2916 = vmatpush1.msra.mxu0 0.0
        %2917 = vmatprep.subr.mxu0 0.0
        %2918 = vmatpush1.msra.mxu0 0.0
        %2919 = vmatprep.subr.mxu0 0.0
        %2920 = vmatpush1.msra.mxu0 0.0
        %2921 = vmatprep.subr.mxu0 0.0
        %2922 = vmatpush1.msra.mxu0 0.0
        %2923 = vmatprep.subr.mxu0 0.0
        %2924 = vmatpush1.msra.mxu0 0.0
        %2925 = vmatprep.subr.mxu0 0.0
        %2926 = vmatpush1.msra.mxu0 0.0
        %2927 = vmatprep.subr.mxu0 0.0
        %2928 = vmatpush1.msra.mxu0 0.0
        %2929 = vmatprep.subr.mxu0 0.0
        %2930 = vmatpush1.msra.mxu0 0.0
        %2931 = vmatprep.subr.mxu0 0.0
        %2932 = vmatpush1.msra.mxu0 0.0
        %2933 = vmatprep.subr.mxu0 0.0
        %2934 = vmatpush1.msra.mxu0 0.0
        %2935 = vmatprep.subr.mxu0 0.0
        %2936 = vmatpush1.msra.mxu0 0.0
        %2937 = vmatprep.subr.mxu0 0.0
        %2938 = vmatpush1.msra.mxu0 0.0
        %2939 = vmatprep.subr.mxu0 0.0
        %2940 = vmatpush1.msra.mxu0 0.0
        %2941 = vmatprep.subr.mxu0 0.0
        %2942 = vmatpush1.msra.mxu0 0.0
        %2943 = vmatprep.subr.mxu0 0.0
        %2944 = vmatpush1.msra.mxu0 0.0
        %2945 = vmatprep.subr.mxu0 0.0
        %2946 = vmatpush1.msra.mxu0 0.0
        %2947 = vmatprep.subr.mxu0 0.0
        %2948 = vmatpush1.msra.mxu0 0.0
        %2949 = vmatprep.subr.mxu0 0.0
        %2950 = vmatpush1.msra.mxu0 0.0
        %2951 = vmatprep.subr.mxu0 0.0
        %2952 = vmatpush1.msra.mxu0 0.0
        %2953 = vmatprep.subr.mxu0 0.0
        %2954 = vmatpush1.msra.mxu0 0.0
        %2955 = vmatprep.mubr.f32.mxu0 0.0
        %2956 = vmatmul.mubr.f32.gmra.mrb[0].mxu0 %v2880
        %v2957 = vpop.f32.mrb[0].mxu0
        %v2958 = vadd.f32 %v2570, %v2957
        %v2959 = vpop.f32.mrb[0].mxu0
        %2960 = vmatprep.mubr.f32.mxu0 0.0
        %2961 = vmatmul.mubr.f32.gmra.mrb[0].mxu0 %v2883
        %v2962 = vpop.f32.mrb[0].mxu0
        %v2963 = vadd.f32 %v2575, %v2962
        %v2964 = vpop.f32.mrb[0].mxu0
        %2965 = vmatprep.mubr.f32.mxu0 0.0
        %2966 = vmatmul.mubr.f32.gmra.mrb[0].mxu0 %v2886
        %v2967 = vpop.f32.mrb[0].mxu0
        %v2968 = vadd.f32 %v2580, %v2967
        %v2969 = vpop.f32.mrb[0].mxu0
        %2970 = vmatprep.mubr.f32.mxu0 0.0
        %2971 = vmatmul.mubr.f32.gmra.mrb[0].mxu0 %v2889
        %v2972 = vpop.f32.mrb[0].mxu0
        %v2973 = vadd.f32 %v2585, %v2972
        %v2974 = vpop.f32.mrb[0].mxu0
        %2975 = vdwg.mxu0
        %s2976 = scalar_lea.vmem [#allocation5], 64
        %v2977 = vld [vmem:[%s2976] sm:$0xff]
        %v2978 = vld [vmem:[%s2976 + $0x8] sm:$0xff]
        %v2979 = vld [vmem:[%s2976 + $0x10] sm:$0xff]
        %v2980 = vld [vmem:[%s2976 + $0x18] sm:$0xff]
        %s2981 = scalar_lea.vmem %s3, 2
        %v2982 = vld [vmem:[%s2981] sm:$0x1]
        %v2984 = vlaneseq
        %v2985 = vshrl.u32 %v2984, 7
        %v2986 = vsub.s32 0, %v2985
        %v2987 = vrot.slane %v2982, %v2986
        %2989 = vmatprep.subr.mxu0 0.0
        %2990 = vmatpush1.msra.mxu0 %v2977
        %2991 = vmatprep.subr.mxu0 0.0
        %2992 = vmatpush1.msra.mxu0 %v2978
        %2993 = vmatprep.subr.mxu0 0.0
        %2994 = vmatpush1.msra.mxu0 %v2979
        %2995 = vmatprep.subr.mxu0 0.0
        %2996 = vmatpush1.msra.mxu0 %v2980
        %2997 = vmatprep.subr.mxu0 0.0
        %2998 = vmatpush1.msra.mxu0 0.0
        %2999 = vmatprep.subr.mxu0 0.0
        %3000 = vmatpush1.msra.mxu0 0.0
        %3001 = vmatprep.subr.mxu0 0.0
        %3002 = vmatpush1.msra.mxu0 0.0
        %3003 = vmatprep.subr.mxu0 0.0
        %3004 = vmatpush1.msra.mxu0 0.0
        %3005 = vmatprep.subr.mxu0 0.0
        %3006 = vmatpush1.msra.mxu0 0.0
        %3007 = vmatprep.subr.mxu0 0.0
        %3008 = vmatpush1.msra.mxu0 0.0
        %3009 = vmatprep.subr.mxu0 0.0
        %3010 = vmatpush1.msra.mxu0 0.0
        %3011 = vmatprep.subr.mxu0 0.0
        %3012 = vmatpush1.msra.mxu0 0.0
        %3013 = vmatprep.subr.mxu0 0.0
        %3014 = vmatpush1.msra.mxu0 0.0
        %3015 = vmatprep.subr.mxu0 0.0
        %3016 = vmatpush1.msra.mxu0 0.0
        %3017 = vmatprep.subr.mxu0 0.0
        %3018 = vmatpush1.msra.mxu0 0.0
        %3019 = vmatprep.subr.mxu0 0.0
        %3020 = vmatpush1.msra.mxu0 0.0
        %3021 = vmatprep.subr.mxu0 0.0
        %3022 = vmatpush1.msra.mxu0 0.0
        %3023 = vmatprep.subr.mxu0 0.0
        %3024 = vmatpush1.msra.mxu0 0.0
        %3025 = vmatprep.subr.mxu0 0.0
        %3026 = vmatpush1.msra.mxu0 0.0
        %3027 = vmatprep.subr.mxu0 0.0
        %3028 = vmatpush1.msra.mxu0 0.0
        %3029 = vmatprep.subr.mxu0 0.0
        %3030 = vmatpush1.msra.mxu0 0.0
        %3031 = vmatprep.subr.mxu0 0.0
        %3032 = vmatpush1.msra.mxu0 0.0
        %3033 = vmatprep.subr.mxu0 0.0
        %3034 = vmatpush1.msra.mxu0 0.0
        %3035 = vmatprep.subr.mxu0 0.0
        %3036 = vmatpush1.msra.mxu0 0.0
        %3037 = vmatprep.subr.mxu0 0.0
        %3038 = vmatpush1.msra.mxu0 0.0
        %3039 = vmatprep.subr.mxu0 0.0
        %3040 = vmatpush1.msra.mxu0 0.0
        %3041 = vmatprep.subr.mxu0 0.0
        %3042 = vmatpush1.msra.mxu0 0.0
        %3043 = vmatprep.subr.mxu0 0.0
        %3044 = vmatpush1.msra.mxu0 0.0
        %3045 = vmatprep.subr.mxu0 0.0
        %3046 = vmatpush1.msra.mxu0 0.0
        %3047 = vmatprep.subr.mxu0 0.0
        %3048 = vmatpush1.msra.mxu0 0.0
        %3049 = vmatprep.subr.mxu0 0.0
        %3050 = vmatpush1.msra.mxu0 0.0
        %3051 = vmatprep.subr.mxu0 0.0
        %3052 = vmatpush1.msra.mxu0 0.0
        %3053 = vmatprep.mubr.f32.mxu0 0.0
        %3054 = vmatmul.mubr.f32.gmra.mrb[0].mxu0 %v414
        %v3055 = vpop.f32.mrb[0].mxu0
        %v3056 = vadd.f32 %v2987, %v3055
        %v3057 = vpop.f32.mrb[0].mxu0
        %3058 = vmatprep.mubr.f32.mxu0 0.0
        %3059 = vmatmul.mubr.f32.gmra.mrb[0].mxu0 %v417
        %v3060 = vpop.f32.mrb[0].mxu0
        %v3061 = vadd.f32 %v2987, %v3060
        %v3062 = vpop.f32.mrb[0].mxu0
        %3063 = vmatprep.mubr.f32.mxu0 0.0
        %3064 = vmatmul.mubr.f32.gmra.mrb[0].mxu0 %v420
        %v3065 = vpop.f32.mrb[0].mxu0
        %v3066 = vadd.f32 %v2987, %v3065
        %v3067 = vpop.f32.mrb[0].mxu0
        %3068 = vmatprep.mubr.f32.mxu0 0.0
        %3069 = vmatmul.mubr.f32.gmra.mrb[0].mxu0 %v423
        %v3070 = vpop.f32.mrb[0].mxu0
        %v3071 = vadd.f32 %v2987, %v3070
        %v3072 = vpop.f32.mrb[0].mxu0
        %3073 = vmatprep.mubr.f32.mxu0 0.0
        %3074 = vmatmul.mubr.f32.gmra.mrb[0].mxu0 %v426
        %v3075 = vpop.f32.mrb[0].mxu0
        %v3076 = vadd.f32 %v2987, %v3075
        %v3077 = vpop.f32.mrb[0].mxu0
        %3078 = vmatprep.mubr.f32.mxu0 0.0
        %3079 = vmatmul.mubr.f32.gmra.mrb[0].mxu0 %v429
        %v3080 = vpop.f32.mrb[0].mxu0
        %v3081 = vadd.f32 %v2987, %v3080
        %v3082 = vpop.f32.mrb[0].mxu0
        %3083 = vmatprep.mubr.f32.mxu0 0.0
        %3084 = vmatmul.mubr.f32.gmra.mrb[0].mxu0 %v432
        %v3085 = vpop.f32.mrb[0].mxu0
        %v3086 = vadd.f32 %v2987, %v3085
        %v3087 = vpop.f32.mrb[0].mxu0
        %3088 = vmatprep.mubr.f32.mxu0 0.0
        %3089 = vmatmul.mubr.f32.gmra.mrb[0].mxu0 %v435
        %v3090 = vpop.f32.mrb[0].mxu0
        %v3091 = vadd.f32 %v2987, %v3090
        %v3092 = vpop.f32.mrb[0].mxu0
        %3093 = vmatprep.mubr.f32.mxu0 0.0
        %3094 = vmatmul.mubr.f32.gmra.mrb[0].mxu0 %v438
        %v3095 = vpop.f32.mrb[0].mxu0
        %v3096 = vadd.f32 %v2987, %v3095
        %v3097 = vpop.f32.mrb[0].mxu0
        %3098 = vmatprep.mubr.f32.mxu0 0.0
        %3099 = vmatmul.mubr.f32.gmra.mrb[0].mxu0 %v441
        %v3100 = vpop.f32.mrb[0].mxu0
        %v3101 = vadd.f32 %v2987, %v3100
        %v3102 = vpop.f32.mrb[0].mxu0
        %3103 = vmatprep.mubr.f32.mxu0 0.0
        %3104 = vmatmul.mubr.f32.gmra.mrb[0].mxu0 %v444
        %v3105 = vpop.f32.mrb[0].mxu0
        %v3106 = vadd.f32 %v2987, %v3105
        %v3107 = vpop.f32.mrb[0].mxu0
        %3108 = vmatprep.mubr.f32.mxu0 0.0
        %3109 = vmatmul.mubr.f32.gmra.mrb[0].mxu0 %v447
        %v3110 = vpop.f32.mrb[0].mxu0
        %v3111 = vadd.f32 %v2987, %v3110
        %v3112 = vpop.f32.mrb[0].mxu0
        %3113 = vmatprep.mubr.f32.mxu0 0.0
        %3114 = vmatmul.mubr.f32.gmra.mrb[0].mxu0 %v450
        %v3115 = vpop.f32.mrb[0].mxu0
        %v3116 = vadd.f32 %v2987, %v3115
        %v3117 = vpop.f32.mrb[0].mxu0
        %3118 = vmatprep.mubr.f32.mxu0 0.0
        %3119 = vmatmul.mubr.f32.gmra.mrb[0].mxu0 %v453
        %v3120 = vpop.f32.mrb[0].mxu0
        %v3121 = vadd.f32 %v2987, %v3120
        %v3122 = vpop.f32.mrb[0].mxu0
        %3123 = vmatprep.mubr.f32.mxu0 0.0
        %3124 = vmatmul.mubr.f32.gmra.mrb[0].mxu0 %v456
        %v3125 = vpop.f32.mrb[0].mxu0
        %v3126 = vadd.f32 %v2987, %v3125
        %v3127 = vpop.f32.mrb[0].mxu0
        %3128 = vmatprep.mubr.f32.mxu0 0.0
        %3129 = vmatmul.mubr.f32.gmra.mrb[0].mxu0 %v459
        %v3130 = vpop.f32.mrb[0].mxu0
        %v3131 = vadd.f32 %v2987, %v3130
        %v3132 = vpop.f32.mrb[0].mxu0
        %3133 = vdwg.mxu0
        %s3134 = scalar_lea.vmem [#allocation7], 64
        %v3135 = vld [vmem:[%s3134] sm:$0xff]
        %v3136 = vld [vmem:[%s3134 + $0x8] sm:$0xff]
        %v3137 = vld [vmem:[%s3134 + $0x10] sm:$0xff]
        %v3138 = vld [vmem:[%s3134 + $0x18] sm:$0xff]
        %3139 = vmatprep.subr.mxu0 0.0
        %3140 = vmatpush1.msra.mxu0 %v3135
        %3141 = vmatprep.subr.mxu0 0.0
        %3142 = vmatpush1.msra.mxu0 %v3136
        %3143 = vmatprep.subr.mxu0 0.0
        %3144 = vmatpush1.msra.mxu0 %v3137
        %3145 = vmatprep.subr.mxu0 0.0
        %3146 = vmatpush1.msra.mxu0 %v3138
        %3147 = vmatprep.subr.mxu0 0.0
        %3148 = vmatpush1.msra.mxu0 0.0
        %3149 = vmatprep.subr.mxu0 0.0
        %3150 = vmatpush1.msra.mxu0 0.0
        %3151 = vmatprep.subr.mxu0 0.0
        %3152 = vmatpush1.msra.mxu0 0.0
        %3153 = vmatprep.subr.mxu0 0.0
        %3154 = vmatpush1.msra.mxu0 0.0
        %3155 = vmatprep.subr.mxu0 0.0
        %3156 = vmatpush1.msra.mxu0 0.0
        %3157 = vmatprep.subr.mxu0 0.0
        %3158 = vmatpush1.msra.mxu0 0.0
        %3159 = vmatprep.subr.mxu0 0.0
        %3160 = vmatpush1.msra.mxu0 0.0
        %3161 = vmatprep.subr.mxu0 0.0
        %3162 = vmatpush1.msra.mxu0 0.0
        %3163 = vmatprep.subr.mxu0 0.0
        %3164 = vmatpush1.msra.mxu0 0.0
        %3165 = vmatprep.subr.mxu0 0.0
        %3166 = vmatpush1.msra.mxu0 0.0
        %3167 = vmatprep.subr.mxu0 0.0
        %3168 = vmatpush1.msra.mxu0 0.0
        %3169 = vmatprep.subr.mxu0 0.0
        %3170 = vmatpush1.msra.mxu0 0.0
        %3171 = vmatprep.subr.mxu0 0.0
        %3172 = vmatpush1.msra.mxu0 0.0
        %3173 = vmatprep.subr.mxu0 0.0
        %3174 = vmatpush1.msra.mxu0 0.0
        %3175 = vmatprep.subr.mxu0 0.0
        %3176 = vmatpush1.msra.mxu0 0.0
        %3177 = vmatprep.subr.mxu0 0.0
        %3178 = vmatpush1.msra.mxu0 0.0
        %3179 = vmatprep.subr.mxu0 0.0
        %3180 = vmatpush1.msra.mxu0 0.0
        %3181 = vmatprep.subr.mxu0 0.0
        %3182 = vmatpush1.msra.mxu0 0.0
        %3183 = vmatprep.subr.mxu0 0.0
        %3184 = vmatpush1.msra.mxu0 0.0
        %3185 = vmatprep.subr.mxu0 0.0
        %3186 = vmatpush1.msra.mxu0 0.0
        %3187 = vmatprep.subr.mxu0 0.0
        %3188 = vmatpush1.msra.mxu0 0.0
        %3189 = vmatprep.subr.mxu0 0.0
        %3190 = vmatpush1.msra.mxu0 0.0
        %3191 = vmatprep.subr.mxu0 0.0
        %3192 = vmatpush1.msra.mxu0 0.0
        %3193 = vmatprep.subr.mxu0 0.0
        %3194 = vmatpush1.msra.mxu0 0.0
        %3195 = vmatprep.subr.mxu0 0.0
        %3196 = vmatpush1.msra.mxu0 0.0
        %3197 = vmatprep.subr.mxu0 0.0
        %3198 = vmatpush1.msra.mxu0 0.0
        %3199 = vmatprep.subr.mxu0 0.0
        %3200 = vmatpush1.msra.mxu0 0.0
        %3201 = vmatprep.subr.mxu0 0.0
        %3202 = vmatpush1.msra.mxu0 0.0
        %3203 = vmatprep.mubr.f32.mxu0 0.0
        %3204 = vmatmul.mubr.f32.gmra.mrb[0].mxu0 %v414
        %v3205 = vpop.f32.mrb[0].mxu0
        %v3206 = vadd.f32 0.0, %v3205
        %v3207 = vpop.f32.mrb[0].mxu0
        %3208 = vmatprep.mubr.f32.mxu0 0.0
        %3209 = vmatmul.mubr.f32.gmra.mrb[0].mxu0 %v417
        %v3210 = vpop.f32.mrb[0].mxu0
        %v3211 = vadd.f32 0.0, %v3210
        %v3212 = vpop.f32.mrb[0].mxu0
        %3213 = vmatprep.mubr.f32.mxu0 0.0
        %3214 = vmatmul.mubr.f32.gmra.mrb[0].mxu0 %v420
        %v3215 = vpop.f32.mrb[0].mxu0
        %v3216 = vadd.f32 0.0, %v3215
        %v3217 = vpop.f32.mrb[0].mxu0
        %3218 = vmatprep.mubr.f32.mxu0 0.0
        %3219 = vmatmul.mubr.f32.gmra.mrb[0].mxu0 %v423
        %v3220 = vpop.f32.mrb[0].mxu0
        %v3221 = vadd.f32 0.0, %v3220
        %v3222 = vpop.f32.mrb[0].mxu0
        %3223 = vmatprep.mubr.f32.mxu0 0.0
        %3224 = vmatmul.mubr.f32.gmra.mrb[0].mxu0 %v426
        %v3225 = vpop.f32.mrb[0].mxu0
        %v3226 = vadd.f32 0.0, %v3225
        %v3227 = vpop.f32.mrb[0].mxu0
        %3228 = vmatprep.mubr.f32.mxu0 0.0
        %3229 = vmatmul.mubr.f32.gmra.mrb[0].mxu0 %v429
        %v3230 = vpop.f32.mrb[0].mxu0
        %v3231 = vadd.f32 0.0, %v3230
        %v3232 = vpop.f32.mrb[0].mxu0
        %3233 = vmatprep.mubr.f32.mxu0 0.0
        %3234 = vmatmul.mubr.f32.gmra.mrb[0].mxu0 %v432
        %v3235 = vpop.f32.mrb[0].mxu0
        %v3236 = vadd.f32 0.0, %v3235
        %v3237 = vpop.f32.mrb[0].mxu0
        %3238 = vmatprep.mubr.f32.mxu0 0.0
        %3239 = vmatmul.mubr.f32.gmra.mrb[0].mxu0 %v435
        %v3240 = vpop.f32.mrb[0].mxu0
        %v3241 = vadd.f32 0.0, %v3240
        %v3242 = vpop.f32.mrb[0].mxu0
        %3243 = vmatprep.mubr.f32.mxu0 0.0
        %3244 = vmatmul.mubr.f32.gmra.mrb[0].mxu0 %v438
        %v3245 = vpop.f32.mrb[0].mxu0
        %v3246 = vadd.f32 0.0, %v3245
        %v3247 = vpop.f32.mrb[0].mxu0
        %3248 = vmatprep.mubr.f32.mxu0 0.0
        %3249 = vmatmul.mubr.f32.gmra.mrb[0].mxu0 %v441
        %v3250 = vpop.f32.mrb[0].mxu0
        %v3251 = vadd.f32 0.0, %v3250
        %v3252 = vpop.f32.mrb[0].mxu0
        %3253 = vmatprep.mubr.f32.mxu0 0.0
        %3254 = vmatmul.mubr.f32.gmra.mrb[0].mxu0 %v444
        %v3255 = vpop.f32.mrb[0].mxu0
        %v3256 = vadd.f32 0.0, %v3255
        %v3257 = vpop.f32.mrb[0].mxu0
        %3258 = vmatprep.mubr.f32.mxu0 0.0
        %3259 = vmatmul.mubr.f32.gmra.mrb[0].mxu0 %v447
        %v3260 = vpop.f32.mrb[0].mxu0
        %v3261 = vadd.f32 0.0, %v3260
        %v3262 = vpop.f32.mrb[0].mxu0
        %3263 = vmatprep.mubr.f32.mxu0 0.0
        %3264 = vmatmul.mubr.f32.gmra.mrb[0].mxu0 %v450
        %v3265 = vpop.f32.mrb[0].mxu0
        %v3266 = vadd.f32 0.0, %v3265
        %v3267 = vpop.f32.mrb[0].mxu0
        %3268 = vmatprep.mubr.f32.mxu0 0.0
        %3269 = vmatmul.mubr.f32.gmra.mrb[0].mxu0 %v453
        %v3270 = vpop.f32.mrb[0].mxu0
        %v3271 = vadd.f32 0.0, %v3270
        %v3272 = vpop.f32.mrb[0].mxu0
        %3273 = vmatprep.mubr.f32.mxu0 0.0
        %3274 = vmatmul.mubr.f32.gmra.mrb[0].mxu0 %v456
        %v3275 = vpop.f32.mrb[0].mxu0
        %v3276 = vadd.f32 0.0, %v3275
        %v3277 = vpop.f32.mrb[0].mxu0
        %3278 = vmatprep.mubr.f32.mxu0 0.0
        %3279 = vmatmul.mubr.f32.gmra.mrb[0].mxu0 %v459
        %v3280 = vpop.f32.mrb[0].mxu0
        %v3281 = vadd.f32 0.0, %v3280
        %v3282 = vpop.f32.mrb[0].mxu0
        %3283 = vdwg.mxu0
        %s3284 = scalar_lea.vmem %s349, 64 [#allocation8]
        %v3285 = vld [vmem:[%s3284] sm:$0xff]
        %v3286 = vld [vmem:[%s3284 + $0x8] sm:$0xff]
        %v3287 = vld [vmem:[%s3284 + $0x10] sm:$0xff]
        %v3288 = vld [vmem:[%s3284 + $0x18] sm:$0xff]
        %v3290 = vsel %vm412, %v3056, 0
        %v3293 = vsel %vm412, %v3061, 0
        %v3296 = vsel %vm412, %v3066, 0
        %v3299 = vsel %vm412, %v3071, 0
        %3301 = vmatprep.subr.mxu0 0.0
        %3302 = vmatpush1.xpose.msra.mxu0 %v414
        %3303 = vmatprep.subr.mxu0 0.0
        %3304 = vmatpush1.xpose.msra.mxu0 %v417
        %3305 = vmatprep.subr.mxu0 0.0
        %3306 = vmatpush1.xpose.msra.mxu0 %v420
        %3307 = vmatprep.subr.mxu0 0.0
        %3308 = vmatpush1.xpose.msra.mxu0 %v423
        %3309 = vmatprep.subr.mxu0 0.0
        %3310 = vmatpush1.xpose.msra.mxu0 0.0
        %3311 = vmatprep.subr.mxu0 0.0
        %3312 = vmatpush1.xpose.msra.mxu0 0.0
        %3313 = vmatprep.subr.mxu0 0.0
        %3314 = vmatpush1.xpose.msra.mxu0 0.0
        %3315 = vmatprep.subr.mxu0 0.0
        %3316 = vmatpush1.xpose.msra.mxu0 0.0
        %3317 = vmatprep.subr.mxu0 0.0
        %3318 = vmatpush1.xpose.msra.mxu0 0.0
        %3319 = vmatprep.subr.mxu0 0.0
        %3320 = vmatpush1.xpose.msra.mxu0 0.0
        %3321 = vmatprep.subr.mxu0 0.0
        %3322 = vmatpush1.xpose.msra.mxu0 0.0
        %3323 = vmatprep.subr.mxu0 0.0
        %3324 = vmatpush1.xpose.msra.mxu0 0.0
        %3325 = vmatprep.subr.mxu0 0.0
        %3326 = vmatpush1.xpose.msra.mxu0 0.0
        %3327 = vmatprep.subr.mxu0 0.0
        %3328 = vmatpush1.xpose.msra.mxu0 0.0
        %3329 = vmatprep.subr.mxu0 0.0
        %3330 = vmatpush1.xpose.msra.mxu0 0.0
        %3331 = vmatprep.subr.mxu0 0.0
        %3332 = vmatpush1.xpose.msra.mxu0 0.0
        %3333 = vmatprep.subr.mxu0 0.0
        %3334 = vmatpush1.xpose.msra.mxu0 0.0
        %3335 = vmatprep.subr.mxu0 0.0
        %3336 = vmatpush1.xpose.msra.mxu0 0.0
        %3337 = vmatprep.subr.mxu0 0.0
        %3338 = vmatpush1.xpose.msra.mxu0 0.0
        %3339 = vmatprep.subr.mxu0 0.0
        %3340 = vmatpush1.xpose.msra.mxu0 0.0
        %3341 = vmatprep.subr.mxu0 0.0
        %3342 = vmatpush1.xpose.msra.mxu0 0.0
        %3343 = vmatprep.subr.mxu0 0.0
        %3344 = vmatpush1.xpose.msra.mxu0 0.0
        %3345 = vmatprep.subr.mxu0 0.0
        %3346 = vmatpush1.xpose.msra.mxu0 0.0
        %3347 = vmatprep.subr.mxu0 0.0
        %3348 = vmatpush1.xpose.msra.mxu0 0.0
        %3349 = vmatprep.subr.mxu0 0.0
        %3350 = vmatpush1.xpose.msra.mxu0 0.0
        %3351 = vmatprep.subr.mxu0 0.0
        %3352 = vmatpush1.xpose.msra.mxu0 0.0
        %3353 = vmatprep.subr.mxu0 0.0
        %3354 = vmatpush1.xpose.msra.mxu0 0.0
        %3355 = vmatprep.subr.mxu0 0.0
        %3356 = vmatpush1.xpose.msra.mxu0 0.0
        %3357 = vmatprep.subr.mxu0 0.0
        %3358 = vmatpush1.xpose.msra.mxu0 0.0
        %3359 = vmatprep.subr.mxu0 0.0
        %3360 = vmatpush1.xpose.msra.mxu0 0.0
        %3361 = vmatprep.subr.mxu0 0.0
        %3362 = vmatpush1.xpose.msra.mxu0 0.0
        %3363 = vmatprep.subr.mxu0 0.0
        %3364 = vmatpush1.xpose.msra.mxu0 0.0
        %3365 = vmatprep.mubr.f32.mxu0 0.0
        %3366 = vmatmul.mubr.f32.gmra.mrb[0].mxu0 %v3290
        %v3367 = vpop.f32.mrb[0].mxu0
        %v3368 = vadd.f32 %v3285, %v3367
        %v3369 = vpop.f32.mrb[0].mxu0
        %3370 = vmatprep.mubr.f32.mxu0 0.0
        %3371 = vmatmul.mubr.f32.gmra.mrb[0].mxu0 %v3293
        %v3372 = vpop.f32.mrb[0].mxu0
        %v3373 = vadd.f32 %v3286, %v3372
        %v3374 = vpop.f32.mrb[0].mxu0
        %3375 = vmatprep.mubr.f32.mxu0 0.0
        %3376 = vmatmul.mubr.f32.gmra.mrb[0].mxu0 %v3296
        %v3377 = vpop.f32.mrb[0].mxu0
        %v3378 = vadd.f32 %v3287, %v3377
        %v3379 = vpop.f32.mrb[0].mxu0
        %3380 = vmatprep.mubr.f32.mxu0 0.0
        %3381 = vmatmul.mubr.f32.gmra.mrb[0].mxu0 %v3299
        %v3382 = vpop.f32.mrb[0].mxu0
        %v3383 = vadd.f32 %v3288, %v3382
        %v3384 = vpop.f32.mrb[0].mxu0
        %3385 = vdwg.mxu0
        %v3387 = vsel %vm412, %v3076, 0
        %v3390 = vsel %vm412, %v3081, 0
        %v3393 = vsel %vm412, %v3086, 0
        %v3396 = vsel %vm412, %v3091, 0
        %3398 = vmatprep.subr.mxu0 0.0
        %3399 = vmatpush1.xpose.msra.mxu0 %v426
        %3400 = vmatprep.subr.mxu0 0.0
        %3401 = vmatpush1.xpose.msra.mxu0 %v429
        %3402 = vmatprep.subr.mxu0 0.0
        %3403 = vmatpush1.xpose.msra.mxu0 %v432
        %3404 = vmatprep.subr.mxu0 0.0
        %3405 = vmatpush1.xpose.msra.mxu0 %v435
        %3406 = vmatprep.subr.mxu0 0.0
        %3407 = vmatpush1.xpose.msra.mxu0 0.0
        %3408 = vmatprep.subr.mxu0 0.0
        %3409 = vmatpush1.xpose.msra.mxu0 0.0
        %3410 = vmatprep.subr.mxu0 0.0
        %3411 = vmatpush1.xpose.msra.mxu0 0.0
        %3412 = vmatprep.subr.mxu0 0.0
        %3413 = vmatpush1.xpose.msra.mxu0 0.0
        %3414 = vmatprep.subr.mxu0 0.0
        %3415 = vmatpush1.xpose.msra.mxu0 0.0
        %3416 = vmatprep.subr.mxu0 0.0
        %3417 = vmatpush1.xpose.msra.mxu0 0.0
        %3418 = vmatprep.subr.mxu0 0.0
        %3419 = vmatpush1.xpose.msra.mxu0 0.0
        %3420 = vmatprep.subr.mxu0 0.0
        %3421 = vmatpush1.xpose.msra.mxu0 0.0
        %3422 = vmatprep.subr.mxu0 0.0
        %3423 = vmatpush1.xpose.msra.mxu0 0.0
        %3424 = vmatprep.subr.mxu0 0.0
        %3425 = vmatpush1.xpose.msra.mxu0 0.0
        %3426 = vmatprep.subr.mxu0 0.0
        %3427 = vmatpush1.xpose.msra.mxu0 0.0
        %3428 = vmatprep.subr.mxu0 0.0
        %3429 = vmatpush1.xpose.msra.mxu0 0.0
        %3430 = vmatprep.subr.mxu0 0.0
        %3431 = vmatpush1.xpose.msra.mxu0 0.0
        %3432 = vmatprep.subr.mxu0 0.0
        %3433 = vmatpush1.xpose.msra.mxu0 0.0
        %3434 = vmatprep.subr.mxu0 0.0
        %3435 = vmatpush1.xpose.msra.mxu0 0.0
        %3436 = vmatprep.subr.mxu0 0.0
        %3437 = vmatpush1.xpose.msra.mxu0 0.0
        %3438 = vmatprep.subr.mxu0 0.0
        %3439 = vmatpush1.xpose.msra.mxu0 0.0
        %3440 = vmatprep.subr.mxu0 0.0
        %3441 = vmatpush1.xpose.msra.mxu0 0.0
        %3442 = vmatprep.subr.mxu0 0.0
        %3443 = vmatpush1.xpose.msra.mxu0 0.0
        %3444 = vmatprep.subr.mxu0 0.0
        %3445 = vmatpush1.xpose.msra.mxu0 0.0
        %3446 = vmatprep.subr.mxu0 0.0
        %3447 = vmatpush1.xpose.msra.mxu0 0.0
        %3448 = vmatprep.subr.mxu0 0.0
        %3449 = vmatpush1.xpose.msra.mxu0 0.0
        %3450 = vmatprep.subr.mxu0 0.0
        %3451 = vmatpush1.xpose.msra.mxu0 0.0
        %3452 = vmatprep.subr.mxu0 0.0
        %3453 = vmatpush1.xpose.msra.mxu0 0.0
        %3454 = vmatprep.subr.mxu0 0.0
        %3455 = vmatpush1.xpose.msra.mxu0 0.0
        %3456 = vmatprep.subr.mxu0 0.0
        %3457 = vmatpush1.xpose.msra.mxu0 0.0
        %3458 = vmatprep.subr.mxu0 0.0
        %3459 = vmatpush1.xpose.msra.mxu0 0.0
        %3460 = vmatprep.subr.mxu0 0.0
        %3461 = vmatpush1.xpose.msra.mxu0 0.0
        %3462 = vmatprep.mubr.f32.mxu0 0.0
        %3463 = vmatmul.mubr.f32.gmra.mrb[0].mxu0 %v3387
        %v3464 = vpop.f32.mrb[0].mxu0
        %v3465 = vadd.f32 %v3285, %v3464
        %v3466 = vpop.f32.mrb[0].mxu0
        %3467 = vmatprep.mubr.f32.mxu0 0.0
        %3468 = vmatmul.mubr.f32.gmra.mrb[0].mxu0 %v3390
        %v3469 = vpop.f32.mrb[0].mxu0
        %v3470 = vadd.f32 %v3286, %v3469
        %v3471 = vpop.f32.mrb[0].mxu0
        %3472 = vmatprep.mubr.f32.mxu0 0.0
        %3473 = vmatmul.mubr.f32.gmra.mrb[0].mxu0 %v3393
        %v3474 = vpop.f32.mrb[0].mxu0
        %v3475 = vadd.f32 %v3287, %v3474
        %v3476 = vpop.f32.mrb[0].mxu0
        %3477 = vmatprep.mubr.f32.mxu0 0.0
        %3478 = vmatmul.mubr.f32.gmra.mrb[0].mxu0 %v3396
        %v3479 = vpop.f32.mrb[0].mxu0
        %v3480 = vadd.f32 %v3288, %v3479
        %v3481 = vpop.f32.mrb[0].mxu0
        %3482 = vdwg.mxu0
        %v3484 = vsel %vm412, %v3096, 0
        %v3487 = vsel %vm412, %v3101, 0
        %v3490 = vsel %vm412, %v3106, 0
        %v3493 = vsel %vm412, %v3111, 0
        %3495 = vmatprep.subr.mxu0 0.0
        %3496 = vmatpush1.xpose.msra.mxu0 %v438
        %3497 = vmatprep.subr.mxu0 0.0
        %3498 = vmatpush1.xpose.msra.mxu0 %v441
        %3499 = vmatprep.subr.mxu0 0.0
        %3500 = vmatpush1.xpose.msra.mxu0 %v444
        %3501 = vmatprep.subr.mxu0 0.0
        %3502 = vmatpush1.xpose.msra.mxu0 %v447
        %3503 = vmatprep.subr.mxu0 0.0
        %3504 = vmatpush1.xpose.msra.mxu0 0.0
        %3505 = vmatprep.subr.mxu0 0.0
        %3506 = vmatpush1.xpose.msra.mxu0 0.0
        %3507 = vmatprep.subr.mxu0 0.0
        %3508 = vmatpush1.xpose.msra.mxu0 0.0
        %3509 = vmatprep.subr.mxu0 0.0
        %3510 = vmatpush1.xpose.msra.mxu0 0.0
        %3511 = vmatprep.subr.mxu0 0.0
        %3512 = vmatpush1.xpose.msra.mxu0 0.0
        %3513 = vmatprep.subr.mxu0 0.0
        %3514 = vmatpush1.xpose.msra.mxu0 0.0
        %3515 = vmatprep.subr.mxu0 0.0
        %3516 = vmatpush1.xpose.msra.mxu0 0.0
        %3517 = vmatprep.subr.mxu0 0.0
        %3518 = vmatpush1.xpose.msra.mxu0 0.0
        %3519 = vmatprep.subr.mxu0 0.0
        %3520 = vmatpush1.xpose.msra.mxu0 0.0
        %3521 = vmatprep.subr.mxu0 0.0
        %3522 = vmatpush1.xpose.msra.mxu0 0.0
        %3523 = vmatprep.subr.mxu0 0.0
        %3524 = vmatpush1.xpose.msra.mxu0 0.0
        %3525 = vmatprep.subr.mxu0 0.0
        %3526 = vmatpush1.xpose.msra.mxu0 0.0
        %3527 = vmatprep.subr.mxu0 0.0
        %3528 = vmatpush1.xpose.msra.mxu0 0.0
        %3529 = vmatprep.subr.mxu0 0.0
        %3530 = vmatpush1.xpose.msra.mxu0 0.0
        %3531 = vmatprep.subr.mxu0 0.0
        %3532 = vmatpush1.xpose.msra.mxu0 0.0
        %3533 = vmatprep.subr.mxu0 0.0
        %3534 = vmatpush1.xpose.msra.mxu0 0.0
        %3535 = vmatprep.subr.mxu0 0.0
        %3536 = vmatpush1.xpose.msra.mxu0 0.0
        %3537 = vmatprep.subr.mxu0 0.0
        %3538 = vmatpush1.xpose.msra.mxu0 0.0
        %3539 = vmatprep.subr.mxu0 0.0
        %3540 = vmatpush1.xpose.msra.mxu0 0.0
        %3541 = vmatprep.subr.mxu0 0.0
        %3542 = vmatpush1.xpose.msra.mxu0 0.0
        %3543 = vmatprep.subr.mxu0 0.0
        %3544 = vmatpush1.xpose.msra.mxu0 0.0
        %3545 = vmatprep.subr.mxu0 0.0
        %3546 = vmatpush1.xpose.msra.mxu0 0.0
        %3547 = vmatprep.subr.mxu0 0.0
        %3548 = vmatpush1.xpose.msra.mxu0 0.0
        %3549 = vmatprep.subr.mxu0 0.0
        %3550 = vmatpush1.xpose.msra.mxu0 0.0
        %3551 = vmatprep.subr.mxu0 0.0
        %3552 = vmatpush1.xpose.msra.mxu0 0.0
        %3553 = vmatprep.subr.mxu0 0.0
        %3554 = vmatpush1.xpose.msra.mxu0 0.0
        %3555 = vmatprep.subr.mxu0 0.0
        %3556 = vmatpush1.xpose.msra.mxu0 0.0
        %3557 = vmatprep.subr.mxu0 0.0
        %3558 = vmatpush1.xpose.msra.mxu0 0.0
        %3559 = vmatprep.mubr.f32.mxu0 0.0
        %3560 = vmatmul.mubr.f32.gmra.mrb[0].mxu0 %v3484
        %v3561 = vpop.f32.mrb[0].mxu0
        %v3562 = vadd.f32 %v3285, %v3561
        %v3563 = vpop.f32.mrb[0].mxu0
        %3564 = vmatprep.mubr.f32.mxu0 0.0
        %3565 = vmatmul.mubr.f32.gmra.mrb[0].mxu0 %v3487
        %v3566 = vpop.f32.mrb[0].mxu0
        %v3567 = vadd.f32 %v3286, %v3566
        %v3568 = vpop.f32.mrb[0].mxu0
        %3569 = vmatprep.mubr.f32.mxu0 0.0
        %3570 = vmatmul.mubr.f32.gmra.mrb[0].mxu0 %v3490
        %v3571 = vpop.f32.mrb[0].mxu0
        %v3572 = vadd.f32 %v3287, %v3571
        %v3573 = vpop.f32.mrb[0].mxu0
        %3574 = vmatprep.mubr.f32.mxu0 0.0
        %3575 = vmatmul.mubr.f32.gmra.mrb[0].mxu0 %v3493
        %v3576 = vpop.f32.mrb[0].mxu0
        %v3577 = vadd.f32 %v3288, %v3576
        %v3578 = vpop.f32.mrb[0].mxu0
        %3579 = vdwg.mxu0
        %v3581 = vsel %vm412, %v3116, 0
        %v3584 = vsel %vm412, %v3121, 0
        %v3587 = vsel %vm412, %v3126, 0
        %v3590 = vsel %vm412, %v3131, 0
        %3592 = vmatprep.subr.mxu0 0.0
        %3593 = vmatpush1.xpose.msra.mxu0 %v450
        %3594 = vmatprep.subr.mxu0 0.0
        %3595 = vmatpush1.xpose.msra.mxu0 %v453
        %3596 = vmatprep.subr.mxu0 0.0
        %3597 = vmatpush1.xpose.msra.mxu0 %v456
        %3598 = vmatprep.subr.mxu0 0.0
        %3599 = vmatpush1.xpose.msra.mxu0 %v459
        %3600 = vmatprep.subr.mxu0 0.0
        %3601 = vmatpush1.xpose.msra.mxu0 0.0
        %3602 = vmatprep.subr.mxu0 0.0
        %3603 = vmatpush1.xpose.msra.mxu0 0.0
        %3604 = vmatprep.subr.mxu0 0.0
        %3605 = vmatpush1.xpose.msra.mxu0 0.0
        %3606 = vmatprep.subr.mxu0 0.0
        %3607 = vmatpush1.xpose.msra.mxu0 0.0
        %3608 = vmatprep.subr.mxu0 0.0
        %3609 = vmatpush1.xpose.msra.mxu0 0.0
        %3610 = vmatprep.subr.mxu0 0.0
        %3611 = vmatpush1.xpose.msra.mxu0 0.0
        %3612 = vmatprep.subr.mxu0 0.0
        %3613 = vmatpush1.xpose.msra.mxu0 0.0
        %3614 = vmatprep.subr.mxu0 0.0
        %3615 = vmatpush1.xpose.msra.mxu0 0.0
        %3616 = vmatprep.subr.mxu0 0.0
        %3617 = vmatpush1.xpose.msra.mxu0 0.0
        %3618 = vmatprep.subr.mxu0 0.0
        %3619 = vmatpush1.xpose.msra.mxu0 0.0
        %3620 = vmatprep.subr.mxu0 0.0
        %3621 = vmatpush1.xpose.msra.mxu0 0.0
        %3622 = vmatprep.subr.mxu0 0.0
        %3623 = vmatpush1.xpose.msra.mxu0 0.0
        %3624 = vmatprep.subr.mxu0 0.0
        %3625 = vmatpush1.xpose.msra.mxu0 0.0
        %3626 = vmatprep.subr.mxu0 0.0
        %3627 = vmatpush1.xpose.msra.mxu0 0.0
        %3628 = vmatprep.subr.mxu0 0.0
        %3629 = vmatpush1.xpose.msra.mxu0 0.0
        %3630 = vmatprep.subr.mxu0 0.0
        %3631 = vmatpush1.xpose.msra.mxu0 0.0
        %3632 = vmatprep.subr.mxu0 0.0
        %3633 = vmatpush1.xpose.msra.mxu0 0.0
        %3634 = vmatprep.subr.mxu0 0.0
        %3635 = vmatpush1.xpose.msra.mxu0 0.0
        %3636 = vmatprep.subr.mxu0 0.0
        %3637 = vmatpush1.xpose.msra.mxu0 0.0
        %3638 = vmatprep.subr.mxu0 0.0
        %3639 = vmatpush1.xpose.msra.mxu0 0.0
        %3640 = vmatprep.subr.mxu0 0.0
        %3641 = vmatpush1.xpose.msra.mxu0 0.0
        %3642 = vmatprep.subr.mxu0 0.0
        %3643 = vmatpush1.xpose.msra.mxu0 0.0
        %3644 = vmatprep.subr.mxu0 0.0
        %3645 = vmatpush1.xpose.msra.mxu0 0.0
        %3646 = vmatprep.subr.mxu0 0.0
        %3647 = vmatpush1.xpose.msra.mxu0 0.0
        %3648 = vmatprep.subr.mxu0 0.0
        %3649 = vmatpush1.xpose.msra.mxu0 0.0
        %3650 = vmatprep.subr.mxu0 0.0
        %3651 = vmatpush1.xpose.msra.mxu0 0.0
        %3652 = vmatprep.subr.mxu0 0.0
        %3653 = vmatpush1.xpose.msra.mxu0 0.0
        %3654 = vmatprep.subr.mxu0 0.0
        %3655 = vmatpush1.xpose.msra.mxu0 0.0
        %3656 = vmatprep.mubr.f32.mxu0 0.0
        %3657 = vmatmul.mubr.f32.gmra.mrb[0].mxu0 %v3581
        %v3658 = vpop.f32.mrb[0].mxu0
        %v3659 = vadd.f32 %v3285, %v3658
        %v3660 = vpop.f32.mrb[0].mxu0
        %3661 = vmatprep.mubr.f32.mxu0 0.0
        %3662 = vmatmul.mubr.f32.gmra.mrb[0].mxu0 %v3584
        %v3663 = vpop.f32.mrb[0].mxu0
        %v3664 = vadd.f32 %v3286, %v3663
        %v3665 = vpop.f32.mrb[0].mxu0
        %3666 = vmatprep.mubr.f32.mxu0 0.0
        %3667 = vmatmul.mubr.f32.gmra.mrb[0].mxu0 %v3587
        %v3668 = vpop.f32.mrb[0].mxu0
        %v3669 = vadd.f32 %v3287, %v3668
        %v3670 = vpop.f32.mrb[0].mxu0
        %3671 = vmatprep.mubr.f32.mxu0 0.0
        %3672 = vmatmul.mubr.f32.gmra.mrb[0].mxu0 %v3590
        %v3673 = vpop.f32.mrb[0].mxu0
        %v3674 = vadd.f32 %v3288, %v3673
        %v3675 = vpop.f32.mrb[0].mxu0
        %3676 = vdwg.mxu0
        %v3677 = vsel %vm412, %v3368, -inf
        %3678 = vmax.xlane.f32.xlu0 %v3677
        %v3679 = vpop.xlane.xlu0 %3678
        %v3680 = vsel %vm412, %v3373, -inf
        %3681 = vmax.xlane.f32.xlu0 %v3680
        %v3682 = vpop.xlane.xlu0 %3681
        %v3683 = vsel %vm412, %v3378, -inf
        %3684 = vmax.xlane.f32.xlu0 %v3683
        %v3685 = vpop.xlane.xlu0 %3684
        %v3686 = vsel %vm412, %v3383, -inf
        %3687 = vmax.xlane.f32.xlu0 %v3686
        %v3688 = vpop.xlane.xlu0 %3687
        %v3689 = vsel %vm412, %v3465, -inf
        %3690 = vmax.xlane.f32.xlu0 %v3689
        %v3691 = vpop.xlane.xlu0 %3690
        %v3692 = vsel %vm412, %v3470, -inf
        %3693 = vmax.xlane.f32.xlu0 %v3692
        %v3694 = vpop.xlane.xlu0 %3693
        %v3695 = vsel %vm412, %v3475, -inf
        %3696 = vmax.xlane.f32.xlu0 %v3695
        %v3697 = vpop.xlane.xlu0 %3696
        %v3698 = vsel %vm412, %v3480, -inf
        %3699 = vmax.xlane.f32.xlu0 %v3698
        %v3700 = vpop.xlane.xlu0 %3699
        %v3701 = vsel %vm412, %v3562, -inf
        %3702 = vmax.xlane.f32.xlu0 %v3701
        %v3703 = vpop.xlane.xlu0 %3702
        %v3704 = vsel %vm412, %v3567, -inf
        %3705 = vmax.xlane.f32.xlu0 %v3704
        %v3706 = vpop.xlane.xlu0 %3705
        %v3707 = vsel %vm412, %v3572, -inf
        %3708 = vmax.xlane.f32.xlu0 %v3707
        %v3709 = vpop.xlane.xlu0 %3708
        %v3710 = vsel %vm412, %v3577, -inf
        %3711 = vmax.xlane.f32.xlu0 %v3710
        %v3712 = vpop.xlane.xlu0 %3711
        %v3713 = vsel %vm412, %v3659, -inf
        %3714 = vmax.xlane.f32.xlu0 %v3713
        %v3715 = vpop.xlane.xlu0 %3714
        %v3716 = vsel %vm412, %v3664, -inf
        %3717 = vmax.xlane.f32.xlu0 %v3716
        %v3718 = vpop.xlane.xlu0 %3717
        %v3719 = vsel %vm412, %v3669, -inf
        %3720 = vmax.xlane.f32.xlu0 %v3719
        %v3721 = vpop.xlane.xlu0 %3720
        %v3722 = vsel %vm412, %v3674, -inf
        %3723 = vmax.xlane.f32.xlu0 %v3722
        %v3724 = vpop.xlane.xlu0 %3723
        %v3725 = vsub.f32 %v3368, %v3679
        %v3726 = vsub.f32 %v3373, %v3682
        %v3727 = vsub.f32 %v3378, %v3685
        %v3728 = vsub.f32 %v3383, %v3688
        %v3729 = vsub.f32 %v3465, %v3691
        %v3730 = vsub.f32 %v3470, %v3694
        %v3731 = vsub.f32 %v3475, %v3697
        %v3732 = vsub.f32 %v3480, %v3700
        %v3733 = vsub.f32 %v3562, %v3703
        %v3734 = vsub.f32 %v3567, %v3706
        %v3735 = vsub.f32 %v3572, %v3709
        %v3736 = vsub.f32 %v3577, %v3712
        %v3737 = vsub.f32 %v3659, %v3715
        %v3738 = vsub.f32 %v3664, %v3718
        %v3739 = vsub.f32 %v3669, %v3721
        %v3740 = vsub.f32 %v3674, %v3724
        %v3741 = vmul.f32 %v3725, 1.442695
        %v3742 = vpow.pop %v3741
        %v3743 = vmul.f32 %v3726, 1.442695
        %v3744 = vpow.pop %v3743
        %v3745 = vmul.f32 %v3727, 1.442695
        %v3746 = vpow.pop %v3745
        %v3747 = vmul.f32 %v3728, 1.442695
        %v3748 = vpow.pop %v3747
        %v3749 = vmul.f32 %v3729, 1.442695
        %v3750 = vpow.pop %v3749
        %v3751 = vmul.f32 %v3730, 1.442695
        %v3752 = vpow.pop %v3751
        %v3753 = vmul.f32 %v3731, 1.442695
        %v3754 = vpow.pop %v3753
        %v3755 = vmul.f32 %v3732, 1.442695
        %v3756 = vpow.pop %v3755
        %v3757 = vmul.f32 %v3733, 1.442695
        %v3758 = vpow.pop %v3757
        %v3759 = vmul.f32 %v3734, 1.442695
        %v3760 = vpow.pop %v3759
        %v3761 = vmul.f32 %v3735, 1.442695
        %v3762 = vpow.pop %v3761
        %v3763 = vmul.f32 %v3736, 1.442695
        %v3764 = vpow.pop %v3763
        %v3765 = vmul.f32 %v3737, 1.442695
        %v3766 = vpow.pop %v3765
        %v3767 = vmul.f32 %v3738, 1.442695
        %v3768 = vpow.pop %v3767
        %v3769 = vmul.f32 %v3739, 1.442695
        %v3770 = vpow.pop %v3769
        %v3771 = vmul.f32 %v3740, 1.442695
        %v3772 = vpow.pop %v3771
        %v3773 = vsel %vm412, %v3742, 0.0
        %3774 = vadd.xlane.f32.xlu0 %v3773
        %v3775 = vpop.xlane.xlu0 %3774
        %v3776 = vsel %vm412, %v3744, 0.0
        %3777 = vadd.xlane.f32.xlu0 %v3776
        %v3778 = vpop.xlane.xlu0 %3777
        %v3779 = vsel %vm412, %v3746, 0.0
        %3780 = vadd.xlane.f32.xlu0 %v3779
        %v3781 = vpop.xlane.xlu0 %3780
        %v3782 = vsel %vm412, %v3748, 0.0
        %3783 = vadd.xlane.f32.xlu0 %v3782
        %v3784 = vpop.xlane.xlu0 %3783
        %v3785 = vsel %vm412, %v3750, 0.0
        %3786 = vadd.xlane.f32.xlu0 %v3785
        %v3787 = vpop.xlane.xlu0 %3786
        %v3788 = vsel %vm412, %v3752, 0.0
        %3789 = vadd.xlane.f32.xlu0 %v3788
        %v3790 = vpop.xlane.xlu0 %3789
        %v3791 = vsel %vm412, %v3754, 0.0
        %3792 = vadd.xlane.f32.xlu0 %v3791
        %v3793 = vpop.xlane.xlu0 %3792
        %v3794 = vsel %vm412, %v3756, 0.0
        %3795 = vadd.xlane.f32.xlu0 %v3794
        %v3796 = vpop.xlane.xlu0 %3795
        %v3797 = vsel %vm412, %v3758, 0.0
        %3798 = vadd.xlane.f32.xlu0 %v3797
        %v3799 = vpop.xlane.xlu0 %3798
        %v3800 = vsel %vm412, %v3760, 0.0
        %3801 = vadd.xlane.f32.xlu0 %v3800
        %v3802 = vpop.xlane.xlu0 %3801
        %v3803 = vsel %vm412, %v3762, 0.0
        %3804 = vadd.xlane.f32.xlu0 %v3803
        %v3805 = vpop.xlane.xlu0 %3804
        %v3806 = vsel %vm412, %v3764, 0.0
        %3807 = vadd.xlane.f32.xlu0 %v3806
        %v3808 = vpop.xlane.xlu0 %3807
        %v3809 = vsel %vm412, %v3766, 0.0
        %3810 = vadd.xlane.f32.xlu0 %v3809
        %v3811 = vpop.xlane.xlu0 %3810
        %v3812 = vsel %vm412, %v3768, 0.0
        %3813 = vadd.xlane.f32.xlu0 %v3812
        %v3814 = vpop.xlane.xlu0 %3813
        %v3815 = vsel %vm412, %v3770, 0.0
        %3816 = vadd.xlane.f32.xlu0 %v3815
        %v3817 = vpop.xlane.xlu0 %3816
        %v3818 = vsel %vm412, %v3772, 0.0
        %3819 = vadd.xlane.f32.xlu0 %v3818
        %v3820 = vpop.xlane.xlu0 %3819
        %v3821 = vrcp.pop %v3775
        %v3822 = vrcp.pop %v3778
        %v3823 = vrcp.pop %v3781
        %v3824 = vrcp.pop %v3784
        %v3825 = vrcp.pop %v3787
        %v3826 = vrcp.pop %v3790
        %v3827 = vrcp.pop %v3793
        %v3828 = vrcp.pop %v3796
        %v3829 = vrcp.pop %v3799
        %v3830 = vrcp.pop %v3802
        %v3831 = vrcp.pop %v3805
        %v3832 = vrcp.pop %v3808
        %v3833 = vrcp.pop %v3811
        %v3834 = vrcp.pop %v3814
        %v3835 = vrcp.pop %v3817
        %v3836 = vrcp.pop %v3820
        %v3837 = vmul.f32 %v3742, %v3821
        %v3838 = vmul.f32 %v3744, %v3822
        %v3839 = vmul.f32 %v3746, %v3823
        %v3840 = vmul.f32 %v3748, %v3824
        %v3841 = vmul.f32 %v3750, %v3825
        %v3842 = vmul.f32 %v3752, %v3826
        %v3843 = vmul.f32 %v3754, %v3827
        %v3844 = vmul.f32 %v3756, %v3828
        %v3845 = vmul.f32 %v3758, %v3829
        %v3846 = vmul.f32 %v3760, %v3830
        %v3847 = vmul.f32 %v3762, %v3831
        %v3848 = vmul.f32 %v3764, %v3832
        %v3849 = vmul.f32 %v3766, %v3833
        %v3850 = vmul.f32 %v3768, %v3834
        %v3851 = vmul.f32 %v3770, %v3835
        %v3852 = vmul.f32 %v3772, %v3836
        %v3854 = vsel %vm412, %v3837, 0
        %v3857 = vsel %vm412, %v3838, 0
        %v3860 = vsel %vm412, %v3839, 0
        %v3863 = vsel %vm412, %v3840, 0
        %3865 = vmatprep.subr.mxu0 0.0
        %3866 = vmatpush1.msra.mxu0 %v3206
        %3867 = vmatprep.subr.mxu0 0.0
        %3868 = vmatpush1.msra.mxu0 %v3211
        %3869 = vmatprep.subr.mxu0 0.0
        %3870 = vmatpush1.msra.mxu0 %v3216
        %3871 = vmatprep.subr.mxu0 0.0
        %3872 = vmatpush1.msra.mxu0 %v3221
        %3873 = vmatprep.subr.mxu0 0.0
        %3874 = vmatpush1.msra.mxu0 0.0
        %3875 = vmatprep.subr.mxu0 0.0
        %3876 = vmatpush1.msra.mxu0 0.0
        %3877 = vmatprep.subr.mxu0 0.0
        %3878 = vmatpush1.msra.mxu0 0.0
        %3879 = vmatprep.subr.mxu0 0.0
        %3880 = vmatpush1.msra.mxu0 0.0
        %3881 = vmatprep.subr.mxu0 0.0
        %3882 = vmatpush1.msra.mxu0 0.0
        %3883 = vmatprep.subr.mxu0 0.0
        %3884 = vmatpush1.msra.mxu0 0.0
        %3885 = vmatprep.subr.mxu0 0.0
        %3886 = vmatpush1.msra.mxu0 0.0
        %3887 = vmatprep.subr.mxu0 0.0
        %3888 = vmatpush1.msra.mxu0 0.0
        %3889 = vmatprep.subr.mxu0 0.0
        %3890 = vmatpush1.msra.mxu0 0.0
        %3891 = vmatprep.subr.mxu0 0.0
        %3892 = vmatpush1.msra.mxu0 0.0
        %3893 = vmatprep.subr.mxu0 0.0
        %3894 = vmatpush1.msra.mxu0 0.0
        %3895 = vmatprep.subr.mxu0 0.0
        %3896 = vmatpush1.msra.mxu0 0.0
        %3897 = vmatprep.subr.mxu0 0.0
        %3898 = vmatpush1.msra.mxu0 0.0
        %3899 = vmatprep.subr.mxu0 0.0
        %3900 = vmatpush1.msra.mxu0 0.0
        %3901 = vmatprep.subr.mxu0 0.0
        %3902 = vmatpush1.msra.mxu0 0.0
        %3903 = vmatprep.subr.mxu0 0.0
        %3904 = vmatpush1.msra.mxu0 0.0
        %3905 = vmatprep.subr.mxu0 0.0
        %3906 = vmatpush1.msra.mxu0 0.0
        %3907 = vmatprep.subr.mxu0 0.0
        %3908 = vmatpush1.msra.mxu0 0.0
        %3909 = vmatprep.subr.mxu0 0.0
        %3910 = vmatpush1.msra.mxu0 0.0
        %3911 = vmatprep.subr.mxu0 0.0
        %3912 = vmatpush1.msra.mxu0 0.0
        %3913 = vmatprep.subr.mxu0 0.0
        %3914 = vmatpush1.msra.mxu0 0.0
        %3915 = vmatprep.subr.mxu0 0.0
        %3916 = vmatpush1.msra.mxu0 0.0
        %3917 = vmatprep.subr.mxu0 0.0
        %3918 = vmatpush1.msra.mxu0 0.0
        %3919 = vmatprep.subr.mxu0 0.0
        %3920 = vmatpush1.msra.mxu0 0.0
        %3921 = vmatprep.subr.mxu0 0.0
        %3922 = vmatpush1.msra.mxu0 0.0
        %3923 = vmatprep.subr.mxu0 0.0
        %3924 = vmatpush1.msra.mxu0 0.0
        %3925 = vmatprep.subr.mxu0 0.0
        %3926 = vmatpush1.msra.mxu0 0.0
        %3927 = vmatprep.subr.mxu0 0.0
        %3928 = vmatpush1.msra.mxu0 0.0
        %3929 = vmatprep.mubr.f32.mxu0 0.0
        %3930 = vmatmul.mubr.f32.gmra.mrb[0].mxu0 %v3854
        %v3931 = vpop.f32.mrb[0].mxu0
        %v3932 = vadd.f32 0.0, %v3931
        %v3933 = vpop.f32.mrb[0].mxu0
        %3934 = vmatprep.mubr.f32.mxu0 0.0
        %3935 = vmatmul.mubr.f32.gmra.mrb[0].mxu0 %v3857
        %v3936 = vpop.f32.mrb[0].mxu0
        %v3937 = vadd.f32 0.0, %v3936
        %v3938 = vpop.f32.mrb[0].mxu0
        %3939 = vmatprep.mubr.f32.mxu0 0.0
        %3940 = vmatmul.mubr.f32.gmra.mrb[0].mxu0 %v3860
        %v3941 = vpop.f32.mrb[0].mxu0
        %v3942 = vadd.f32 0.0, %v3941
        %v3943 = vpop.f32.mrb[0].mxu0
        %3944 = vmatprep.mubr.f32.mxu0 0.0
        %3945 = vmatmul.mubr.f32.gmra.mrb[0].mxu0 %v3863
        %v3946 = vpop.f32.mrb[0].mxu0
        %v3947 = vadd.f32 0.0, %v3946
        %v3948 = vpop.f32.mrb[0].mxu0
        %3949 = vdwg.mxu0
        %v3951 = vsel %vm412, %v3841, 0
        %v3954 = vsel %vm412, %v3842, 0
        %v3957 = vsel %vm412, %v3843, 0
        %v3960 = vsel %vm412, %v3844, 0
        %3962 = vmatprep.subr.mxu0 0.0
        %3963 = vmatpush1.msra.mxu0 %v3226
        %3964 = vmatprep.subr.mxu0 0.0
        %3965 = vmatpush1.msra.mxu0 %v3231
        %3966 = vmatprep.subr.mxu0 0.0
        %3967 = vmatpush1.msra.mxu0 %v3236
        %3968 = vmatprep.subr.mxu0 0.0
        %3969 = vmatpush1.msra.mxu0 %v3241
        %3970 = vmatprep.subr.mxu0 0.0
        %3971 = vmatpush1.msra.mxu0 0.0
        %3972 = vmatprep.subr.mxu0 0.0
        %3973 = vmatpush1.msra.mxu0 0.0
        %3974 = vmatprep.subr.mxu0 0.0
        %3975 = vmatpush1.msra.mxu0 0.0
        %3976 = vmatprep.subr.mxu0 0.0
        %3977 = vmatpush1.msra.mxu0 0.0
        %3978 = vmatprep.subr.mxu0 0.0
        %3979 = vmatpush1.msra.mxu0 0.0
        %3980 = vmatprep.subr.mxu0 0.0
        %3981 = vmatpush1.msra.mxu0 0.0
        %3982 = vmatprep.subr.mxu0 0.0
        %3983 = vmatpush1.msra.mxu0 0.0
        %3984 = vmatprep.subr.mxu0 0.0
        %3985 = vmatpush1.msra.mxu0 0.0
        %3986 = vmatprep.subr.mxu0 0.0
        %3987 = vmatpush1.msra.mxu0 0.0
        %3988 = vmatprep.subr.mxu0 0.0
        %3989 = vmatpush1.msra.mxu0 0.0
        %3990 = vmatprep.subr.mxu0 0.0
        %3991 = vmatpush1.msra.mxu0 0.0
        %3992 = vmatprep.subr.mxu0 0.0
        %3993 = vmatpush1.msra.mxu0 0.0
        %3994 = vmatprep.subr.mxu0 0.0
        %3995 = vmatpush1.msra.mxu0 0.0
        %3996 = vmatprep.subr.mxu0 0.0
        %3997 = vmatpush1.msra.mxu0 0.0
        %3998 = vmatprep.subr.mxu0 0.0
        %3999 = vmatpush1.msra.mxu0 0.0
        %4000 = vmatprep.subr.mxu0 0.0
        %4001 = vmatpush1.msra.mxu0 0.0
        %4002 = vmatprep.subr.mxu0 0.0
        %4003 = vmatpush1.msra.mxu0 0.0
        %4004 = vmatprep.subr.mxu0 0.0
        %4005 = vmatpush1.msra.mxu0 0.0
        %4006 = vmatprep.subr.mxu0 0.0
        %4007 = vmatpush1.msra.mxu0 0.0
        %4008 = vmatprep.subr.mxu0 0.0
        %4009 = vmatpush1.msra.mxu0 0.0
        %4010 = vmatprep.subr.mxu0 0.0
        %4011 = vmatpush1.msra.mxu0 0.0
        %4012 = vmatprep.subr.mxu0 0.0
        %4013 = vmatpush1.msra.mxu0 0.0
        %4014 = vmatprep.subr.mxu0 0.0
        %4015 = vmatpush1.msra.mxu0 0.0
        %4016 = vmatprep.subr.mxu0 0.0
        %4017 = vmatpush1.msra.mxu0 0.0
        %4018 = vmatprep.subr.mxu0 0.0
        %4019 = vmatpush1.msra.mxu0 0.0
        %4020 = vmatprep.subr.mxu0 0.0
        %4021 = vmatpush1.msra.mxu0 0.0
        %4022 = vmatprep.subr.mxu0 0.0
        %4023 = vmatpush1.msra.mxu0 0.0
        %4024 = vmatprep.subr.mxu0 0.0
        %4025 = vmatpush1.msra.mxu0 0.0
        %4026 = vmatprep.mubr.f32.mxu0 0.0
        %4027 = vmatmul.mubr.f32.gmra.mrb[0].mxu0 %v3951
        %v4028 = vpop.f32.mrb[0].mxu0
        %v4029 = vadd.f32 0.0, %v4028
        %v4030 = vpop.f32.mrb[0].mxu0
        %4031 = vmatprep.mubr.f32.mxu0 0.0
        %4032 = vmatmul.mubr.f32.gmra.mrb[0].mxu0 %v3954
        %v4033 = vpop.f32.mrb[0].mxu0
        %v4034 = vadd.f32 0.0, %v4033
        %v4035 = vpop.f32.mrb[0].mxu0
        %4036 = vmatprep.mubr.f32.mxu0 0.0
        %4037 = vmatmul.mubr.f32.gmra.mrb[0].mxu0 %v3957
        %v4038 = vpop.f32.mrb[0].mxu0
        %v4039 = vadd.f32 0.0, %v4038
        %v4040 = vpop.f32.mrb[0].mxu0
        %4041 = vmatprep.mubr.f32.mxu0 0.0
        %4042 = vmatmul.mubr.f32.gmra.mrb[0].mxu0 %v3960
        %v4043 = vpop.f32.mrb[0].mxu0
        %v4044 = vadd.f32 0.0, %v4043
        %v4045 = vpop.f32.mrb[0].mxu0
        %4046 = vdwg.mxu0
        %v4048 = vsel %vm412, %v3845, 0
        %v4051 = vsel %vm412, %v3846, 0
        %v4054 = vsel %vm412, %v3847, 0
        %v4057 = vsel %vm412, %v3848, 0
        %4059 = vmatprep.subr.mxu0 0.0
        %4060 = vmatpush1.msra.mxu0 %v3246
        %4061 = vmatprep.subr.mxu0 0.0
        %4062 = vmatpush1.msra.mxu0 %v3251
        %4063 = vmatprep.subr.mxu0 0.0
        %4064 = vmatpush1.msra.mxu0 %v3256
        %4065 = vmatprep.subr.mxu0 0.0
        %4066 = vmatpush1.msra.mxu0 %v3261
        %4067 = vmatprep.subr.mxu0 0.0
        %4068 = vmatpush1.msra.mxu0 0.0
        %4069 = vmatprep.subr.mxu0 0.0
        %4070 = vmatpush1.msra.mxu0 0.0
        %4071 = vmatprep.subr.mxu0 0.0
        %4072 = vmatpush1.msra.mxu0 0.0
        %4073 = vmatprep.subr.mxu0 0.0
        %4074 = vmatpush1.msra.mxu0 0.0
        %4075 = vmatprep.subr.mxu0 0.0
        %4076 = vmatpush1.msra.mxu0 0.0
        %4077 = vmatprep.subr.mxu0 0.0
        %4078 = vmatpush1.msra.mxu0 0.0
        %4079 = vmatprep.subr.mxu0 0.0
        %4080 = vmatpush1.msra.mxu0 0.0
        %4081 = vmatprep.subr.mxu0 0.0
        %4082 = vmatpush1.msra.mxu0 0.0
        %4083 = vmatprep.subr.mxu0 0.0
        %4084 = vmatpush1.msra.mxu0 0.0
        %4085 = vmatprep.subr.mxu0 0.0
        %4086 = vmatpush1.msra.mxu0 0.0
        %4087 = vmatprep.subr.mxu0 0.0
        %4088 = vmatpush1.msra.mxu0 0.0
        %4089 = vmatprep.subr.mxu0 0.0
        %4090 = vmatpush1.msra.mxu0 0.0
        %4091 = vmatprep.subr.mxu0 0.0
        %4092 = vmatpush1.msra.mxu0 0.0
        %4093 = vmatprep.subr.mxu0 0.0
        %4094 = vmatpush1.msra.mxu0 0.0
        %4095 = vmatprep.subr.mxu0 0.0
        %4096 = vmatpush1.msra.mxu0 0.0
        %4097 = vmatprep.subr.mxu0 0.0
        %4098 = vmatpush1.msra.mxu0 0.0
        %4099 = vmatprep.subr.mxu0 0.0
        %4100 = vmatpush1.msra.mxu0 0.0
        %4101 = vmatprep.subr.mxu0 0.0
        %4102 = vmatpush1.msra.mxu0 0.0
        %4103 = vmatprep.subr.mxu0 0.0
        %4104 = vmatpush1.msra.mxu0 0.0
        %4105 = vmatprep.subr.mxu0 0.0
        %4106 = vmatpush1.msra.mxu0 0.0
        %4107 = vmatprep.subr.mxu0 0.0
        %4108 = vmatpush1.msra.mxu0 0.0
        %4109 = vmatprep.subr.mxu0 0.0
        %4110 = vmatpush1.msra.mxu0 0.0
        %4111 = vmatprep.subr.mxu0 0.0
        %4112 = vmatpush1.msra.mxu0 0.0
        %4113 = vmatprep.subr.mxu0 0.0
        %4114 = vmatpush1.msra.mxu0 0.0
        %4115 = vmatprep.subr.mxu0 0.0
        %4116 = vmatpush1.msra.mxu0 0.0
        %4117 = vmatprep.subr.mxu0 0.0
        %4118 = vmatpush1.msra.mxu0 0.0
        %4119 = vmatprep.subr.mxu0 0.0
        %4120 = vmatpush1.msra.mxu0 0.0
        %4121 = vmatprep.subr.mxu0 0.0
        %4122 = vmatpush1.msra.mxu0 0.0
        %4123 = vmatprep.mubr.f32.mxu0 0.0
        %4124 = vmatmul.mubr.f32.gmra.mrb[0].mxu0 %v4048
        %v4125 = vpop.f32.mrb[0].mxu0
        %v4126 = vadd.f32 0.0, %v4125
        %v4127 = vpop.f32.mrb[0].mxu0
        %4128 = vmatprep.mubr.f32.mxu0 0.0
        %4129 = vmatmul.mubr.f32.gmra.mrb[0].mxu0 %v4051
        %v4130 = vpop.f32.mrb[0].mxu0
        %v4131 = vadd.f32 0.0, %v4130
        %v4132 = vpop.f32.mrb[0].mxu0
        %4133 = vmatprep.mubr.f32.mxu0 0.0
        %4134 = vmatmul.mubr.f32.gmra.mrb[0].mxu0 %v4054
        %v4135 = vpop.f32.mrb[0].mxu0
        %v4136 = vadd.f32 0.0, %v4135
        %v4137 = vpop.f32.mrb[0].mxu0
        %4138 = vmatprep.mubr.f32.mxu0 0.0
        %4139 = vmatmul.mubr.f32.gmra.mrb[0].mxu0 %v4057
        %v4140 = vpop.f32.mrb[0].mxu0
        %v4141 = vadd.f32 0.0, %v4140
        %v4142 = vpop.f32.mrb[0].mxu0
        %4143 = vdwg.mxu0
        %v4145 = vsel %vm412, %v3849, 0
        %v4148 = vsel %vm412, %v3850, 0
        %v4151 = vsel %vm412, %v3851, 0
        %v4154 = vsel %vm412, %v3852, 0
        %4156 = vmatprep.subr.mxu0 0.0
        %4157 = vmatpush1.msra.mxu0 %v3266
        %4158 = vmatprep.subr.mxu0 0.0
        %4159 = vmatpush1.msra.mxu0 %v3271
        %4160 = vmatprep.subr.mxu0 0.0
        %4161 = vmatpush1.msra.mxu0 %v3276
        %4162 = vmatprep.subr.mxu0 0.0
        %4163 = vmatpush1.msra.mxu0 %v3281
        %4164 = vmatprep.subr.mxu0 0.0
        %4165 = vmatpush1.msra.mxu0 0.0
        %4166 = vmatprep.subr.mxu0 0.0
        %4167 = vmatpush1.msra.mxu0 0.0
        %4168 = vmatprep.subr.mxu0 0.0
        %4169 = vmatpush1.msra.mxu0 0.0
        %4170 = vmatprep.subr.mxu0 0.0
        %4171 = vmatpush1.msra.mxu0 0.0
        %4172 = vmatprep.subr.mxu0 0.0
        %4173 = vmatpush1.msra.mxu0 0.0
        %4174 = vmatprep.subr.mxu0 0.0
        %4175 = vmatpush1.msra.mxu0 0.0
        %4176 = vmatprep.subr.mxu0 0.0
        %4177 = vmatpush1.msra.mxu0 0.0
        %4178 = vmatprep.subr.mxu0 0.0
        %4179 = vmatpush1.msra.mxu0 0.0
        %4180 = vmatprep.subr.mxu0 0.0
        %4181 = vmatpush1.msra.mxu0 0.0
        %4182 = vmatprep.subr.mxu0 0.0
        %4183 = vmatpush1.msra.mxu0 0.0
        %4184 = vmatprep.subr.mxu0 0.0
        %4185 = vmatpush1.msra.mxu0 0.0
        %4186 = vmatprep.subr.mxu0 0.0
        %4187 = vmatpush1.msra.mxu0 0.0
        %4188 = vmatprep.subr.mxu0 0.0
        %4189 = vmatpush1.msra.mxu0 0.0
        %4190 = vmatprep.subr.mxu0 0.0
        %4191 = vmatpush1.msra.mxu0 0.0
        %4192 = vmatprep.subr.mxu0 0.0
        %4193 = vmatpush1.msra.mxu0 0.0
        %4194 = vmatprep.subr.mxu0 0.0
        %4195 = vmatpush1.msra.mxu0 0.0
        %4196 = vmatprep.subr.mxu0 0.0
        %4197 = vmatpush1.msra.mxu0 0.0
        %4198 = vmatprep.subr.mxu0 0.0
        %4199 = vmatpush1.msra.mxu0 0.0
        %4200 = vmatprep.subr.mxu0 0.0
        %4201 = vmatpush1.msra.mxu0 0.0
        %4202 = vmatprep.subr.mxu0 0.0
        %4203 = vmatpush1.msra.mxu0 0.0
        %4204 = vmatprep.subr.mxu0 0.0
        %4205 = vmatpush1.msra.mxu0 0.0
        %4206 = vmatprep.subr.mxu0 0.0
        %4207 = vmatpush1.msra.mxu0 0.0
        %4208 = vmatprep.subr.mxu0 0.0
        %4209 = vmatpush1.msra.mxu0 0.0
        %4210 = vmatprep.subr.mxu0 0.0
        %4211 = vmatpush1.msra.mxu0 0.0
        %4212 = vmatprep.subr.mxu0 0.0
        %4213 = vmatpush1.msra.mxu0 0.0
        %4214 = vmatprep.subr.mxu0 0.0
        %4215 = vmatpush1.msra.mxu0 0.0
        %4216 = vmatprep.subr.mxu0 0.0
        %4217 = vmatpush1.msra.mxu0 0.0
        %4218 = vmatprep.subr.mxu0 0.0
        %4219 = vmatpush1.msra.mxu0 0.0
        %4220 = vmatprep.mubr.f32.mxu0 0.0
        %4221 = vmatmul.mubr.f32.gmra.mrb[0].mxu0 %v4145
        %v4222 = vpop.f32.mrb[0].mxu0
        %v4223 = vadd.f32 0.0, %v4222
        %v4224 = vpop.f32.mrb[0].mxu0
        %4225 = vmatprep.mubr.f32.mxu0 0.0
        %4226 = vmatmul.mubr.f32.gmra.mrb[0].mxu0 %v4148
        %v4227 = vpop.f32.mrb[0].mxu0
        %v4228 = vadd.f32 0.0, %v4227
        %v4229 = vpop.f32.mrb[0].mxu0
        %4230 = vmatprep.mubr.f32.mxu0 0.0
        %4231 = vmatmul.mubr.f32.gmra.mrb[0].mxu0 %v4151
        %v4232 = vpop.f32.mrb[0].mxu0
        %v4233 = vadd.f32 0.0, %v4232
        %v4234 = vpop.f32.mrb[0].mxu0
        %4235 = vmatprep.mubr.f32.mxu0 0.0
        %4236 = vmatmul.mubr.f32.gmra.mrb[0].mxu0 %v4154
        %v4237 = vpop.f32.mrb[0].mxu0
        %v4238 = vadd.f32 0.0, %v4237
        %v4239 = vpop.f32.mrb[0].mxu0
        %4240 = vdwg.mxu0
        %v4241 = vadd.f32 %v2667, %v3932
        %v4242 = vadd.f32 %v2672, %v3937
        %v4243 = vadd.f32 %v2677, %v3942
        %v4244 = vadd.f32 %v2682, %v3947
        %v4245 = vadd.f32 %v2764, %v4029
        %v4246 = vadd.f32 %v2769, %v4034
        %v4247 = vadd.f32 %v2774, %v4039
        %v4248 = vadd.f32 %v2779, %v4044
        %v4249 = vadd.f32 %v2861, %v4126
        %v4250 = vadd.f32 %v2866, %v4131
        %v4251 = vadd.f32 %v2871, %v4136
        %v4252 = vadd.f32 %v2876, %v4141
        %v4253 = vadd.f32 %v2958, %v4223
        %v4254 = vadd.f32 %v2963, %v4228
        %v4255 = vadd.f32 %v2968, %v4233
        %v4256 = vadd.f32 %v2973, %v4238
        %s4257 = scalar_lea.vmem [#allocation5], 96
        %v4258 = vld [vmem:[%s4257] sm:$0xff]
        %v4259 = vld [vmem:[%s4257 + $0x8] sm:$0xff]
        %v4260 = vld [vmem:[%s4257 + $0x10] sm:$0xff]
        %v4261 = vld [vmem:[%s4257 + $0x18] sm:$0xff]
        %s4262 = scalar_lea.vmem %s3, 3
        %v4263 = vld [vmem:[%s4262] sm:$0x1]
        %v4265 = vlaneseq
        %v4266 = vshrl.u32 %v4265, 7
        %v4267 = vsub.s32 0, %v4266
        %v4268 = vrot.slane %v4263, %v4267
        %4270 = vmatprep.subr.mxu0 0.0
        %4271 = vmatpush1.msra.mxu0 %v4258
        %4272 = vmatprep.subr.mxu0 0.0
        %4273 = vmatpush1.msra.mxu0 %v4259
        %4274 = vmatprep.subr.mxu0 0.0
        %4275 = vmatpush1.msra.mxu0 %v4260
        %4276 = vmatprep.subr.mxu0 0.0
        %4277 = vmatpush1.msra.mxu0 %v4261
        %4278 = vmatprep.subr.mxu0 0.0
        %4279 = vmatpush1.msra.mxu0 0.0
        %4280 = vmatprep.subr.mxu0 0.0
        %4281 = vmatpush1.msra.mxu0 0.0
        %4282 = vmatprep.subr.mxu0 0.0
        %4283 = vmatpush1.msra.mxu0 0.0
        %4284 = vmatprep.subr.mxu0 0.0
        %4285 = vmatpush1.msra.mxu0 0.0
        %4286 = vmatprep.subr.mxu0 0.0
        %4287 = vmatpush1.msra.mxu0 0.0
        %4288 = vmatprep.subr.mxu0 0.0
        %4289 = vmatpush1.msra.mxu0 0.0
        %4290 = vmatprep.subr.mxu0 0.0
        %4291 = vmatpush1.msra.mxu0 0.0
        %4292 = vmatprep.subr.mxu0 0.0
        %4293 = vmatpush1.msra.mxu0 0.0
        %4294 = vmatprep.subr.mxu0 0.0
        %4295 = vmatpush1.msra.mxu0 0.0
        %4296 = vmatprep.subr.mxu0 0.0
        %4297 = vmatpush1.msra.mxu0 0.0
        %4298 = vmatprep.subr.mxu0 0.0
        %4299 = vmatpush1.msra.mxu0 0.0
        %4300 = vmatprep.subr.mxu0 0.0
        %4301 = vmatpush1.msra.mxu0 0.0
        %4302 = vmatprep.subr.mxu0 0.0
        %4303 = vmatpush1.msra.mxu0 0.0
        %4304 = vmatprep.subr.mxu0 0.0
        %4305 = vmatpush1.msra.mxu0 0.0
        %4306 = vmatprep.subr.mxu0 0.0
        %4307 = vmatpush1.msra.mxu0 0.0
        %4308 = vmatprep.subr.mxu0 0.0
        %4309 = vmatpush1.msra.mxu0 0.0
        %4310 = vmatprep.subr.mxu0 0.0
        %4311 = vmatpush1.msra.mxu0 0.0
        %4312 = vmatprep.subr.mxu0 0.0
        %4313 = vmatpush1.msra.mxu0 0.0
        %4314 = vmatprep.subr.mxu0 0.0
        %4315 = vmatpush1.msra.mxu0 0.0
        %4316 = vmatprep.subr.mxu0 0.0
        %4317 = vmatpush1.msra.mxu0 0.0
        %4318 = vmatprep.subr.mxu0 0.0
        %4319 = vmatpush1.msra.mxu0 0.0
        %4320 = vmatprep.subr.mxu0 0.0
        %4321 = vmatpush1.msra.mxu0 0.0
        %4322 = vmatprep.subr.mxu0 0.0
        %4323 = vmatpush1.msra.mxu0 0.0
        %4324 = vmatprep.subr.mxu0 0.0
        %4325 = vmatpush1.msra.mxu0 0.0
        %4326 = vmatprep.subr.mxu0 0.0
        %4327 = vmatpush1.msra.mxu0 0.0
        %4328 = vmatprep.subr.mxu0 0.0
        %4329 = vmatpush1.msra.mxu0 0.0
        %4330 = vmatprep.subr.mxu0 0.0
        %4331 = vmatpush1.msra.mxu0 0.0
        %4332 = vmatprep.subr.mxu0 0.0
        %4333 = vmatpush1.msra.mxu0 0.0
        %4334 = vmatprep.mubr.f32.mxu0 0.0
        %4335 = vmatmul.mubr.f32.gmra.mrb[0].mxu0 %v414
        %v4336 = vpop.f32.mrb[0].mxu0
        %v4337 = vadd.f32 %v4268, %v4336
        %v4338 = vpop.f32.mrb[0].mxu0
        %4339 = vmatprep.mubr.f32.mxu0 0.0
        %4340 = vmatmul.mubr.f32.gmra.mrb[0].mxu0 %v417
        %v4341 = vpop.f32.mrb[0].mxu0
        %v4342 = vadd.f32 %v4268, %v4341
        %v4343 = vpop.f32.mrb[0].mxu0
        %4344 = vmatprep.mubr.f32.mxu0 0.0
        %4345 = vmatmul.mubr.f32.gmra.mrb[0].mxu0 %v420
        %v4346 = vpop.f32.mrb[0].mxu0
        %v4347 = vadd.f32 %v4268, %v4346
        %v4348 = vpop.f32.mrb[0].mxu0
        %4349 = vmatprep.mubr.f32.mxu0 0.0
        %4350 = vmatmul.mubr.f32.gmra.mrb[0].mxu0 %v423
        %v4351 = vpop.f32.mrb[0].mxu0
        %v4352 = vadd.f32 %v4268, %v4351
        %v4353 = vpop.f32.mrb[0].mxu0
        %4354 = vmatprep.mubr.f32.mxu0 0.0
        %4355 = vmatmul.mubr.f32.gmra.mrb[0].mxu0 %v426
        %v4356 = vpop.f32.mrb[0].mxu0
        %v4357 = vadd.f32 %v4268, %v4356
        %v4358 = vpop.f32.mrb[0].mxu0
        %4359 = vmatprep.mubr.f32.mxu0 0.0
        %4360 = vmatmul.mubr.f32.gmra.mrb[0].mxu0 %v429
        %v4361 = vpop.f32.mrb[0].mxu0
        %v4362 = vadd.f32 %v4268, %v4361
        %v4363 = vpop.f32.mrb[0].mxu0
        %4364 = vmatprep.mubr.f32.mxu0 0.0
        %4365 = vmatmul.mubr.f32.gmra.mrb[0].mxu0 %v432
        %v4366 = vpop.f32.mrb[0].mxu0
        %v4367 = vadd.f32 %v4268, %v4366
        %v4368 = vpop.f32.mrb[0].mxu0
        %4369 = vmatprep.mubr.f32.mxu0 0.0
        %4370 = vmatmul.mubr.f32.gmra.mrb[0].mxu0 %v435
        %v4371 = vpop.f32.mrb[0].mxu0
        %v4372 = vadd.f32 %v4268, %v4371
        %v4373 = vpop.f32.mrb[0].mxu0
        %4374 = vmatprep.mubr.f32.mxu0 0.0
        %4375 = vmatmul.mubr.f32.gmra.mrb[0].mxu0 %v438
        %v4376 = vpop.f32.mrb[0].mxu0
        %v4377 = vadd.f32 %v4268, %v4376
        %v4378 = vpop.f32.mrb[0].mxu0
        %4379 = vmatprep.mubr.f32.mxu0 0.0
        %4380 = vmatmul.mubr.f32.gmra.mrb[0].mxu0 %v441
        %v4381 = vpop.f32.mrb[0].mxu0
        %v4382 = vadd.f32 %v4268, %v4381
        %v4383 = vpop.f32.mrb[0].mxu0
        %4384 = vmatprep.mubr.f32.mxu0 0.0
        %4385 = vmatmul.mubr.f32.gmra.mrb[0].mxu0 %v444
        %v4386 = vpop.f32.mrb[0].mxu0
        %v4387 = vadd.f32 %v4268, %v4386
        %v4388 = vpop.f32.mrb[0].mxu0
        %4389 = vmatprep.mubr.f32.mxu0 0.0
        %4390 = vmatmul.mubr.f32.gmra.mrb[0].mxu0 %v447
        %v4391 = vpop.f32.mrb[0].mxu0
        %v4392 = vadd.f32 %v4268, %v4391
        %v4393 = vpop.f32.mrb[0].mxu0
        %4394 = vmatprep.mubr.f32.mxu0 0.0
        %4395 = vmatmul.mubr.f32.gmra.mrb[0].mxu0 %v450
        %v4396 = vpop.f32.mrb[0].mxu0
        %v4397 = vadd.f32 %v4268, %v4396
        %v4398 = vpop.f32.mrb[0].mxu0
        %4399 = vmatprep.mubr.f32.mxu0 0.0
        %4400 = vmatmul.mubr.f32.gmra.mrb[0].mxu0 %v453
        %v4401 = vpop.f32.mrb[0].mxu0
        %v4402 = vadd.f32 %v4268, %v4401
        %v4403 = vpop.f32.mrb[0].mxu0
        %4404 = vmatprep.mubr.f32.mxu0 0.0
        %4405 = vmatmul.mubr.f32.gmra.mrb[0].mxu0 %v456
        %v4406 = vpop.f32.mrb[0].mxu0
        %v4407 = vadd.f32 %v4268, %v4406
        %v4408 = vpop.f32.mrb[0].mxu0
        %4409 = vmatprep.mubr.f32.mxu0 0.0
        %4410 = vmatmul.mubr.f32.gmra.mrb[0].mxu0 %v459
        %v4411 = vpop.f32.mrb[0].mxu0
        %v4412 = vadd.f32 %v4268, %v4411
        %v4413 = vpop.f32.mrb[0].mxu0
        %4414 = vdwg.mxu0
        %s4415 = scalar_lea.vmem [#allocation7], 96
        %v4416 = vld [vmem:[%s4415] sm:$0xff]
        %v4417 = vld [vmem:[%s4415 + $0x8] sm:$0xff]
        %v4418 = vld [vmem:[%s4415 + $0x10] sm:$0xff]
        %v4419 = vld [vmem:[%s4415 + $0x18] sm:$0xff]
        %4420 = vmatprep.subr.mxu0 0.0
        %4421 = vmatpush1.msra.mxu0 %v4416
        %4422 = vmatprep.subr.mxu0 0.0
        %4423 = vmatpush1.msra.mxu0 %v4417
        %4424 = vmatprep.subr.mxu0 0.0
        %4425 = vmatpush1.msra.mxu0 %v4418
        %4426 = vmatprep.subr.mxu0 0.0
        %4427 = vmatpush1.msra.mxu0 %v4419
        %4428 = vmatprep.subr.mxu0 0.0
        %4429 = vmatpush1.msra.mxu0 0.0
        %4430 = vmatprep.subr.mxu0 0.0
        %4431 = vmatpush1.msra.mxu0 0.0
        %4432 = vmatprep.subr.mxu0 0.0
        %4433 = vmatpush1.msra.mxu0 0.0
        %4434 = vmatprep.subr.mxu0 0.0
        %4435 = vmatpush1.msra.mxu0 0.0
        %4436 = vmatprep.subr.mxu0 0.0
        %4437 = vmatpush1.msra.mxu0 0.0
        %4438 = vmatprep.subr.mxu0 0.0
        %4439 = vmatpush1.msra.mxu0 0.0
        %4440 = vmatprep.subr.mxu0 0.0
        %4441 = vmatpush1.msra.mxu0 0.0
        %4442 = vmatprep.subr.mxu0 0.0
        %4443 = vmatpush1.msra.mxu0 0.0
        %4444 = vmatprep.subr.mxu0 0.0
        %4445 = vmatpush1.msra.mxu0 0.0
        %4446 = vmatprep.subr.mxu0 0.0
        %4447 = vmatpush1.msra.mxu0 0.0
        %4448 = vmatprep.subr.mxu0 0.0
        %4449 = vmatpush1.msra.mxu0 0.0
        %4450 = vmatprep.subr.mxu0 0.0
        %4451 = vmatpush1.msra.mxu0 0.0
        %4452 = vmatprep.subr.mxu0 0.0
        %4453 = vmatpush1.msra.mxu0 0.0
        %4454 = vmatprep.subr.mxu0 0.0
        %4455 = vmatpush1.msra.mxu0 0.0
        %4456 = vmatprep.subr.mxu0 0.0
        %4457 = vmatpush1.msra.mxu0 0.0
        %4458 = vmatprep.subr.mxu0 0.0
        %4459 = vmatpush1.msra.mxu0 0.0
        %4460 = vmatprep.subr.mxu0 0.0
        %4461 = vmatpush1.msra.mxu0 0.0
        %4462 = vmatprep.subr.mxu0 0.0
        %4463 = vmatpush1.msra.mxu0 0.0
        %4464 = vmatprep.subr.mxu0 0.0
        %4465 = vmatpush1.msra.mxu0 0.0
        %4466 = vmatprep.subr.mxu0 0.0
        %4467 = vmatpush1.msra.mxu0 0.0
        %4468 = vmatprep.subr.mxu0 0.0
        %4469 = vmatpush1.msra.mxu0 0.0
        %4470 = vmatprep.subr.mxu0 0.0
        %4471 = vmatpush1.msra.mxu0 0.0
        %4472 = vmatprep.subr.mxu0 0.0
        %4473 = vmatpush1.msra.mxu0 0.0
        %4474 = vmatprep.subr.mxu0 0.0
        %4475 = vmatpush1.msra.mxu0 0.0
        %4476 = vmatprep.subr.mxu0 0.0
        %4477 = vmatpush1.msra.mxu0 0.0
        %4478 = vmatprep.subr.mxu0 0.0
        %4479 = vmatpush1.msra.mxu0 0.0
        %4480 = vmatprep.subr.mxu0 0.0
        %4481 = vmatpush1.msra.mxu0 0.0
        %4482 = vmatprep.subr.mxu0 0.0
        %4483 = vmatpush1.msra.mxu0 0.0
        %4484 = vmatprep.mubr.f32.mxu0 0.0
        %4485 = vmatmul.mubr.f32.gmra.mrb[0].mxu0 %v414
        %v4486 = vpop.f32.mrb[0].mxu0
        %v4487 = vadd.f32 0.0, %v4486
        %v4488 = vpop.f32.mrb[0].mxu0
        %4489 = vmatprep.mubr.f32.mxu0 0.0
        %4490 = vmatmul.mubr.f32.gmra.mrb[0].mxu0 %v417
        %v4491 = vpop.f32.mrb[0].mxu0
        %v4492 = vadd.f32 0.0, %v4491
        %v4493 = vpop.f32.mrb[0].mxu0
        %4494 = vmatprep.mubr.f32.mxu0 0.0
        %4495 = vmatmul.mubr.f32.gmra.mrb[0].mxu0 %v420
        %v4496 = vpop.f32.mrb[0].mxu0
        %v4497 = vadd.f32 0.0, %v4496
        %v4498 = vpop.f32.mrb[0].mxu0
        %4499 = vmatprep.mubr.f32.mxu0 0.0
        %4500 = vmatmul.mubr.f32.gmra.mrb[0].mxu0 %v423
        %v4501 = vpop.f32.mrb[0].mxu0
        %v4502 = vadd.f32 0.0, %v4501
        %v4503 = vpop.f32.mrb[0].mxu0
        %4504 = vmatprep.mubr.f32.mxu0 0.0
        %4505 = vmatmul.mubr.f32.gmra.mrb[0].mxu0 %v426
        %v4506 = vpop.f32.mrb[0].mxu0
        %v4507 = vadd.f32 0.0, %v4506
        %v4508 = vpop.f32.mrb[0].mxu0
        %4509 = vmatprep.mubr.f32.mxu0 0.0
        %4510 = vmatmul.mubr.f32.gmra.mrb[0].mxu0 %v429
        %v4511 = vpop.f32.mrb[0].mxu0
        %v4512 = vadd.f32 0.0, %v4511
        %v4513 = vpop.f32.mrb[0].mxu0
        %4514 = vmatprep.mubr.f32.mxu0 0.0
        %4515 = vmatmul.mubr.f32.gmra.mrb[0].mxu0 %v432
        %v4516 = vpop.f32.mrb[0].mxu0
        %v4517 = vadd.f32 0.0, %v4516
        %v4518 = vpop.f32.mrb[0].mxu0
        %4519 = vmatprep.mubr.f32.mxu0 0.0
        %4520 = vmatmul.mubr.f32.gmra.mrb[0].mxu0 %v435
        %v4521 = vpop.f32.mrb[0].mxu0
        %v4522 = vadd.f32 0.0, %v4521
        %v4523 = vpop.f32.mrb[0].mxu0
        %4524 = vmatprep.mubr.f32.mxu0 0.0
        %4525 = vmatmul.mubr.f32.gmra.mrb[0].mxu0 %v438
        %v4526 = vpop.f32.mrb[0].mxu0
        %v4527 = vadd.f32 0.0, %v4526
        %v4528 = vpop.f32.mrb[0].mxu0
        %4529 = vmatprep.mubr.f32.mxu0 0.0
        %4530 = vmatmul.mubr.f32.gmra.mrb[0].mxu0 %v441
        %v4531 = vpop.f32.mrb[0].mxu0
        %v4532 = vadd.f32 0.0, %v4531
        %v4533 = vpop.f32.mrb[0].mxu0
        %4534 = vmatprep.mubr.f32.mxu0 0.0
        %4535 = vmatmul.mubr.f32.gmra.mrb[0].mxu0 %v444
        %v4536 = vpop.f32.mrb[0].mxu0
        %v4537 = vadd.f32 0.0, %v4536
        %v4538 = vpop.f32.mrb[0].mxu0
        %4539 = vmatprep.mubr.f32.mxu0 0.0
        %4540 = vmatmul.mubr.f32.gmra.mrb[0].mxu0 %v447
        %v4541 = vpop.f32.mrb[0].mxu0
        %v4542 = vadd.f32 0.0, %v4541
        %v4543 = vpop.f32.mrb[0].mxu0
        %4544 = vmatprep.mubr.f32.mxu0 0.0
        %4545 = vmatmul.mubr.f32.gmra.mrb[0].mxu0 %v450
        %v4546 = vpop.f32.mrb[0].mxu0
        %v4547 = vadd.f32 0.0, %v4546
        %v4548 = vpop.f32.mrb[0].mxu0
        %4549 = vmatprep.mubr.f32.mxu0 0.0
        %4550 = vmatmul.mubr.f32.gmra.mrb[0].mxu0 %v453
        %v4551 = vpop.f32.mrb[0].mxu0
        %v4552 = vadd.f32 0.0, %v4551
        %v4553 = vpop.f32.mrb[0].mxu0
        %4554 = vmatprep.mubr.f32.mxu0 0.0
        %4555 = vmatmul.mubr.f32.gmra.mrb[0].mxu0 %v456
        %v4556 = vpop.f32.mrb[0].mxu0
        %v4557 = vadd.f32 0.0, %v4556
        %v4558 = vpop.f32.mrb[0].mxu0
        %4559 = vmatprep.mubr.f32.mxu0 0.0
        %4560 = vmatmul.mubr.f32.gmra.mrb[0].mxu0 %v459
        %v4561 = vpop.f32.mrb[0].mxu0
        %v4562 = vadd.f32 0.0, %v4561
        %v4563 = vpop.f32.mrb[0].mxu0
        %4564 = vdwg.mxu0
        %s4565 = scalar_lea.vmem %s349, 96 [#allocation8]
        %v4566 = vld [vmem:[%s4565] sm:$0xff]
        %v4567 = vld [vmem:[%s4565 + $0x8] sm:$0xff]
        %v4568 = vld [vmem:[%s4565 + $0x10] sm:$0xff]
        %v4569 = vld [vmem:[%s4565 + $0x18] sm:$0xff]
        %v4571 = vsel %vm412, %v4337, 0
        %v4574 = vsel %vm412, %v4342, 0
        %v4577 = vsel %vm412, %v4347, 0
        %v4580 = vsel %vm412, %v4352, 0
        %4582 = vmatprep.subr.mxu0 0.0
        %4583 = vmatpush1.xpose.msra.mxu0 %v414
        %4584 = vmatprep.subr.mxu0 0.0
        %4585 = vmatpush1.xpose.msra.mxu0 %v417
        %4586 = vmatprep.subr.mxu0 0.0
        %4587 = vmatpush1.xpose.msra.mxu0 %v420
        %4588 = vmatprep.subr.mxu0 0.0
        %4589 = vmatpush1.xpose.msra.mxu0 %v423
        %4590 = vmatprep.subr.mxu0 0.0
        %4591 = vmatpush1.xpose.msra.mxu0 0.0
        %4592 = vmatprep.subr.mxu0 0.0
        %4593 = vmatpush1.xpose.msra.mxu0 0.0
        %4594 = vmatprep.subr.mxu0 0.0
        %4595 = vmatpush1.xpose.msra.mxu0 0.0
        %4596 = vmatprep.subr.mxu0 0.0
        %4597 = vmatpush1.xpose.msra.mxu0 0.0
        %4598 = vmatprep.subr.mxu0 0.0
        %4599 = vmatpush1.xpose.msra.mxu0 0.0
        %4600 = vmatprep.subr.mxu0 0.0
        %4601 = vmatpush1.xpose.msra.mxu0 0.0
        %4602 = vmatprep.subr.mxu0 0.0
        %4603 = vmatpush1.xpose.msra.mxu0 0.0
        %4604 = vmatprep.subr.mxu0 0.0
        %4605 = vmatpush1.xpose.msra.mxu0 0.0
        %4606 = vmatprep.subr.mxu0 0.0
        %4607 = vmatpush1.xpose.msra.mxu0 0.0
        %4608 = vmatprep.subr.mxu0 0.0
        %4609 = vmatpush1.xpose.msra.mxu0 0.0
        %4610 = vmatprep.subr.mxu0 0.0
        %4611 = vmatpush1.xpose.msra.mxu0 0.0
        %4612 = vmatprep.subr.mxu0 0.0
        %4613 = vmatpush1.xpose.msra.mxu0 0.0
        %4614 = vmatprep.subr.mxu0 0.0
        %4615 = vmatpush1.xpose.msra.mxu0 0.0
        %4616 = vmatprep.subr.mxu0 0.0
        %4617 = vmatpush1.xpose.msra.mxu0 0.0
        %4618 = vmatprep.subr.mxu0 0.0
        %4619 = vmatpush1.xpose.msra.mxu0 0.0
        %4620 = vmatprep.subr.mxu0 0.0
        %4621 = vmatpush1.xpose.msra.mxu0 0.0
        %4622 = vmatprep.subr.mxu0 0.0
        %4623 = vmatpush1.xpose.msra.mxu0 0.0
        %4624 = vmatprep.subr.mxu0 0.0
        %4625 = vmatpush1.xpose.msra.mxu0 0.0
        %4626 = vmatprep.subr.mxu0 0.0
        %4627 = vmatpush1.xpose.msra.mxu0 0.0
        %4628 = vmatprep.subr.mxu0 0.0
        %4629 = vmatpush1.xpose.msra.mxu0 0.0
        %4630 = vmatprep.subr.mxu0 0.0
        %4631 = vmatpush1.xpose.msra.mxu0 0.0
        %4632 = vmatprep.subr.mxu0 0.0
        %4633 = vmatpush1.xpose.msra.mxu0 0.0
        %4634 = vmatprep.subr.mxu0 0.0
        %4635 = vmatpush1.xpose.msra.mxu0 0.0
        %4636 = vmatprep.subr.mxu0 0.0
        %4637 = vmatpush1.xpose.msra.mxu0 0.0
        %4638 = vmatprep.subr.mxu0 0.0
        %4639 = vmatpush1.xpose.msra.mxu0 0.0
        %4640 = vmatprep.subr.mxu0 0.0
        %4641 = vmatpush1.xpose.msra.mxu0 0.0
        %4642 = vmatprep.subr.mxu0 0.0
        %4643 = vmatpush1.xpose.msra.mxu0 0.0
        %4644 = vmatprep.subr.mxu0 0.0
        %4645 = vmatpush1.xpose.msra.mxu0 0.0
        %4646 = vmatprep.mubr.f32.mxu0 0.0
        %4647 = vmatmul.mubr.f32.gmra.mrb[0].mxu0 %v4571
        %v4648 = vpop.f32.mrb[0].mxu0
        %v4649 = vadd.f32 %v4566, %v4648
        %v4650 = vpop.f32.mrb[0].mxu0
        %4651 = vmatprep.mubr.f32.mxu0 0.0
        %4652 = vmatmul.mubr.f32.gmra.mrb[0].mxu0 %v4574
        %v4653 = vpop.f32.mrb[0].mxu0
        %v4654 = vadd.f32 %v4567, %v4653
        %v4655 = vpop.f32.mrb[0].mxu0
        %4656 = vmatprep.mubr.f32.mxu0 0.0
        %4657 = vmatmul.mubr.f32.gmra.mrb[0].mxu0 %v4577
        %v4658 = vpop.f32.mrb[0].mxu0
        %v4659 = vadd.f32 %v4568, %v4658
        %v4660 = vpop.f32.mrb[0].mxu0
        %4661 = vmatprep.mubr.f32.mxu0 0.0
        %4662 = vmatmul.mubr.f32.gmra.mrb[0].mxu0 %v4580
        %v4663 = vpop.f32.mrb[0].mxu0
        %v4664 = vadd.f32 %v4569, %v4663
        %v4665 = vpop.f32.mrb[0].mxu0
        %4666 = vdwg.mxu0
        %v4668 = vsel %vm412, %v4357, 0
        %v4671 = vsel %vm412, %v4362, 0
        %v4674 = vsel %vm412, %v4367, 0
        %v4677 = vsel %vm412, %v4372, 0
        %4679 = vmatprep.subr.mxu0 0.0
        %4680 = vmatpush1.xpose.msra.mxu0 %v426
        %4681 = vmatprep.subr.mxu0 0.0
        %4682 = vmatpush1.xpose.msra.mxu0 %v429
        %4683 = vmatprep.subr.mxu0 0.0
        %4684 = vmatpush1.xpose.msra.mxu0 %v432
        %4685 = vmatprep.subr.mxu0 0.0
        %4686 = vmatpush1.xpose.msra.mxu0 %v435
        %4687 = vmatprep.subr.mxu0 0.0
        %4688 = vmatpush1.xpose.msra.mxu0 0.0
        %4689 = vmatprep.subr.mxu0 0.0
        %4690 = vmatpush1.xpose.msra.mxu0 0.0
        %4691 = vmatprep.subr.mxu0 0.0
        %4692 = vmatpush1.xpose.msra.mxu0 0.0
        %4693 = vmatprep.subr.mxu0 0.0
        %4694 = vmatpush1.xpose.msra.mxu0 0.0
        %4695 = vmatprep.subr.mxu0 0.0
        %4696 = vmatpush1.xpose.msra.mxu0 0.0
        %4697 = vmatprep.subr.mxu0 0.0
        %4698 = vmatpush1.xpose.msra.mxu0 0.0
        %4699 = vmatprep.subr.mxu0 0.0
        %4700 = vmatpush1.xpose.msra.mxu0 0.0
        %4701 = vmatprep.subr.mxu0 0.0
        %4702 = vmatpush1.xpose.msra.mxu0 0.0
        %4703 = vmatprep.subr.mxu0 0.0
        %4704 = vmatpush1.xpose.msra.mxu0 0.0
        %4705 = vmatprep.subr.mxu0 0.0
        %4706 = vmatpush1.xpose.msra.mxu0 0.0
        %4707 = vmatprep.subr.mxu0 0.0
        %4708 = vmatpush1.xpose.msra.mxu0 0.0
        %4709 = vmatprep.subr.mxu0 0.0
        %4710 = vmatpush1.xpose.msra.mxu0 0.0
        %4711 = vmatprep.subr.mxu0 0.0
        %4712 = vmatpush1.xpose.msra.mxu0 0.0
        %4713 = vmatprep.subr.mxu0 0.0
        %4714 = vmatpush1.xpose.msra.mxu0 0.0
        %4715 = vmatprep.subr.mxu0 0.0
        %4716 = vmatpush1.xpose.msra.mxu0 0.0
        %4717 = vmatprep.subr.mxu0 0.0
        %4718 = vmatpush1.xpose.msra.mxu0 0.0
        %4719 = vmatprep.subr.mxu0 0.0
        %4720 = vmatpush1.xpose.msra.mxu0 0.0
        %4721 = vmatprep.subr.mxu0 0.0
        %4722 = vmatpush1.xpose.msra.mxu0 0.0
        %4723 = vmatprep.subr.mxu0 0.0
        %4724 = vmatpush1.xpose.msra.mxu0 0.0
        %4725 = vmatprep.subr.mxu0 0.0
        %4726 = vmatpush1.xpose.msra.mxu0 0.0
        %4727 = vmatprep.subr.mxu0 0.0
        %4728 = vmatpush1.xpose.msra.mxu0 0.0
        %4729 = vmatprep.subr.mxu0 0.0
        %4730 = vmatpush1.xpose.msra.mxu0 0.0
        %4731 = vmatprep.subr.mxu0 0.0
        %4732 = vmatpush1.xpose.msra.mxu0 0.0
        %4733 = vmatprep.subr.mxu0 0.0
        %4734 = vmatpush1.xpose.msra.mxu0 0.0
        %4735 = vmatprep.subr.mxu0 0.0
        %4736 = vmatpush1.xpose.msra.mxu0 0.0
        %4737 = vmatprep.subr.mxu0 0.0
        %4738 = vmatpush1.xpose.msra.mxu0 0.0
        %4739 = vmatprep.subr.mxu0 0.0
        %4740 = vmatpush1.xpose.msra.mxu0 0.0
        %4741 = vmatprep.subr.mxu0 0.0
        %4742 = vmatpush1.xpose.msra.mxu0 0.0
        %4743 = vmatprep.mubr.f32.mxu0 0.0
        %4744 = vmatmul.mubr.f32.gmra.mrb[0].mxu0 %v4668
        %v4745 = vpop.f32.mrb[0].mxu0
        %v4746 = vadd.f32 %v4566, %v4745
        %v4747 = vpop.f32.mrb[0].mxu0
        %4748 = vmatprep.mubr.f32.mxu0 0.0
        %4749 = vmatmul.mubr.f32.gmra.mrb[0].mxu0 %v4671
        %v4750 = vpop.f32.mrb[0].mxu0
        %v4751 = vadd.f32 %v4567, %v4750
        %v4752 = vpop.f32.mrb[0].mxu0
        %4753 = vmatprep.mubr.f32.mxu0 0.0
        %4754 = vmatmul.mubr.f32.gmra.mrb[0].mxu0 %v4674
        %v4755 = vpop.f32.mrb[0].mxu0
        %v4756 = vadd.f32 %v4568, %v4755
        %v4757 = vpop.f32.mrb[0].mxu0
        %4758 = vmatprep.mubr.f32.mxu0 0.0
        %4759 = vmatmul.mubr.f32.gmra.mrb[0].mxu0 %v4677
        %v4760 = vpop.f32.mrb[0].mxu0
        %v4761 = vadd.f32 %v4569, %v4760
        %v4762 = vpop.f32.mrb[0].mxu0
        %4763 = vdwg.mxu0
        %v4765 = vsel %vm412, %v4377, 0
        %v4768 = vsel %vm412, %v4382, 0
        %v4771 = vsel %vm412, %v4387, 0
        %v4774 = vsel %vm412, %v4392, 0
        %4776 = vmatprep.subr.mxu0 0.0
        %4777 = vmatpush1.xpose.msra.mxu0 %v438
        %4778 = vmatprep.subr.mxu0 0.0
        %4779 = vmatpush1.xpose.msra.mxu0 %v441
        %4780 = vmatprep.subr.mxu0 0.0
        %4781 = vmatpush1.xpose.msra.mxu0 %v444
        %4782 = vmatprep.subr.mxu0 0.0
        %4783 = vmatpush1.xpose.msra.mxu0 %v447
        %4784 = vmatprep.subr.mxu0 0.0
        %4785 = vmatpush1.xpose.msra.mxu0 0.0
        %4786 = vmatprep.subr.mxu0 0.0
        %4787 = vmatpush1.xpose.msra.mxu0 0.0
        %4788 = vmatprep.subr.mxu0 0.0
        %4789 = vmatpush1.xpose.msra.mxu0 0.0
        %4790 = vmatprep.subr.mxu0 0.0
        %4791 = vmatpush1.xpose.msra.mxu0 0.0
        %4792 = vmatprep.subr.mxu0 0.0
        %4793 = vmatpush1.xpose.msra.mxu0 0.0
        %4794 = vmatprep.subr.mxu0 0.0
        %4795 = vmatpush1.xpose.msra.mxu0 0.0
        %4796 = vmatprep.subr.mxu0 0.0
        %4797 = vmatpush1.xpose.msra.mxu0 0.0
        %4798 = vmatprep.subr.mxu0 0.0
        %4799 = vmatpush1.xpose.msra.mxu0 0.0
        %4800 = vmatprep.subr.mxu0 0.0
        %4801 = vmatpush1.xpose.msra.mxu0 0.0
        %4802 = vmatprep.subr.mxu0 0.0
        %4803 = vmatpush1.xpose.msra.mxu0 0.0
        %4804 = vmatprep.subr.mxu0 0.0
        %4805 = vmatpush1.xpose.msra.mxu0 0.0
        %4806 = vmatprep.subr.mxu0 0.0
        %4807 = vmatpush1.xpose.msra.mxu0 0.0
        %4808 = vmatprep.subr.mxu0 0.0
        %4809 = vmatpush1.xpose.msra.mxu0 0.0
        %4810 = vmatprep.subr.mxu0 0.0
        %4811 = vmatpush1.xpose.msra.mxu0 0.0
        %4812 = vmatprep.subr.mxu0 0.0
        %4813 = vmatpush1.xpose.msra.mxu0 0.0
        %4814 = vmatprep.subr.mxu0 0.0
        %4815 = vmatpush1.xpose.msra.mxu0 0.0
        %4816 = vmatprep.subr.mxu0 0.0
        %4817 = vmatpush1.xpose.msra.mxu0 0.0
        %4818 = vmatprep.subr.mxu0 0.0
        %4819 = vmatpush1.xpose.msra.mxu0 0.0
        %4820 = vmatprep.subr.mxu0 0.0
        %4821 = vmatpush1.xpose.msra.mxu0 0.0
        %4822 = vmatprep.subr.mxu0 0.0
        %4823 = vmatpush1.xpose.msra.mxu0 0.0
        %4824 = vmatprep.subr.mxu0 0.0
        %4825 = vmatpush1.xpose.msra.mxu0 0.0
        %4826 = vmatprep.subr.mxu0 0.0
        %4827 = vmatpush1.xpose.msra.mxu0 0.0
        %4828 = vmatprep.subr.mxu0 0.0
        %4829 = vmatpush1.xpose.msra.mxu0 0.0
        %4830 = vmatprep.subr.mxu0 0.0
        %4831 = vmatpush1.xpose.msra.mxu0 0.0
        %4832 = vmatprep.subr.mxu0 0.0
        %4833 = vmatpush1.xpose.msra.mxu0 0.0
        %4834 = vmatprep.subr.mxu0 0.0
        %4835 = vmatpush1.xpose.msra.mxu0 0.0
        %4836 = vmatprep.subr.mxu0 0.0
        %4837 = vmatpush1.xpose.msra.mxu0 0.0
        %4838 = vmatprep.subr.mxu0 0.0
        %4839 = vmatpush1.xpose.msra.mxu0 0.0
        %4840 = vmatprep.mubr.f32.mxu0 0.0
        %4841 = vmatmul.mubr.f32.gmra.mrb[0].mxu0 %v4765
        %v4842 = vpop.f32.mrb[0].mxu0
        %v4843 = vadd.f32 %v4566, %v4842
        %v4844 = vpop.f32.mrb[0].mxu0
        %4845 = vmatprep.mubr.f32.mxu0 0.0
        %4846 = vmatmul.mubr.f32.gmra.mrb[0].mxu0 %v4768
        %v4847 = vpop.f32.mrb[0].mxu0
        %v4848 = vadd.f32 %v4567, %v4847
        %v4849 = vpop.f32.mrb[0].mxu0
        %4850 = vmatprep.mubr.f32.mxu0 0.0
        %4851 = vmatmul.mubr.f32.gmra.mrb[0].mxu0 %v4771
        %v4852 = vpop.f32.mrb[0].mxu0
        %v4853 = vadd.f32 %v4568, %v4852
        %v4854 = vpop.f32.mrb[0].mxu0
        %4855 = vmatprep.mubr.f32.mxu0 0.0
        %4856 = vmatmul.mubr.f32.gmra.mrb[0].mxu0 %v4774
        %v4857 = vpop.f32.mrb[0].mxu0
        %v4858 = vadd.f32 %v4569, %v4857
        %v4859 = vpop.f32.mrb[0].mxu0
        %4860 = vdwg.mxu0
        %v4862 = vsel %vm412, %v4397, 0
        %v4865 = vsel %vm412, %v4402, 0
        %v4868 = vsel %vm412, %v4407, 0
        %v4871 = vsel %vm412, %v4412, 0
        %4873 = vmatprep.subr.mxu0 0.0
        %4874 = vmatpush1.xpose.msra.mxu0 %v450
        %4875 = vmatprep.subr.mxu0 0.0
        %4876 = vmatpush1.xpose.msra.mxu0 %v453
        %4877 = vmatprep.subr.mxu0 0.0
        %4878 = vmatpush1.xpose.msra.mxu0 %v456
        %4879 = vmatprep.subr.mxu0 0.0
        %4880 = vmatpush1.xpose.msra.mxu0 %v459
        %4881 = vmatprep.subr.mxu0 0.0
        %4882 = vmatpush1.xpose.msra.mxu0 0.0
        %4883 = vmatprep.subr.mxu0 0.0
        %4884 = vmatpush1.xpose.msra.mxu0 0.0
        %4885 = vmatprep.subr.mxu0 0.0
        %4886 = vmatpush1.xpose.msra.mxu0 0.0
        %4887 = vmatprep.subr.mxu0 0.0
        %4888 = vmatpush1.xpose.msra.mxu0 0.0
        %4889 = vmatprep.subr.mxu0 0.0
        %4890 = vmatpush1.xpose.msra.mxu0 0.0
        %4891 = vmatprep.subr.mxu0 0.0
        %4892 = vmatpush1.xpose.msra.mxu0 0.0
        %4893 = vmatprep.subr.mxu0 0.0
        %4894 = vmatpush1.xpose.msra.mxu0 0.0
        %4895 = vmatprep.subr.mxu0 0.0
        %4896 = vmatpush1.xpose.msra.mxu0 0.0
        %4897 = vmatprep.subr.mxu0 0.0
        %4898 = vmatpush1.xpose.msra.mxu0 0.0
        %4899 = vmatprep.subr.mxu0 0.0
        %4900 = vmatpush1.xpose.msra.mxu0 0.0
        %4901 = vmatprep.subr.mxu0 0.0
        %4902 = vmatpush1.xpose.msra.mxu0 0.0
        %4903 = vmatprep.subr.mxu0 0.0
        %4904 = vmatpush1.xpose.msra.mxu0 0.0
        %4905 = vmatprep.subr.mxu0 0.0
        %4906 = vmatpush1.xpose.msra.mxu0 0.0
        %4907 = vmatprep.subr.mxu0 0.0
        %4908 = vmatpush1.xpose.msra.mxu0 0.0
        %4909 = vmatprep.subr.mxu0 0.0
        %4910 = vmatpush1.xpose.msra.mxu0 0.0
        %4911 = vmatprep.subr.mxu0 0.0
        %4912 = vmatpush1.xpose.msra.mxu0 0.0
        %4913 = vmatprep.subr.mxu0 0.0
        %4914 = vmatpush1.xpose.msra.mxu0 0.0
        %4915 = vmatprep.subr.mxu0 0.0
        %4916 = vmatpush1.xpose.msra.mxu0 0.0
        %4917 = vmatprep.subr.mxu0 0.0
        %4918 = vmatpush1.xpose.msra.mxu0 0.0
        %4919 = vmatprep.subr.mxu0 0.0
        %4920 = vmatpush1.xpose.msra.mxu0 0.0
        %4921 = vmatprep.subr.mxu0 0.0
        %4922 = vmatpush1.xpose.msra.mxu0 0.0
        %4923 = vmatprep.subr.mxu0 0.0
        %4924 = vmatpush1.xpose.msra.mxu0 0.0
        %4925 = vmatprep.subr.mxu0 0.0
        %4926 = vmatpush1.xpose.msra.mxu0 0.0
        %4927 = vmatprep.subr.mxu0 0.0
        %4928 = vmatpush1.xpose.msra.mxu0 0.0
        %4929 = vmatprep.subr.mxu0 0.0
        %4930 = vmatpush1.xpose.msra.mxu0 0.0
        %4931 = vmatprep.subr.mxu0 0.0
        %4932 = vmatpush1.xpose.msra.mxu0 0.0
        %4933 = vmatprep.subr.mxu0 0.0
        %4934 = vmatpush1.xpose.msra.mxu0 0.0
        %4935 = vmatprep.subr.mxu0 0.0
        %4936 = vmatpush1.xpose.msra.mxu0 0.0
        %4937 = vmatprep.mubr.f32.mxu0 0.0
        %4938 = vmatmul.mubr.f32.gmra.mrb[0].mxu0 %v4862
        %v4939 = vpop.f32.mrb[0].mxu0
        %v4940 = vadd.f32 %v4566, %v4939
        %v4941 = vpop.f32.mrb[0].mxu0
        %4942 = vmatprep.mubr.f32.mxu0 0.0
        %4943 = vmatmul.mubr.f32.gmra.mrb[0].mxu0 %v4865
        %v4944 = vpop.f32.mrb[0].mxu0
        %v4945 = vadd.f32 %v4567, %v4944
        %v4946 = vpop.f32.mrb[0].mxu0
        %4947 = vmatprep.mubr.f32.mxu0 0.0
        %4948 = vmatmul.mubr.f32.gmra.mrb[0].mxu0 %v4868
        %v4949 = vpop.f32.mrb[0].mxu0
        %v4950 = vadd.f32 %v4568, %v4949
        %v4951 = vpop.f32.mrb[0].mxu0
        %4952 = vmatprep.mubr.f32.mxu0 0.0
        %4953 = vmatmul.mubr.f32.gmra.mrb[0].mxu0 %v4871
        %v4954 = vpop.f32.mrb[0].mxu0
        %v4955 = vadd.f32 %v4569, %v4954
        %v4956 = vpop.f32.mrb[0].mxu0
        %4957 = vdwg.mxu0
        %v4958 = vsel %vm412, %v4649, -inf
        %4959 = vmax.xlane.f32.xlu0 %v4958
        %v4960 = vpop.xlane.xlu0 %4959
        %v4961 = vsel %vm412, %v4654, -inf
        %4962 = vmax.xlane.f32.xlu0 %v4961
        %v4963 = vpop.xlane.xlu0 %4962
        %v4964 = vsel %vm412, %v4659, -inf
        %4965 = vmax.xlane.f32.xlu0 %v4964
        %v4966 = vpop.xlane.xlu0 %4965
        %v4967 = vsel %vm412, %v4664, -inf
        %4968 = vmax.xlane.f32.xlu0 %v4967
        %v4969 = vpop.xlane.xlu0 %4968
        %v4970 = vsel %vm412, %v4746, -inf
        %4971 = vmax.xlane.f32.xlu0 %v4970
        %v4972 = vpop.xlane.xlu0 %4971
        %v4973 = vsel %vm412, %v4751, -inf
        %4974 = vmax.xlane.f32.xlu0 %v4973
        %v4975 = vpop.xlane.xlu0 %4974
        %v4976 = vsel %vm412, %v4756, -inf
        %4977 = vmax.xlane.f32.xlu0 %v4976
        %v4978 = vpop.xlane.xlu0 %4977
        %v4979 = vsel %vm412, %v4761, -inf
        %4980 = vmax.xlane.f32.xlu0 %v4979
        %v4981 = vpop.xlane.xlu0 %4980
        %v4982 = vsel %vm412, %v4843, -inf
        %4983 = vmax.xlane.f32.xlu0 %v4982
        %v4984 = vpop.xlane.xlu0 %4983
        %v4985 = vsel %vm412, %v4848, -inf
        %4986 = vmax.xlane.f32.xlu0 %v4985
        %v4987 = vpop.xlane.xlu0 %4986
        %v4988 = vsel %vm412, %v4853, -inf
        %4989 = vmax.xlane.f32.xlu0 %v4988
        %v4990 = vpop.xlane.xlu0 %4989
        %v4991 = vsel %vm412, %v4858, -inf
        %4992 = vmax.xlane.f32.xlu0 %v4991
        %v4993 = vpop.xlane.xlu0 %4992
        %v4994 = vsel %vm412, %v4940, -inf
        %4995 = vmax.xlane.f32.xlu0 %v4994
        %v4996 = vpop.xlane.xlu0 %4995
        %v4997 = vsel %vm412, %v4945, -inf
        %4998 = vmax.xlane.f32.xlu0 %v4997
        %v4999 = vpop.xlane.xlu0 %4998
        %v5000 = vsel %vm412, %v4950, -inf
        %5001 = vmax.xlane.f32.xlu0 %v5000
        %v5002 = vpop.xlane.xlu0 %5001
        %v5003 = vsel %vm412, %v4955, -inf
        %5004 = vmax.xlane.f32.xlu0 %v5003
        %v5005 = vpop.xlane.xlu0 %5004
        %v5006 = vsub.f32 %v4649, %v4960
        %v5007 = vsub.f32 %v4654, %v4963
        %v5008 = vsub.f32 %v4659, %v4966
        %v5009 = vsub.f32 %v4664, %v4969
        %v5010 = vsub.f32 %v4746, %v4972
        %v5011 = vsub.f32 %v4751, %v4975
        %v5012 = vsub.f32 %v4756, %v4978
        %v5013 = vsub.f32 %v4761, %v4981
        %v5014 = vsub.f32 %v4843, %v4984
        %v5015 = vsub.f32 %v4848, %v4987
        %v5016 = vsub.f32 %v4853, %v4990
        %v5017 = vsub.f32 %v4858, %v4993
        %v5018 = vsub.f32 %v4940, %v4996
        %v5019 = vsub.f32 %v4945, %v4999
        %v5020 = vsub.f32 %v4950, %v5002
        %v5021 = vsub.f32 %v4955, %v5005
        %v5022 = vmul.f32 %v5006, 1.442695
        %v5023 = vpow.pop %v5022
        %v5024 = vmul.f32 %v5007, 1.442695
        %v5025 = vpow.pop %v5024
        %v5026 = vmul.f32 %v5008, 1.442695
        %v5027 = vpow.pop %v5026
        %v5028 = vmul.f32 %v5009, 1.442695
        %v5029 = vpow.pop %v5028
        %v5030 = vmul.f32 %v5010, 1.442695
        %v5031 = vpow.pop %v5030
        %v5032 = vmul.f32 %v5011, 1.442695
        %v5033 = vpow.pop %v5032
        %v5034 = vmul.f32 %v5012, 1.442695
        %v5035 = vpow.pop %v5034
        %v5036 = vmul.f32 %v5013, 1.442695
        %v5037 = vpow.pop %v5036
        %v5038 = vmul.f32 %v5014, 1.442695
        %v5039 = vpow.pop %v5038
        %v5040 = vmul.f32 %v5015, 1.442695
        %v5041 = vpow.pop %v5040
        %v5042 = vmul.f32 %v5016, 1.442695
        %v5043 = vpow.pop %v5042
        %v5044 = vmul.f32 %v5017, 1.442695
        %v5045 = vpow.pop %v5044
        %v5046 = vmul.f32 %v5018, 1.442695
        %v5047 = vpow.pop %v5046
        %v5048 = vmul.f32 %v5019, 1.442695
        %v5049 = vpow.pop %v5048
        %v5050 = vmul.f32 %v5020, 1.442695
        %v5051 = vpow.pop %v5050
        %v5052 = vmul.f32 %v5021, 1.442695
        %v5053 = vpow.pop %v5052
        %v5054 = vsel %vm412, %v5023, 0.0
        %5055 = vadd.xlane.f32.xlu0 %v5054
        %v5056 = vpop.xlane.xlu0 %5055
        %v5057 = vsel %vm412, %v5025, 0.0
        %5058 = vadd.xlane.f32.xlu0 %v5057
        %v5059 = vpop.xlane.xlu0 %5058
        %v5060 = vsel %vm412, %v5027, 0.0
        %5061 = vadd.xlane.f32.xlu0 %v5060
        %v5062 = vpop.xlane.xlu0 %5061
        %v5063 = vsel %vm412, %v5029, 0.0
        %5064 = vadd.xlane.f32.xlu0 %v5063
        %v5065 = vpop.xlane.xlu0 %5064
        %v5066 = vsel %vm412, %v5031, 0.0
        %5067 = vadd.xlane.f32.xlu0 %v5066
        %v5068 = vpop.xlane.xlu0 %5067
        %v5069 = vsel %vm412, %v5033, 0.0
        %5070 = vadd.xlane.f32.xlu0 %v5069
        %v5071 = vpop.xlane.xlu0 %5070
        %v5072 = vsel %vm412, %v5035, 0.0
        %5073 = vadd.xlane.f32.xlu0 %v5072
        %v5074 = vpop.xlane.xlu0 %5073
        %v5075 = vsel %vm412, %v5037, 0.0
        %5076 = vadd.xlane.f32.xlu0 %v5075
        %v5077 = vpop.xlane.xlu0 %5076
        %v5078 = vsel %vm412, %v5039, 0.0
        %5079 = vadd.xlane.f32.xlu0 %v5078
        %v5080 = vpop.xlane.xlu0 %5079
        %v5081 = vsel %vm412, %v5041, 0.0
        %5082 = vadd.xlane.f32.xlu0 %v5081
        %v5083 = vpop.xlane.xlu0 %5082
        %v5084 = vsel %vm412, %v5043, 0.0
        %5085 = vadd.xlane.f32.xlu0 %v5084
        %v5086 = vpop.xlane.xlu0 %5085
        %v5087 = vsel %vm412, %v5045, 0.0
        %5088 = vadd.xlane.f32.xlu0 %v5087
        %v5089 = vpop.xlane.xlu0 %5088
        %v5090 = vsel %vm412, %v5047, 0.0
        %5091 = vadd.xlane.f32.xlu0 %v5090
        %v5092 = vpop.xlane.xlu0 %5091
        %v5093 = vsel %vm412, %v5049, 0.0
        %5094 = vadd.xlane.f32.xlu0 %v5093
        %v5095 = vpop.xlane.xlu0 %5094
        %v5096 = vsel %vm412, %v5051, 0.0
        %5097 = vadd.xlane.f32.xlu0 %v5096
        %v5098 = vpop.xlane.xlu0 %5097
        %v5099 = vsel %vm412, %v5053, 0.0
        %5100 = vadd.xlane.f32.xlu0 %v5099
        %v5101 = vpop.xlane.xlu0 %5100
        %v5102 = vrcp.pop %v5056
        %v5103 = vrcp.pop %v5059
        %v5104 = vrcp.pop %v5062
        %v5105 = vrcp.pop %v5065
        %v5106 = vrcp.pop %v5068
        %v5107 = vrcp.pop %v5071
        %v5108 = vrcp.pop %v5074
        %v5109 = vrcp.pop %v5077
        %v5110 = vrcp.pop %v5080
        %v5111 = vrcp.pop %v5083
        %v5112 = vrcp.pop %v5086
        %v5113 = vrcp.pop %v5089
        %v5114 = vrcp.pop %v5092
        %v5115 = vrcp.pop %v5095
        %v5116 = vrcp.pop %v5098
        %v5117 = vrcp.pop %v5101
        %v5118 = vmul.f32 %v5023, %v5102
        %v5119 = vmul.f32 %v5025, %v5103
        %v5120 = vmul.f32 %v5027, %v5104
        %v5121 = vmul.f32 %v5029, %v5105
        %v5122 = vmul.f32 %v5031, %v5106
        %v5123 = vmul.f32 %v5033, %v5107
        %v5124 = vmul.f32 %v5035, %v5108
        %v5125 = vmul.f32 %v5037, %v5109
        %v5126 = vmul.f32 %v5039, %v5110
        %v5127 = vmul.f32 %v5041, %v5111
        %v5128 = vmul.f32 %v5043, %v5112
        %v5129 = vmul.f32 %v5045, %v5113
        %v5130 = vmul.f32 %v5047, %v5114
        %v5131 = vmul.f32 %v5049, %v5115
        %v5132 = vmul.f32 %v5051, %v5116
        %v5133 = vmul.f32 %v5053, %v5117
        %v5135 = vsel %vm412, %v5118, 0
        %v5138 = vsel %vm412, %v5119, 0
        %v5141 = vsel %vm412, %v5120, 0
        %v5144 = vsel %vm412, %v5121, 0
        %5146 = vmatprep.subr.mxu0 0.0
        %5147 = vmatpush1.msra.mxu0 %v4487
        %5148 = vmatprep.subr.mxu0 0.0
        %5149 = vmatpush1.msra.mxu0 %v4492
        %5150 = vmatprep.subr.mxu0 0.0
        %5151 = vmatpush1.msra.mxu0 %v4497
        %5152 = vmatprep.subr.mxu0 0.0
        %5153 = vmatpush1.msra.mxu0 %v4502
        %5154 = vmatprep.subr.mxu0 0.0
        %5155 = vmatpush1.msra.mxu0 0.0
        %5156 = vmatprep.subr.mxu0 0.0
        %5157 = vmatpush1.msra.mxu0 0.0
        %5158 = vmatprep.subr.mxu0 0.0
        %5159 = vmatpush1.msra.mxu0 0.0
        %5160 = vmatprep.subr.mxu0 0.0
        %5161 = vmatpush1.msra.mxu0 0.0
        %5162 = vmatprep.subr.mxu0 0.0
        %5163 = vmatpush1.msra.mxu0 0.0
        %5164 = vmatprep.subr.mxu0 0.0
        %5165 = vmatpush1.msra.mxu0 0.0
        %5166 = vmatprep.subr.mxu0 0.0
        %5167 = vmatpush1.msra.mxu0 0.0
        %5168 = vmatprep.subr.mxu0 0.0
        %5169 = vmatpush1.msra.mxu0 0.0
        %5170 = vmatprep.subr.mxu0 0.0
        %5171 = vmatpush1.msra.mxu0 0.0
        %5172 = vmatprep.subr.mxu0 0.0
        %5173 = vmatpush1.msra.mxu0 0.0
        %5174 = vmatprep.subr.mxu0 0.0
        %5175 = vmatpush1.msra.mxu0 0.0
        %5176 = vmatprep.subr.mxu0 0.0
        %5177 = vmatpush1.msra.mxu0 0.0
        %5178 = vmatprep.subr.mxu0 0.0
        %5179 = vmatpush1.msra.mxu0 0.0
        %5180 = vmatprep.subr.mxu0 0.0
        %5181 = vmatpush1.msra.mxu0 0.0
        %5182 = vmatprep.subr.mxu0 0.0
        %5183 = vmatpush1.msra.mxu0 0.0
        %5184 = vmatprep.subr.mxu0 0.0
        %5185 = vmatpush1.msra.mxu0 0.0
        %5186 = vmatprep.subr.mxu0 0.0
        %5187 = vmatpush1.msra.mxu0 0.0
        %5188 = vmatprep.subr.mxu0 0.0
        %5189 = vmatpush1.msra.mxu0 0.0
        %5190 = vmatprep.subr.mxu0 0.0
        %5191 = vmatpush1.msra.mxu0 0.0
        %5192 = vmatprep.subr.mxu0 0.0
        %5193 = vmatpush1.msra.mxu0 0.0
        %5194 = vmatprep.subr.mxu0 0.0
        %5195 = vmatpush1.msra.mxu0 0.0
        %5196 = vmatprep.subr.mxu0 0.0
        %5197 = vmatpush1.msra.mxu0 0.0
        %5198 = vmatprep.subr.mxu0 0.0
        %5199 = vmatpush1.msra.mxu0 0.0
        %5200 = vmatprep.subr.mxu0 0.0
        %5201 = vmatpush1.msra.mxu0 0.0
        %5202 = vmatprep.subr.mxu0 0.0
        %5203 = vmatpush1.msra.mxu0 0.0
        %5204 = vmatprep.subr.mxu0 0.0
        %5205 = vmatpush1.msra.mxu0 0.0
        %5206 = vmatprep.subr.mxu0 0.0
        %5207 = vmatpush1.msra.mxu0 0.0
        %5208 = vmatprep.subr.mxu0 0.0
        %5209 = vmatpush1.msra.mxu0 0.0
        %5210 = vmatprep.mubr.f32.mxu0 0.0
        %5211 = vmatmul.mubr.f32.gmra.mrb[0].mxu0 %v5135
        %v5212 = vpop.f32.mrb[0].mxu0
        %v5213 = vadd.f32 0.0, %v5212
        %v5214 = vpop.f32.mrb[0].mxu0
        %5215 = vmatprep.mubr.f32.mxu0 0.0
        %5216 = vmatmul.mubr.f32.gmra.mrb[0].mxu0 %v5138
        %v5217 = vpop.f32.mrb[0].mxu0
        %v5218 = vadd.f32 0.0, %v5217
        %v5219 = vpop.f32.mrb[0].mxu0
        %5220 = vmatprep.mubr.f32.mxu0 0.0
        %5221 = vmatmul.mubr.f32.gmra.mrb[0].mxu0 %v5141
        %v5222 = vpop.f32.mrb[0].mxu0
        %v5223 = vadd.f32 0.0, %v5222
        %v5224 = vpop.f32.mrb[0].mxu0
        %5225 = vmatprep.mubr.f32.mxu0 0.0
        %5226 = vmatmul.mubr.f32.gmra.mrb[0].mxu0 %v5144
        %v5227 = vpop.f32.mrb[0].mxu0
        %v5228 = vadd.f32 0.0, %v5227
        %v5229 = vpop.f32.mrb[0].mxu0
        %5230 = vdwg.mxu0
        %v5232 = vsel %vm412, %v5122, 0
        %v5235 = vsel %vm412, %v5123, 0
        %v5238 = vsel %vm412, %v5124, 0
        %v5241 = vsel %vm412, %v5125, 0
        %5243 = vmatprep.subr.mxu0 0.0
        %5244 = vmatpush1.msra.mxu0 %v4507
        %5245 = vmatprep.subr.mxu0 0.0
        %5246 = vmatpush1.msra.mxu0 %v4512
        %5247 = vmatprep.subr.mxu0 0.0
        %5248 = vmatpush1.msra.mxu0 %v4517
        %5249 = vmatprep.subr.mxu0 0.0
        %5250 = vmatpush1.msra.mxu0 %v4522
        %5251 = vmatprep.subr.mxu0 0.0
        %5252 = vmatpush1.msra.mxu0 0.0
        %5253 = vmatprep.subr.mxu0 0.0
        %5254 = vmatpush1.msra.mxu0 0.0
        %5255 = vmatprep.subr.mxu0 0.0
        %5256 = vmatpush1.msra.mxu0 0.0
        %5257 = vmatprep.subr.mxu0 0.0
        %5258 = vmatpush1.msra.mxu0 0.0
        %5259 = vmatprep.subr.mxu0 0.0
        %5260 = vmatpush1.msra.mxu0 0.0
        %5261 = vmatprep.subr.mxu0 0.0
        %5262 = vmatpush1.msra.mxu0 0.0
        %5263 = vmatprep.subr.mxu0 0.0
        %5264 = vmatpush1.msra.mxu0 0.0
        %5265 = vmatprep.subr.mxu0 0.0
        %5266 = vmatpush1.msra.mxu0 0.0
        %5267 = vmatprep.subr.mxu0 0.0
        %5268 = vmatpush1.msra.mxu0 0.0
        %5269 = vmatprep.subr.mxu0 0.0
        %5270 = vmatpush1.msra.mxu0 0.0
        %5271 = vmatprep.subr.mxu0 0.0
        %5272 = vmatpush1.msra.mxu0 0.0
        %5273 = vmatprep.subr.mxu0 0.0
        %5274 = vmatpush1.msra.mxu0 0.0
        %5275 = vmatprep.subr.mxu0 0.0
        %5276 = vmatpush1.msra.mxu0 0.0
        %5277 = vmatprep.subr.mxu0 0.0
        %5278 = vmatpush1.msra.mxu0 0.0
        %5279 = vmatprep.subr.mxu0 0.0
        %5280 = vmatpush1.msra.mxu0 0.0
        %5281 = vmatprep.subr.mxu0 0.0
        %5282 = vmatpush1.msra.mxu0 0.0
        %5283 = vmatprep.subr.mxu0 0.0
        %5284 = vmatpush1.msra.mxu0 0.0
        %5285 = vmatprep.subr.mxu0 0.0
        %5286 = vmatpush1.msra.mxu0 0.0
        %5287 = vmatprep.subr.mxu0 0.0
        %5288 = vmatpush1.msra.mxu0 0.0
        %5289 = vmatprep.subr.mxu0 0.0
        %5290 = vmatpush1.msra.mxu0 0.0
        %5291 = vmatprep.subr.mxu0 0.0
        %5292 = vmatpush1.msra.mxu0 0.0
        %5293 = vmatprep.subr.mxu0 0.0
        %5294 = vmatpush1.msra.mxu0 0.0
        %5295 = vmatprep.subr.mxu0 0.0
        %5296 = vmatpush1.msra.mxu0 0.0
        %5297 = vmatprep.subr.mxu0 0.0
        %5298 = vmatpush1.msra.mxu0 0.0
        %5299 = vmatprep.subr.mxu0 0.0
        %5300 = vmatpush1.msra.mxu0 0.0
        %5301 = vmatprep.subr.mxu0 0.0
        %5302 = vmatpush1.msra.mxu0 0.0
        %5303 = vmatprep.subr.mxu0 0.0
        %5304 = vmatpush1.msra.mxu0 0.0
        %5305 = vmatprep.subr.mxu0 0.0
        %5306 = vmatpush1.msra.mxu0 0.0
        %5307 = vmatprep.mubr.f32.mxu0 0.0
        %5308 = vmatmul.mubr.f32.gmra.mrb[0].mxu0 %v5232
        %v5309 = vpop.f32.mrb[0].mxu0
        %v5310 = vadd.f32 0.0, %v5309
        %v5311 = vpop.f32.mrb[0].mxu0
        %5312 = vmatprep.mubr.f32.mxu0 0.0
        %5313 = vmatmul.mubr.f32.gmra.mrb[0].mxu0 %v5235
        %v5314 = vpop.f32.mrb[0].mxu0
        %v5315 = vadd.f32 0.0, %v5314
        %v5316 = vpop.f32.mrb[0].mxu0
        %5317 = vmatprep.mubr.f32.mxu0 0.0
        %5318 = vmatmul.mubr.f32.gmra.mrb[0].mxu0 %v5238
        %v5319 = vpop.f32.mrb[0].mxu0
        %v5320 = vadd.f32 0.0, %v5319
        %v5321 = vpop.f32.mrb[0].mxu0
        %5322 = vmatprep.mubr.f32.mxu0 0.0
        %5323 = vmatmul.mubr.f32.gmra.mrb[0].mxu0 %v5241
        %v5324 = vpop.f32.mrb[0].mxu0
        %v5325 = vadd.f32 0.0, %v5324
        %v5326 = vpop.f32.mrb[0].mxu0
        %5327 = vdwg.mxu0
        %v5329 = vsel %vm412, %v5126, 0
        %v5332 = vsel %vm412, %v5127, 0
        %v5335 = vsel %vm412, %v5128, 0
        %v5338 = vsel %vm412, %v5129, 0
        %5340 = vmatprep.subr.mxu0 0.0
        %5341 = vmatpush1.msra.mxu0 %v4527
        %5342 = vmatprep.subr.mxu0 0.0
        %5343 = vmatpush1.msra.mxu0 %v4532
        %5344 = vmatprep.subr.mxu0 0.0
        %5345 = vmatpush1.msra.mxu0 %v4537
        %5346 = vmatprep.subr.mxu0 0.0
        %5347 = vmatpush1.msra.mxu0 %v4542
        %5348 = vmatprep.subr.mxu0 0.0
        %5349 = vmatpush1.msra.mxu0 0.0
        %5350 = vmatprep.subr.mxu0 0.0
        %5351 = vmatpush1.msra.mxu0 0.0
        %5352 = vmatprep.subr.mxu0 0.0
        %5353 = vmatpush1.msra.mxu0 0.0
        %5354 = vmatprep.subr.mxu0 0.0
        %5355 = vmatpush1.msra.mxu0 0.0
        %5356 = vmatprep.subr.mxu0 0.0
        %5357 = vmatpush1.msra.mxu0 0.0
        %5358 = vmatprep.subr.mxu0 0.0
        %5359 = vmatpush1.msra.mxu0 0.0
        %5360 = vmatprep.subr.mxu0 0.0
        %5361 = vmatpush1.msra.mxu0 0.0
        %5362 = vmatprep.subr.mxu0 0.0
        %5363 = vmatpush1.msra.mxu0 0.0
        %5364 = vmatprep.subr.mxu0 0.0
        %5365 = vmatpush1.msra.mxu0 0.0
        %5366 = vmatprep.subr.mxu0 0.0
        %5367 = vmatpush1.msra.mxu0 0.0
        %5368 = vmatprep.subr.mxu0 0.0
        %5369 = vmatpush1.msra.mxu0 0.0
        %5370 = vmatprep.subr.mxu0 0.0
        %5371 = vmatpush1.msra.mxu0 0.0
        %5372 = vmatprep.subr.mxu0 0.0
        %5373 = vmatpush1.msra.mxu0 0.0
        %5374 = vmatprep.subr.mxu0 0.0
        %5375 = vmatpush1.msra.mxu0 0.0
        %5376 = vmatprep.subr.mxu0 0.0
        %5377 = vmatpush1.msra.mxu0 0.0
        %5378 = vmatprep.subr.mxu0 0.0
        %5379 = vmatpush1.msra.mxu0 0.0
        %5380 = vmatprep.subr.mxu0 0.0
        %5381 = vmatpush1.msra.mxu0 0.0
        %5382 = vmatprep.subr.mxu0 0.0
        %5383 = vmatpush1.msra.mxu0 0.0
        %5384 = vmatprep.subr.mxu0 0.0
        %5385 = vmatpush1.msra.mxu0 0.0
        %5386 = vmatprep.subr.mxu0 0.0
        %5387 = vmatpush1.msra.mxu0 0.0
        %5388 = vmatprep.subr.mxu0 0.0
        %5389 = vmatpush1.msra.mxu0 0.0
        %5390 = vmatprep.subr.mxu0 0.0
        %5391 = vmatpush1.msra.mxu0 0.0
        %5392 = vmatprep.subr.mxu0 0.0
        %5393 = vmatpush1.msra.mxu0 0.0
        %5394 = vmatprep.subr.mxu0 0.0
        %5395 = vmatpush1.msra.mxu0 0.0
        %5396 = vmatprep.subr.mxu0 0.0
        %5397 = vmatpush1.msra.mxu0 0.0
        %5398 = vmatprep.subr.mxu0 0.0
        %5399 = vmatpush1.msra.mxu0 0.0
        %5400 = vmatprep.subr.mxu0 0.0
        %5401 = vmatpush1.msra.mxu0 0.0
        %5402 = vmatprep.subr.mxu0 0.0
        %5403 = vmatpush1.msra.mxu0 0.0
        %5404 = vmatprep.mubr.f32.mxu0 0.0
        %5405 = vmatmul.mubr.f32.gmra.mrb[0].mxu0 %v5329
        %v5406 = vpop.f32.mrb[0].mxu0
        %v5407 = vadd.f32 0.0, %v5406
        %v5408 = vpop.f32.mrb[0].mxu0
        %5409 = vmatprep.mubr.f32.mxu0 0.0
        %5410 = vmatmul.mubr.f32.gmra.mrb[0].mxu0 %v5332
        %v5411 = vpop.f32.mrb[0].mxu0
        %v5412 = vadd.f32 0.0, %v5411
        %v5413 = vpop.f32.mrb[0].mxu0
        %5414 = vmatprep.mubr.f32.mxu0 0.0
        %5415 = vmatmul.mubr.f32.gmra.mrb[0].mxu0 %v5335
        %v5416 = vpop.f32.mrb[0].mxu0
        %v5417 = vadd.f32 0.0, %v5416
        %v5418 = vpop.f32.mrb[0].mxu0
        %5419 = vmatprep.mubr.f32.mxu0 0.0
        %5420 = vmatmul.mubr.f32.gmra.mrb[0].mxu0 %v5338
        %v5421 = vpop.f32.mrb[0].mxu0
        %v5422 = vadd.f32 0.0, %v5421
        %v5423 = vpop.f32.mrb[0].mxu0
        %5424 = vdwg.mxu0
        %v5426 = vsel %vm412, %v5130, 0
        %v5429 = vsel %vm412, %v5131, 0
        %v5432 = vsel %vm412, %v5132, 0
        %v5435 = vsel %vm412, %v5133, 0
        %5437 = vmatprep.subr.mxu0 0.0
        %5438 = vmatpush1.msra.mxu0 %v4547
        %5439 = vmatprep.subr.mxu0 0.0
        %5440 = vmatpush1.msra.mxu0 %v4552
        %5441 = vmatprep.subr.mxu0 0.0
        %5442 = vmatpush1.msra.mxu0 %v4557
        %5443 = vmatprep.subr.mxu0 0.0
        %5444 = vmatpush1.msra.mxu0 %v4562
        %5445 = vmatprep.subr.mxu0 0.0
        %5446 = vmatpush1.msra.mxu0 0.0
        %5447 = vmatprep.subr.mxu0 0.0
        %5448 = vmatpush1.msra.mxu0 0.0
        %5449 = vmatprep.subr.mxu0 0.0
        %5450 = vmatpush1.msra.mxu0 0.0
        %5451 = vmatprep.subr.mxu0 0.0
        %5452 = vmatpush1.msra.mxu0 0.0
        %5453 = vmatprep.subr.mxu0 0.0
        %5454 = vmatpush1.msra.mxu0 0.0
        %5455 = vmatprep.subr.mxu0 0.0
        %5456 = vmatpush1.msra.mxu0 0.0
        %5457 = vmatprep.subr.mxu0 0.0
        %5458 = vmatpush1.msra.mxu0 0.0
        %5459 = vmatprep.subr.mxu0 0.0
        %5460 = vmatpush1.msra.mxu0 0.0
        %5461 = vmatprep.subr.mxu0 0.0
        %5462 = vmatpush1.msra.mxu0 0.0
        %5463 = vmatprep.subr.mxu0 0.0
        %5464 = vmatpush1.msra.mxu0 0.0
        %5465 = vmatprep.subr.mxu0 0.0
        %5466 = vmatpush1.msra.mxu0 0.0
        %5467 = vmatprep.subr.mxu0 0.0
        %5468 = vmatpush1.msra.mxu0 0.0
        %5469 = vmatprep.subr.mxu0 0.0
        %5470 = vmatpush1.msra.mxu0 0.0
        %5471 = vmatprep.subr.mxu0 0.0
        %5472 = vmatpush1.msra.mxu0 0.0
        %5473 = vmatprep.subr.mxu0 0.0
        %5474 = vmatpush1.msra.mxu0 0.0
        %5475 = vmatprep.subr.mxu0 0.0
        %5476 = vmatpush1.msra.mxu0 0.0
        %5477 = vmatprep.subr.mxu0 0.0
        %5478 = vmatpush1.msra.mxu0 0.0
        %5479 = vmatprep.subr.mxu0 0.0
        %5480 = vmatpush1.msra.mxu0 0.0
        %5481 = vmatprep.subr.mxu0 0.0
        %5482 = vmatpush1.msra.mxu0 0.0
        %5483 = vmatprep.subr.mxu0 0.0
        %5484 = vmatpush1.msra.mxu0 0.0
        %5485 = vmatprep.subr.mxu0 0.0
        %5486 = vmatpush1.msra.mxu0 0.0
        %5487 = vmatprep.subr.mxu0 0.0
        %5488 = vmatpush1.msra.mxu0 0.0
        %5489 = vmatprep.subr.mxu0 0.0
        %5490 = vmatpush1.msra.mxu0 0.0
        %5491 = vmatprep.subr.mxu0 0.0
        %5492 = vmatpush1.msra.mxu0 0.0
        %5493 = vmatprep.subr.mxu0 0.0
        %5494 = vmatpush1.msra.mxu0 0.0
        %5495 = vmatprep.subr.mxu0 0.0
        %5496 = vmatpush1.msra.mxu0 0.0
        %5497 = vmatprep.subr.mxu0 0.0
        %5498 = vmatpush1.msra.mxu0 0.0
        %5499 = vmatprep.subr.mxu0 0.0
        %5500 = vmatpush1.msra.mxu0 0.0
        %5501 = vmatprep.mubr.f32.mxu0 0.0
        %5502 = vmatmul.mubr.f32.gmra.mrb[0].mxu0 %v5426
        %v5503 = vpop.f32.mrb[0].mxu0
        %v5504 = vadd.f32 0.0, %v5503
        %v5505 = vpop.f32.mrb[0].mxu0
        %5506 = vmatprep.mubr.f32.mxu0 0.0
        %5507 = vmatmul.mubr.f32.gmra.mrb[0].mxu0 %v5429
        %v5508 = vpop.f32.mrb[0].mxu0
        %v5509 = vadd.f32 0.0, %v5508
        %v5510 = vpop.f32.mrb[0].mxu0
        %5511 = vmatprep.mubr.f32.mxu0 0.0
        %5512 = vmatmul.mubr.f32.gmra.mrb[0].mxu0 %v5432
        %v5513 = vpop.f32.mrb[0].mxu0
        %v5514 = vadd.f32 0.0, %v5513
        %v5515 = vpop.f32.mrb[0].mxu0
        %5516 = vmatprep.mubr.f32.mxu0 0.0
        %5517 = vmatmul.mubr.f32.gmra.mrb[0].mxu0 %v5435
        %v5518 = vpop.f32.mrb[0].mxu0
        %v5519 = vadd.f32 0.0, %v5518
        %v5520 = vpop.f32.mrb[0].mxu0
        %5521 = vdwg.mxu0
        %v5522 = vadd.f32 %v4241, %v5213
        %v5523 = vadd.f32 %v4242, %v5218
        %v5524 = vadd.f32 %v4243, %v5223
        %v5525 = vadd.f32 %v4244, %v5228
        %v5526 = vadd.f32 %v4245, %v5310
        %v5527 = vadd.f32 %v4246, %v5315
        %v5528 = vadd.f32 %v4247, %v5320
        %v5529 = vadd.f32 %v4248, %v5325
        %v5530 = vadd.f32 %v4249, %v5407
        %v5531 = vadd.f32 %v4250, %v5412
        %v5532 = vadd.f32 %v4251, %v5417
        %v5533 = vadd.f32 %v4252, %v5422
        %v5534 = vadd.f32 %v4253, %v5504
        %v5535 = vadd.f32 %v4254, %v5509
        %v5536 = vadd.f32 %v4255, %v5514
        %v5537 = vadd.f32 %v4256, %v5519
        %v5538 = vld [vmem:[%s5] sm:$0x1]
        %v5540 = vlaneseq
        %v5541 = vshrl.u32 %v5540, 7
        %v5542 = vsub.s32 0, %v5541
        %v5543 = vrot.slane %v5538, %v5542
        %v5545 = vadd.f32 %v5522, %v5543
        %v5546 = vadd.f32 %v5523, %v5543
        %v5547 = vadd.f32 %v5524, %v5543
        %v5548 = vadd.f32 %v5525, %v5543
        %v5549 = vadd.f32 %v5526, %v5543
        %v5550 = vadd.f32 %v5527, %v5543
        %v5551 = vadd.f32 %v5528, %v5543
        %v5552 = vadd.f32 %v5529, %v5543
        %v5553 = vadd.f32 %v5530, %v5543
        %v5554 = vadd.f32 %v5531, %v5543
        %v5555 = vadd.f32 %v5532, %v5543
        %v5556 = vadd.f32 %v5533, %v5543
        %v5557 = vadd.f32 %v5534, %v5543
        %v5558 = vadd.f32 %v5535, %v5543
        %v5559 = vadd.f32 %v5536, %v5543
        %v5560 = vadd.f32 %v5537, %v5543
        %5561 = vst.msk [vmem:[%s382] sm:$0xff] %vm412, %v5545
        %5562 = vst.msk [vmem:[%s382 + $0x8] sm:$0xff] %vm412, %v5546
        %5563 = vst.msk [vmem:[%s382 + $0x10] sm:$0xff] %vm412, %v5547
        %5564 = vst.msk [vmem:[%s382 + $0x18] sm:$0xff] %vm412, %v5548
        %5565 = vst.msk [vmem:[%s382 + $0x20] sm:$0xff] %vm412, %v5549
        %5566 = vst.msk [vmem:[%s382 + $0x28] sm:$0xff] %vm412, %v5550
        %5567 = vst.msk [vmem:[%s382 + $0x30] sm:$0xff] %vm412, %v5551
        %5568 = vst.msk [vmem:[%s382 + $0x38] sm:$0xff] %vm412, %v5552
        %5569 = vst.msk [vmem:[%s382 + $0x40] sm:$0xff] %vm412, %v5553
        %5570 = vst.msk [vmem:[%s382 + $0x48] sm:$0xff] %vm412, %v5554
        %5571 = vst.msk [vmem:[%s382 + $0x50] sm:$0xff] %vm412, %v5555
        %5572 = vst.msk [vmem:[%s382 + $0x58] sm:$0xff] %vm412, %v5556
        %5573 = vst.msk [vmem:[%s382 + $0x60] sm:$0xff] %vm412, %v5557
        %5574 = vst.msk [vmem:[%s382 + $0x68] sm:$0xff] %vm412, %v5558
        %5575 = vst.msk [vmem:[%s382 + $0x70] sm:$0xff] %vm412, %v5559
        %5576 = vst.msk [vmem:[%s382 + $0x78] sm:$0xff] %vm412, %v5560
        %s5577 = sand.u32 %s187, 1
        %s5578 = scalar_lea.sflag [#allocation4], %s5577
        %s5579 = sand.u32 %s187, 1
        %s5580 = smul.addr %s5579, 128
        %s5581 = scalar_lea.vmem [#allocation10], %s5580
        // Predicated region
        $region61: #{tpu_custom_call.1} parent=43 // pred_check
          %p5582 = pneg %p197
        $region62: #{tpu_custom_call.1} parent=43 // pred_check_branch
          %5584 = sbr.rel (%p5582) target = $region64
        $region63: #{tpu_custom_call.1} parent=43 // pred_region
          #allocation14 [shape = 'u32[6]{0}', space=smem, size = 0x18, scoped, tag = 'DMA stride descriptor']
          %s5585 = smul.u32 4, %s32
          %s5587 = ssub.s32 2048, 2048
          %5588 = vsyncadd %s5578, %s5587
          %s5589 = smul.addr %s31, 4
          %s5590 = smul.addr %s5585, 8
          %s5591 = sadd.s32 %s5589, %s5590
          %s5592 = smul.addr %s5591, 128
          %s5593 = scalar_lea.hbm %s6, %s5592
          %s5595 = sshll.u32 1, 14
          %s5596 = sxor.u32 4294967295, %s5595
          %s5599 = sshll.u32 7, 18
          %s5600 = sxor.u32 4294967295, %s5599
          %s5601 = sand.u32 0, %s5600
          %s5603 = sor.u32 %s5601, 0
          %s5605 = sshll.u32 3, 24
          %s5606 = sxor.u32 4294967295, %s5605
          %s5607 = sand.u32 %s5603, %s5606
          %s5609 = sor.u32 %s5607, 0
          %s5610 = sshll.u32 %s5581, 4
          %s5611 = int_to_ptr.vmem [resolvable:$true] %s5610
          %5617 = sst [smem:[#allocation14]] 512
          %s5618 = scalar_lea.smem [#allocation14], 1
          %5619 = sst [smem:[%s5618]] 1024
          %s5620 = scalar_lea.smem [#allocation14], 2
          %5621 = sst [smem:[%s5620]] 4
          %s5622 = scalar_lea.smem [#allocation14], 3
          %5623 = sst [smem:[%s5622]] 128
          %s5624 = scalar_lea.smem [#allocation14], 4
          %5625 = sst [smem:[%s5624]] 128
          %s5626 = scalar_lea.smem [#allocation14], 5
          %5627 = sst [smem:[%s5626]] 8
          %5629 = dma.general %s5611, 2048, %s5593, %s5578, [#allocation13], [#allocation14], %s5609, 0
        $region64: #{tpu_custom_call.1} parent=43 // pred_fallthru
          _
      $region44: #{tpu_custom_call.1} parent=5 // pred_fallthru
        _
      %p5630 = scmp.le.s32.totalorder 2, %s22
      // Predicated region
      $region65: #{tpu_custom_call.1} parent=5 // pred_check
        %p5631 = pneg %p5630
      $region66: #{tpu_custom_call.1} parent=5 // pred_check_branch
        %5633 = sbr.rel (%p5631) target = $region68
      $region67: #{tpu_custom_call.1} parent=5 // pred_region
        %s5634 = ssub.s32 %s22, 2
        // Predicated region
        $region69: #{tpu_custom_call.1} parent=67 // pred_check
          %p5635 = pneg %p203
        $region70: #{tpu_custom_call.1} parent=67 // pred_check_branch
          %5637 = sbr.rel (%p5635) target = $region72
        $region71: #{tpu_custom_call.1} parent=67 // pred_region
          %s5638 = sand.u32 %s188, 1
          %s5639 = scalar_lea.sflag [#allocation4], %s5638
          %s5640 = sand.u32 %s188, 1
          %s5641 = smul.addr %s5640, 128
          %s5642 = scalar_lea.vmem [#allocation10], %s5641
          %5643 = dma.done %s5639, 2048
        $region72: #{tpu_custom_call.1} parent=67 // pred_fallthru
          _
      $region68: #{tpu_custom_call.1} parent=5 // pred_fallthru
        _
    $region6: #{tpu_custom_call.1} parent=1 // loop_footer
      %s26 = sadd.s32 1, %s22
    $region7: #{tpu_custom_call.1} parent=1 // loop_footer_branch
      %21 = sbr.rel target = $region3
    $region8: #{tpu_custom_call.1} parent=1 // loop_exit
      _
    %5644 = vsyncpa [#allocation3], 1
    %s5645 = scalar_lea.sflag [#allocation3], 1
    %5646 = vsyncpa %s5645, 1
    %5647 = vsyncpa [#allocation6], 1
    %5648 = vsyncpa [#allocation9], 1
    %s5649 = scalar_lea.sflag [#allocation9], 1
    %5650 = vsyncpa %s5649, 1
    %5651 = vsyncpa [#allocation4], 1
    %s5652 = scalar_lea.sflag [#allocation4], 1
    %5653 = vsyncpa %s5652, 1

</llo_original>
